<compile_context>
chip_gen: v6e
topology: v6e:2x2x1
jax: 0.10.0
libtpu: 0.0.40
codegen_flags: <defaults>
</compile_context>

<pallas_src>
import functools

import jax
import jax.numpy as jnp
from jax.experimental import pallas as pl
from jax.experimental.pallas import tpu as pltpu


def _c_window_attention_kernel(x_ref, y_ref, wq_ref, bq_ref, wkv_ref, bkv_ref,
                               wp_ref, bp_ref, bias_ref, o_ref, *, num_heads):
    tb, N, C = x_ref.shape
    H = num_heads
    d = C // H

    # Cast activations to bf16 in-kernel (inputs arrive in their original dtype).
    xf = x_ref[...].reshape(tb * N, C).astype(jnp.bfloat16)
    yf = y_ref[...].reshape(tb * N, C).astype(jnp.bfloat16)

    # ---- q / kv projections (MXU: bf16 operands, f32 accumulation) -------------
    # scale is pre-folded into wq / bq, so no extra multiply here.
    q2 = (jnp.dot(xf, wq_ref[...], preferred_element_type=jnp.float32)
          + bq_ref[...]).astype(jnp.bfloat16)          # (tb*N, C)
    kv2 = (jnp.dot(yf, wkv_ref[...], preferred_element_type=jnp.float32)
           + bkv_ref[...]).astype(jnp.bfloat16)        # (tb*N, 2C)
    k2 = kv2[:, :C]
    v2 = kv2[:, C:]

    # ---- head-major batched layout: (H*tb, N, d) --------------------------------
    def to_heads(a2):
        return jnp.concatenate(
            [a2[:, h * d:(h + 1) * d].reshape(tb, N, d) for h in range(H)], axis=0)

    qh = to_heads(q2)
    kh = to_heads(k2)
    vh = to_heads(v2)

    # ---- attention scores: one batched MXU matmul over all H*tb windows ---------
    attn = jnp.einsum('bnd,bmd->bnm', qh, kh,
                      preferred_element_type=jnp.float32)       # (H*tb, N, N) f32

    # relative position bias (broadcast over the tb windows of each head)
    attn = attn.reshape(H, tb, N, N) + bias_ref[...][:, None, :, :]
    attn = attn.reshape(H * tb, N, N)

    # ---- numerically stable softmax in f32 (divide moved onto the EUP) ----------
    attn = attn - jnp.max(attn, axis=-1, keepdims=True)
    p = jnp.exp(attn)
    p = p * pl.reciprocal(jnp.sum(p, axis=-1, keepdims=True), approx=True)

    ctx = jnp.einsum('bnm,bmd->bnd', p.astype(jnp.bfloat16), vh,
                     preferred_element_type=jnp.float32)        # (H*tb, N, d) f32

    # ---- output projection as a per-head matmul-accumulate (no lane-wise concat) -
    out = bp_ref[...]                                            # (1, C) f32
    for h in range(H):
        ctx_h = ctx[h * tb:(h + 1) * tb].reshape(tb * N, d).astype(jnp.bfloat16)
        out = out + jnp.dot(ctx_h, wp_ref[h],                    # wp_ref: (H, d, C)
                            preferred_element_type=jnp.float32)

    o_ref[...] = out.reshape(tb, N, C).astype(o_ref.dtype)


def relative_position_bias(table, window_size, num_heads):
    """Builds the (num_heads, N, N) relative position bias exactly like the torch module."""
    Wh, Ww = window_size
    N = Wh * Ww
    coords = jnp.stack(jnp.meshgrid(jnp.arange(Wh), jnp.arange(Ww), indexing="ij"))  # (2,Wh,Ww)
    coords_flatten = coords.reshape(2, -1)                                           # (2, N)
    rel = coords_flatten[:, :, None] - coords_flatten[:, None, :]                    # (2, N, N)
    rel = rel.transpose(1, 2, 0)                                                     # (N, N, 2)
    rel = rel.at[:, :, 0].add(Wh - 1)
    rel = rel.at[:, :, 1].add(Ww - 1)
    rel = rel.at[:, :, 0].multiply(2 * Ww - 1)
    idx = rel.sum(-1).reshape(-1)                                                    # (N*N,)
    bias = table[idx].reshape(N, N, num_heads)
    return bias.transpose(2, 0, 1).astype(jnp.float32)                               # (H, N, N)


def _pick_tb(B_, N, target_tokens=1024, min_grid=2):
    """Windows-per-step tile: ~target_tokens rows per step, >= min_grid steps,
    preferring an exact divisor of B_ so padding copies are avoided."""
    desired = max(1, target_tokens // N)
    tb = min(desired, max(1, pl.cdiv(B_, min_grid)))
    for cand in range(tb, max(tb // 2, 1) - 1, -1):
        if B_ % cand == 0:
            return cand
    return tb


def c_window_attention_pallas(x, y, params, window_size, num_heads, *,
                              qk_scale=None, tb=None, compute_dtype=jnp.bfloat16):
    """x, y: (B_, N, C) with N = Wh*Ww.  Returns (B_, N, C)."""
    wq, bq, wkv, bkv, wp, bp, table = params
    B_orig, N, C = x.shape
    assert N == window_size[0] * window_size[1]
    assert C % num_heads == 0
    head_dim = C // num_heads
    scale = float(qk_scale) if qk_scale is not None else head_dim ** (-0.5)
    out_dtype = x.dtype

    bias_hnn = relative_position_bias(table, window_size, num_heads)   # (H, N, N) f32

    # Tile the window-batch axis (>= 2 grid steps for v7x's two TensorCores when possible).
    if tb is None:
        tb = _pick_tb(B_orig, N)
    grid_b = pl.cdiv(B_orig, tb)
    B_pad = grid_b * tb
    if B_pad != B_orig:                      # rare fallback (tb usually divides B_)
        pad = B_pad - B_orig
        x = jnp.pad(x, ((0, pad), (0, 0), (0, 0)))
        y = jnp.pad(y, ((0, pad), (0, 0), (0, 0)))

    # Weights: fold the qk scale into wq/bq; bf16 matmul operands; biases stay f32.
    wq_c = (wq.astype(jnp.float32) * scale).astype(compute_dtype)        # (C, C)
    wkv_c = wkv.astype(compute_dtype)                                    # (C, 2C)
    wp_c = wp.reshape(num_heads, head_dim, C).astype(compute_dtype)      # (H, d, C) row blocks
    bq_2d = (bq.astype(jnp.float32) * scale).reshape(1, C)
    bkv_2d = bkv.reshape(1, 2 * C).astype(jnp.float32)
    bp_2d = bp.reshape(1, C).astype(jnp.float32)

    # Advisory cost estimate so XLA schedules the custom call sensibly.
    flops = (2 * B_pad * N * C * C                       # q projection
             + 2 * B_pad * N * C * 2 * C                 # kv projection
             + 4 * B_pad * num_heads * N * N * head_dim  # q@k^T and attn@v
             + 2 * B_pad * N * C * C)                    # output projection
    transcendentals = B_pad * num_heads * N * N          # exp in softmax
    w_itemsize = jnp.dtype(compute_dtype).itemsize
    bytes_accessed = ((x.size + y.size) * jnp.dtype(x.dtype).itemsize
                      + (wq_c.size + wkv_c.size + wp_c.size) * w_itemsize
                      + (bq_2d.size + bkv_2d.size + bp_2d.size + bias_hnn.size) * 4
                      + B_pad * N * C * jnp.dtype(out_dtype).itemsize)

    kernel = functools.partial(_c_window_attention_kernel, num_heads=num_heads)

    out = pl.pallas_call(
        kernel,
        out_shape=jax.ShapeDtypeStruct((B_pad, N, C), out_dtype),
        grid_spec=pltpu.PrefetchScalarGridSpec(
            num_scalar_prefetch=0,
            grid=(grid_b,),
            in_specs=[
                pl.BlockSpec((tb, N, C), lambda i: (i, 0, 0)),              # x tile
                pl.BlockSpec((tb, N, C), lambda i: (i, 0, 0)),              # y tile
                pl.BlockSpec((C, C), lambda i: (0, 0)),                     # wq*scale (resident)
                pl.BlockSpec((1, C), lambda i: (0, 0)),                     # bq*scale
                pl.BlockSpec((C, 2 * C), lambda i: (0, 0)),                 # wkv (resident)
                pl.BlockSpec((1, 2 * C), lambda i: (0, 0)),                 # bkv
                pl.BlockSpec((num_heads, head_dim, C), lambda i: (0, 0, 0)),  # wp row-blocks
                pl.BlockSpec((1, C), lambda i: (0, 0)),                     # bp
                pl.BlockSpec((num_heads, N, N), lambda i: (0, 0, 0)),       # rel. pos. bias
            ],
            out_specs=pl.BlockSpec((tb, N, C), lambda i: (i, 0, 0)),
        ),
        compiler_params=pltpu.CompilerParams(
            dimension_semantics=("parallel",),
            vmem_limit_bytes=32 * 1024 * 1024,
        ),
        cost_estimate=pl.CostEstimate(flops=flops,
                                      transcendentals=transcendentals,
                                      bytes_accessed=bytes_accessed),
    )(x, y, wq_c, bq_2d, wkv_c, bkv_2d, wp_c, bp_2d, bias_hnn)

    return out[:B_orig]


def init_c_window_attention_params(key, dim, window_size, num_heads, dtype=jnp.float32):
    """Deterministic synthetic params (nn.Linear-style uniform + trunc-normal-ish table)."""
    Wh, Ww = window_size
    ks = jax.random.split(key, 7)
    bound = 1.0 / (dim ** 0.5)
    wq = jax.random.uniform(ks[0], (dim, dim), dtype, -bound, bound)          # (in, out)
    bq = jax.random.uniform(ks[1], (dim,), dtype, -bound, bound)
    wkv = jax.random.uniform(ks[2], (dim, 2 * dim), dtype, -bound, bound)
    bkv = jax.random.uniform(ks[3], (2 * dim,), dtype, -bound, bound)
    wp = jax.random.uniform(ks[4], (dim, dim), dtype, -bound, bound)
    bp = jax.random.uniform(ks[5], (dim,), dtype, -bound, bound)
    table = 0.02 * jax.random.normal(ks[6], ((2 * Wh - 1) * (2 * Ww - 1), num_heads), dtype)
    return wq, bq, wkv, bkv, wp, bp, table


if __name__ == "__main__":
    key = jax.random.PRNGKey(0)
    kx, ky, kp = jax.random.split(key, 3)

    DIM, HEADS = 128, 4                 # lane-dense channel dim, head_dim = 32
    WINDOW = (8, 8)
    N = WINDOW[0] * WINDOW[1]           # 64 tokens per window
    B_ = 6                              # num_windows * batch

    x = jax.random.normal(kx, (B_, N, DIM), jnp.float32)
    y = jax.random.normal(ky, (B_, N, DIM), jnp.float32)
    params = init_c_window_attention_params(kp, DIM, WINDOW, HEADS)

    out = c_window_attention_pallas(x, y, params, WINDOW, HEADS)
    out = jax.block_until_ready(out)
    assert out.shape == (B_, N, DIM)

    # ---- plain-JAX reference (f32 math on the same bf16-cast matmul operands) ----
    wq, bq, wkv, bkv, wp, bp, table = params
    bias_hnn = relative_position_bias(table, WINDOW, HEADS)
    xe = x.astype(jnp.bfloat16).astype(jnp.float32)
    ye = y.astype(jnp.bfloat16).astype(jnp.float32)
    wq_e, wkv_e, wp_e = (w.astype(jnp.bfloat16).astype(jnp.float32) for w in (wq, wkv, wp))
    Dh = DIM // HEADS
    scale = Dh ** (-0.5)
    q = (xe @ wq_e + bq).reshape(B_, N, HEADS, Dh).transpose(0, 2, 1, 3) * scale
    kv = (ye @ wkv_e + bkv).reshape(B_, N, 2, HEADS, Dh).transpose(2, 0, 3, 1, 4)
    k_, v_ = kv[0], kv[1]
    attn = q @ k_.transpose(0, 1, 3, 2) + bias_hnn[None]
    attn = jax.nn.softmax(attn, axis=-1)
    ref = (attn @ v_).transpose(0, 2, 1, 3).reshape(B_, N, DIM) @ wp_e + bp

    max_err = float(jnp.max(jnp.abs(out - ref)))
    assert jnp.allclose(out, ref, atol=5e-2, rtol=5e-2), f"max abs err = {max_err}"

    print("KERNEL_OK")
</pallas_src>

<mosaic_0001>
module attributes {stable_mosaic.version = 11 : i64} {
  func.func @_c_window_attention_kernel(%arg0: i32, %arg1: memref<3x64x128xf32, #tpu.memory_space<vmem>>, %arg2: memref<3x64x128xf32, #tpu.memory_space<vmem>>, %arg3: memref<128x128xbf16, #tpu.memory_space<vmem>>, %arg4: memref<1x128xf32, #tpu.memory_space<vmem>>, %arg5: memref<128x256xbf16, #tpu.memory_space<vmem>>, %arg6: memref<1x256xf32, #tpu.memory_space<vmem>>, %arg7: memref<4x32x128xbf16, #tpu.memory_space<vmem>>, %arg8: memref<1x128xf32, #tpu.memory_space<vmem>>, %arg9: memref<4x64x64xf32, #tpu.memory_space<vmem>>, %arg10: memref<3x64x128xf32, #tpu.memory_space<vmem>>) attributes {dimension_semantics = [#tpu.dimension_semantics<parallel>], iteration_bounds = array<i64: 2>, scalar_prefetch = 0 : i64, scratch_operands = 0 : i64, tpu.core_type = #tpu.core_type<tc>, window_params = [{transform_indices = @transform_0, window_bounds = array<i64: 3, 64, 128>}, {transform_indices = @transform_1, window_bounds = array<i64: 3, 64, 128>}, {pipeline_mode = #tpu.pipeline_mode<synchronous>, transform_indices = @transform_2, window_bounds = array<i64: 128, 128>}, {pipeline_mode = #tpu.pipeline_mode<synchronous>, transform_indices = @transform_3, window_bounds = array<i64: 1, 128>}, {pipeline_mode = #tpu.pipeline_mode<synchronous>, transform_indices = @transform_4, window_bounds = array<i64: 128, 256>}, {pipeline_mode = #tpu.pipeline_mode<synchronous>, transform_indices = @transform_5, window_bounds = array<i64: 1, 256>}, {pipeline_mode = #tpu.pipeline_mode<synchronous>, transform_indices = @transform_6, window_bounds = array<i64: 4, 32, 128>}, {pipeline_mode = #tpu.pipeline_mode<synchronous>, transform_indices = @transform_7, window_bounds = array<i64: 1, 128>}, {pipeline_mode = #tpu.pipeline_mode<synchronous>, transform_indices = @transform_8, window_bounds = array<i64: 4, 64, 64>}, {transform_indices = @transform_9, window_bounds = array<i64: 3, 64, 128>}]} {
    %c0 = arith.constant 0 : index
    %c0_0 = arith.constant 0 : index
    %c0_1 = arith.constant 0 : index
    %0 = vector.load %arg1[%c0, %c0_0, %c0_1] : memref<3x64x128xf32, #tpu.memory_space<vmem>>, vector<3x64x128xf32>
    %1 = vector.shape_cast %0 : vector<3x64x128xf32> to vector<192x128xf32>
    %2 = arith.truncf %1 : vector<192x128xf32> to vector<192x128xbf16>
    %c0_2 = arith.constant 0 : index
    %c0_3 = arith.constant 0 : index
    %c0_4 = arith.constant 0 : index
    %3 = vector.load %arg2[%c0_2, %c0_3, %c0_4] : memref<3x64x128xf32, #tpu.memory_space<vmem>>, vector<3x64x128xf32>
    %4 = vector.shape_cast %3 : vector<3x64x128xf32> to vector<192x128xf32>
    %5 = arith.truncf %4 : vector<192x128xf32> to vector<192x128xbf16>
    %c0_5 = arith.constant 0 : index
    %c0_6 = arith.constant 0 : index
    %6 = vector.load %arg3[%c0_5, %c0_6] : memref<128x128xbf16, #tpu.memory_space<vmem>>, vector<128x128xbf16>
    %cst = arith.constant dense<0.000000e+00> : vector<192x128xf32>
    %7 = tpu.matmul %2, %6, %cst {dimension_numbers = #tpu.dot_dimension_numbers<[1], [0], [0], [1], [0, 0, 1, 1], [], []>} : vector<192x128xbf16>, vector<128x128xbf16>, vector<192x128xf32> -> vector<192x128xf32>
    %c0_7 = arith.constant 0 : index
    %c0_8 = arith.constant 0 : index
    %8 = vector.load %arg4[%c0_7, %c0_8] : memref<1x128xf32, #tpu.memory_space<vmem>>, vector<1x128xf32>
    %9 = vector.broadcast %8 : vector<1x128xf32> to vector<192x128xf32>
    %10 = arith.addf %7, %9 : vector<192x128xf32>
    %11 = arith.truncf %10 : vector<192x128xf32> to vector<192x128xbf16>
    %c0_9 = arith.constant 0 : index
    %c0_10 = arith.constant 0 : index
    %12 = vector.load %arg5[%c0_9, %c0_10] : memref<128x256xbf16, #tpu.memory_space<vmem>>, vector<128x256xbf16>
    %cst_11 = arith.constant dense<0.000000e+00> : vector<192x256xf32>
    %13 = tpu.matmul %5, %12, %cst_11 {dimension_numbers = #tpu.dot_dimension_numbers<[1], [0], [0], [1], [0, 0, 1, 1], [], []>} : vector<192x128xbf16>, vector<128x256xbf16>, vector<192x256xf32> -> vector<192x256xf32>
    %c0_12 = arith.constant 0 : index
    %c0_13 = arith.constant 0 : index
    %14 = vector.load %arg6[%c0_12, %c0_13] : memref<1x256xf32, #tpu.memory_space<vmem>>, vector<1x256xf32>
    %15 = vector.broadcast %14 : vector<1x256xf32> to vector<192x256xf32>
    %16 = arith.addf %13, %15 : vector<192x256xf32>
    %17 = arith.truncf %16 : vector<192x256xf32> to vector<192x256xbf16>
    %18 = vector.extract_strided_slice %17 {offsets = [0, 0], sizes = [192, 128], strides = [1, 1]} : vector<192x256xbf16> to vector<192x128xbf16>
    %19 = vector.extract_strided_slice %17 {offsets = [0, 128], sizes = [192, 128], strides = [1, 1]} : vector<192x256xbf16> to vector<192x128xbf16>
    %20 = vector.extract_strided_slice %11 {offsets = [0, 0], sizes = [192, 32], strides = [1, 1]} : vector<192x128xbf16> to vector<192x32xbf16>
    %21 = vector.shape_cast %20 : vector<192x32xbf16> to vector<3x64x32xbf16>
    %22 = vector.extract_strided_slice %11 {offsets = [0, 32], sizes = [192, 32], strides = [1, 1]} : vector<192x128xbf16> to vector<192x32xbf16>
    %23 = vector.shape_cast %22 : vector<192x32xbf16> to vector<3x64x32xbf16>
    %24 = vector.extract_strided_slice %11 {offsets = [0, 64], sizes = [192, 32], strides = [1, 1]} : vector<192x128xbf16> to vector<192x32xbf16>
    %25 = vector.shape_cast %24 : vector<192x32xbf16> to vector<3x64x32xbf16>
    %26 = vector.extract_strided_slice %11 {offsets = [0, 96], sizes = [192, 32], strides = [1, 1]} : vector<192x128xbf16> to vector<192x32xbf16>
    %27 = vector.shape_cast %26 : vector<192x32xbf16> to vector<3x64x32xbf16>
    %28 = tpu.concatenate %21, %23, %25, %27 in 0 : vector<3x64x32xbf16>, vector<3x64x32xbf16>, vector<3x64x32xbf16>, vector<3x64x32xbf16> -> vector<12x64x32xbf16>
    %29 = vector.extract_strided_slice %18 {offsets = [0, 0], sizes = [192, 32], strides = [1, 1]} : vector<192x128xbf16> to vector<192x32xbf16>
    %30 = vector.shape_cast %29 : vector<192x32xbf16> to vector<3x64x32xbf16>
    %31 = vector.extract_strided_slice %18 {offsets = [0, 32], sizes = [192, 32], strides = [1, 1]} : vector<192x128xbf16> to vector<192x32xbf16>
    %32 = vector.shape_cast %31 : vector<192x32xbf16> to vector<3x64x32xbf16>
    %33 = vector.extract_strided_slice %18 {offsets = [0, 64], sizes = [192, 32], strides = [1, 1]} : vector<192x128xbf16> to vector<192x32xbf16>
    %34 = vector.shape_cast %33 : vector<192x32xbf16> to vector<3x64x32xbf16>
    %35 = vector.extract_strided_slice %18 {offsets = [0, 96], sizes = [192, 32], strides = [1, 1]} : vector<192x128xbf16> to vector<192x32xbf16>
    %36 = vector.shape_cast %35 : vector<192x32xbf16> to vector<3x64x32xbf16>
    %37 = tpu.concatenate %30, %32, %34, %36 in 0 : vector<3x64x32xbf16>, vector<3x64x32xbf16>, vector<3x64x32xbf16>, vector<3x64x32xbf16> -> vector<12x64x32xbf16>
    %38 = vector.extract_strided_slice %19 {offsets = [0, 0], sizes = [192, 32], strides = [1, 1]} : vector<192x128xbf16> to vector<192x32xbf16>
    %39 = vector.shape_cast %38 : vector<192x32xbf16> to vector<3x64x32xbf16>
    %40 = vector.extract_strided_slice %19 {offsets = [0, 32], sizes = [192, 32], strides = [1, 1]} : vector<192x128xbf16> to vector<192x32xbf16>
    %41 = vector.shape_cast %40 : vector<192x32xbf16> to vector<3x64x32xbf16>
    %42 = vector.extract_strided_slice %19 {offsets = [0, 64], sizes = [192, 32], strides = [1, 1]} : vector<192x128xbf16> to vector<192x32xbf16>
    %43 = vector.shape_cast %42 : vector<192x32xbf16> to vector<3x64x32xbf16>
    %44 = vector.extract_strided_slice %19 {offsets = [0, 96], sizes = [192, 32], strides = [1, 1]} : vector<192x128xbf16> to vector<192x32xbf16>
    %45 = vector.shape_cast %44 : vector<192x32xbf16> to vector<3x64x32xbf16>
    %46 = tpu.concatenate %39, %41, %43, %45 in 0 : vector<3x64x32xbf16>, vector<3x64x32xbf16>, vector<3x64x32xbf16>, vector<3x64x32xbf16> -> vector<12x64x32xbf16>
    "tpu.trace_start"() <{level = 10 : i32, message = "bnd,bmd->bnm"}> : () -> ()
    %cst_14 = arith.constant dense<0.000000e+00> : vector<12x64x64xf32>
    %47 = tpu.matmul %28, %37, %cst_14 {dimension_numbers = #tpu.dot_dimension_numbers<[2], [2], [1], [1], [0, 0, 0, 1, 1, 1], [0], [0]>} : vector<12x64x32xbf16>, vector<12x64x32xbf16>, vector<12x64x64xf32> -> vector<12x64x64xf32>
    "tpu.trace_stop"() : () -> ()
    %48 = vector.shape_cast %47 : vector<12x64x64xf32> to vector<4x3x64x64xf32>
    %c0_15 = arith.constant 0 : index
    %c0_16 = arith.constant 0 : index
    %c0_17 = arith.constant 0 : index
    %49 = vector.load %arg9[%c0_15, %c0_16, %c0_17] : memref<4x64x64xf32, #tpu.memory_space<vmem>>, vector<4x64x64xf32>
    %50 = vector.shape_cast %49 : vector<4x64x64xf32> to vector<4x1x64x64xf32>
    %51 = vector.broadcast %50 : vector<4x1x64x64xf32> to vector<4x3x64x64xf32>
    %52 = arith.addf %48, %51 : vector<4x3x64x64xf32>
    %53 = vector.shape_cast %52 : vector<4x3x64x64xf32> to vector<12x64x64xf32>
    %cst_18 = arith.constant dense<0xFF800000> : vector<12x64xf32>
    %54 = vector.multi_reduction <maximumf>, %53, %cst_18 [2] : vector<12x64x64xf32> to vector<12x64xf32>
    %55 = vector.shape_cast %54 : vector<12x64xf32> to vector<12x64x1xf32>
    %56 = vector.broadcast %55 : vector<12x64x1xf32> to vector<12x64x64xf32>
    %57 = arith.subf %53, %56 : vector<12x64x64xf32>
    %58 = math.exp %57 : vector<12x64x64xf32>
    %cst_19 = arith.constant dense<0.000000e+00> : vector<12x64xf32>
    %59 = vector.multi_reduction <add>, %58, %cst_19 [2] : vector<12x64x64xf32> to vector<12x64xf32>
    %60 = vector.shape_cast %59 : vector<12x64xf32> to vector<12x64x1xf32>
    %61 = tpu.reciprocal %60 {approx = true} : vector<12x64x1xf32> -> vector<12x64x1xf32>
    %62 = vector.broadcast %61 : vector<12x64x1xf32> to vector<12x64x64xf32>
    %63 = arith.mulf %58, %62 : vector<12x64x64xf32>
    %64 = arith.truncf %63 : vector<12x64x64xf32> to vector<12x64x64xbf16>
    "tpu.trace_start"() <{level = 10 : i32, message = "bnm,bmd->bnd"}> : () -> ()
    %cst_20 = arith.constant dense<0.000000e+00> : vector<12x64x32xf32>
    %65 = tpu.matmul %64, %46, %cst_20 {dimension_numbers = #tpu.dot_dimension_numbers<[2], [1], [1], [2], [0, 0, 0, 1, 1, 2], [0], [0]>} : vector<12x64x64xbf16>, vector<12x64x32xbf16>, vector<12x64x32xf32> -> vector<12x64x32xf32>
    "tpu.trace_stop"() : () -> ()
    %c0_21 = arith.constant 0 : index
    %c0_22 = arith.constant 0 : index
    %66 = vector.load %arg8[%c0_21, %c0_22] : memref<1x128xf32, #tpu.memory_space<vmem>>, vector<1x128xf32>
    %67 = vector.extract_strided_slice %65 {offsets = [0, 0, 0], sizes = [3, 64, 32], strides = [1, 1, 1]} : vector<12x64x32xf32> to vector<3x64x32xf32>
    %68 = vector.shape_cast %67 : vector<3x64x32xf32> to vector<192x32xf32>
    %69 = arith.truncf %68 : vector<192x32xf32> to vector<192x32xbf16>
    %c0_23 = arith.constant 0 : index
    %c0_24 = arith.constant 0 : index
    %c0_25 = arith.constant 0 : index
    %70 = vector.load %arg7[%c0_23, %c0_24, %c0_25] : memref<4x32x128xbf16, #tpu.memory_space<vmem>>, vector<1x32x128xbf16>
    %71 = vector.shape_cast %70 : vector<1x32x128xbf16> to vector<32x128xbf16>
    %cst_26 = arith.constant dense<0.000000e+00> : vector<192x128xf32>
    %72 = tpu.matmul %69, %71, %cst_26 {dimension_numbers = #tpu.dot_dimension_numbers<[1], [0], [0], [1], [0, 0, 1, 1], [], []>} : vector<192x32xbf16>, vector<32x128xbf16>, vector<192x128xf32> -> vector<192x128xf32>
    %73 = vector.broadcast %66 : vector<1x128xf32> to vector<192x128xf32>
    %74 = arith.addf %73, %72 : vector<192x128xf32>
    %75 = vector.extract_strided_slice %65 {offsets = [3, 0, 0], sizes = [3, 64, 32], strides = [1, 1, 1]} : vector<12x64x32xf32> to vector<3x64x32xf32>
    %76 = vector.shape_cast %75 : vector<3x64x32xf32> to vector<192x32xf32>
    %77 = arith.truncf %76 : vector<192x32xf32> to vector<192x32xbf16>
    %c1 = arith.constant 1 : index
    %c0_27 = arith.constant 0 : index
    %c0_28 = arith.constant 0 : index
    %78 = vector.load %arg7[%c1, %c0_27, %c0_28] : memref<4x32x128xbf16, #tpu.memory_space<vmem>>, vector<1x32x128xbf16>
    %79 = vector.shape_cast %78 : vector<1x32x128xbf16> to vector<32x128xbf16>
    %cst_29 = arith.constant dense<0.000000e+00> : vector<192x128xf32>
    %80 = tpu.matmul %77, %79, %cst_29 {dimension_numbers = #tpu.dot_dimension_numbers<[1], [0], [0], [1], [0, 0, 1, 1], [], []>} : vector<192x32xbf16>, vector<32x128xbf16>, vector<192x128xf32> -> vector<192x128xf32>
    %81 = arith.addf %74, %80 : vector<192x128xf32>
    %82 = vector.extract_strided_slice %65 {offsets = [6, 0, 0], sizes = [3, 64, 32], strides = [1, 1, 1]} : vector<12x64x32xf32> to vector<3x64x32xf32>
    %83 = vector.shape_cast %82 : vector<3x64x32xf32> to vector<192x32xf32>
    %84 = arith.truncf %83 : vector<192x32xf32> to vector<192x32xbf16>
    %c2 = arith.constant 2 : index
    %c0_30 = arith.constant 0 : index
    %c0_31 = arith.constant 0 : index
    %85 = vector.load %arg7[%c2, %c0_30, %c0_31] : memref<4x32x128xbf16, #tpu.memory_space<vmem>>, vector<1x32x128xbf16>
    %86 = vector.shape_cast %85 : vector<1x32x128xbf16> to vector<32x128xbf16>
    %cst_32 = arith.constant dense<0.000000e+00> : vector<192x128xf32>
    %87 = tpu.matmul %84, %86, %cst_32 {dimension_numbers = #tpu.dot_dimension_numbers<[1], [0], [0], [1], [0, 0, 1, 1], [], []>} : vector<192x32xbf16>, vector<32x128xbf16>, vector<192x128xf32> -> vector<192x128xf32>
    %88 = arith.addf %81, %87 : vector<192x128xf32>
    %89 = vector.extract_strided_slice %65 {offsets = [9, 0, 0], sizes = [3, 64, 32], strides = [1, 1, 1]} : vector<12x64x32xf32> to vector<3x64x32xf32>
    %90 = vector.shape_cast %89 : vector<3x64x32xf32> to vector<192x32xf32>
    %91 = arith.truncf %90 : vector<192x32xf32> to vector<192x32xbf16>
    %c3 = arith.constant 3 : index
    %c0_33 = arith.constant 0 : index
    %c0_34 = arith.constant 0 : index
    %92 = vector.load %arg7[%c3, %c0_33, %c0_34] : memref<4x32x128xbf16, #tpu.memory_space<vmem>>, vector<1x32x128xbf16>
    %93 = vector.shape_cast %92 : vector<1x32x128xbf16> to vector<32x128xbf16>
    %cst_35 = arith.constant dense<0.000000e+00> : vector<192x128xf32>
    %94 = tpu.matmul %91, %93, %cst_35 {dimension_numbers = #tpu.dot_dimension_numbers<[1], [0], [0], [1], [0, 0, 1, 1], [], []>} : vector<192x32xbf16>, vector<32x128xbf16>, vector<192x128xf32> -> vector<192x128xf32>
    %95 = arith.addf %88, %94 : vector<192x128xf32>
    %96 = vector.shape_cast %95 : vector<192x128xf32> to vector<3x64x128xf32>
    %c0_36 = arith.constant 0 : index
    %c0_37 = arith.constant 0 : index
    %c0_38 = arith.constant 0 : index
    %97 = vector.load %arg10[%c0_36, %c0_37, %c0_38] : memref<3x64x128xf32, #tpu.memory_space<vmem>>, vector<3x64x128xf32>
    tpu.vector_store %arg10[%c0_36, %c0_37, %c0_38], %96 {strides = array<i32>} : memref<3x64x128xf32, #tpu.memory_space<vmem>>, vector<3x64x128xf32>,
    return
  }
  func.func @transform_0(%arg0: i32) -> (i32, i32, i32) {
    %c0_i32 = arith.constant 0 : i32
    %c0_i32_0 = arith.constant 0 : i32
    %c0_i32_1 = arith.constant 0 : i32
    return %arg0, %c0_i32, %c0_i32_0 : i32, i32, i32
  }
  func.func @transform_1(%arg0: i32) -> (i32, i32, i32) {
    %c0_i32 = arith.constant 0 : i32
    %c0_i32_0 = arith.constant 0 : i32
    %c0_i32_1 = arith.constant 0 : i32
    return %arg0, %c0_i32, %c0_i32_0 : i32, i32, i32
  }
  func.func @transform_2(%arg0: i32) -> (i32, i32) {
    %c0_i32 = arith.constant 0 : i32
    %c0_i32_0 = arith.constant 0 : i32
    %c0_i32_1 = arith.constant 0 : i32
    return %c0_i32, %c0_i32_0 : i32, i32
  }
  func.func @transform_3(%arg0: i32) -> (i32, i32) {
    %c0_i32 = arith.constant 0 : i32
    %c0_i32_0 = arith.constant 0 : i32
    %c0_i32_1 = arith.constant 0 : i32
    return %c0_i32, %c0_i32_0 : i32, i32
  }
  func.func @transform_4(%arg0: i32) -> (i32, i32) {
    %c0_i32 = arith.constant 0 : i32
    %c0_i32_0 = arith.constant 0 : i32
    %c0_i32_1 = arith.constant 0 : i32
    return %c0_i32, %c0_i32_0 : i32, i32
  }
  func.func @transform_5(%arg0: i32) -> (i32, i32) {
    %c0_i32 = arith.constant 0 : i32
    %c0_i32_0 = arith.constant 0 : i32
    %c0_i32_1 = arith.constant 0 : i32
    return %c0_i32, %c0_i32_0 : i32, i32
  }
  func.func @transform_6(%arg0: i32) -> (i32, i32, i32) {
    %c0_i32 = arith.constant 0 : i32
    %c0_i32_0 = arith.constant 0 : i32
    %c0_i32_1 = arith.constant 0 : i32
    %c0_i32_2 = arith.constant 0 : i32
    return %c0_i32, %c0_i32_0, %c0_i32_1 : i32, i32, i32
  }
  func.func @transform_7(%arg0: i32) -> (i32, i32) {
    %c0_i32 = arith.constant 0 : i32
    %c0_i32_0 = arith.constant 0 : i32
    %c0_i32_1 = arith.constant 0 : i32
    return %c0_i32, %c0_i32_0 : i32, i32
  }
  func.func @transform_8(%arg0: i32) -> (i32, i32, i32) {
    %c0_i32 = arith.constant 0 : i32
    %c0_i32_0 = arith.constant 0 : i32
    %c0_i32_1 = arith.constant 0 : i32
    %c0_i32_2 = arith.constant 0 : i32
    return %c0_i32, %c0_i32_0, %c0_i32_1 : i32, i32, i32
  }
  func.func @transform_9(%arg0: i32) -> (i32, i32, i32) {
    %c0_i32 = arith.constant 0 : i32
    %c0_i32_0 = arith.constant 0 : i32
    %c0_i32_1 = arith.constant 0 : i32
    return %arg0, %c0_i32, %c0_i32_0 : i32, i32, i32
  }
}

</mosaic_0001>

<llo_original>
// kernel: tpu_custom_call.1
$region0: #{tpu_custom_call.1}
  #allocation0 [shape = 'u32[]', space=smem, size = 0x4, offset = 0x4, fixed_abs, tag = 'smem constant byte address 0x4 - core index']
  #allocation1 [shape = 'u32[144,128]{1,0:T(1,128)}', space=vmem, size = 0x12000, scoped, tag = 'internal scratch']
  %s0 = inlined_call_operand.hbm [shape: f32[6,64,128], index: 0, kind: input, shape index: {}]
  %s1 = inlined_call_operand.hbm [shape: f32[6,64,128], index: 1, kind: input, shape index: {}]
  %s2 = inlined_call_operand.hbm [shape: bf16[128,128], index: 2, kind: input, shape index: {}]
  %s3 = inlined_call_operand.vmem [shape: f32[1,128], index: 3, kind: input, shape index: {}]
  %s4 = inlined_call_operand.hbm [shape: bf16[128,256], index: 4, kind: input, shape index: {}]
  %s5 = inlined_call_operand.vmem [shape: f32[1,256], index: 5, kind: input, shape index: {}]
  %s6 = inlined_call_operand.hbm [shape: bf16[4,32,128], index: 6, kind: input, shape index: {}]
  %s7 = inlined_call_operand.vmem [shape: f32[1,128], index: 7, kind: input, shape index: {}]
  %s8 = inlined_call_operand.hbm [shape: f32[4,64,64], index: 8, kind: input, shape index: {}]
  %s9 = inlined_call_operand.hbm [shape: f32[6,64,128], index: 9, kind: output, shape index: {}]
  %s10 = sld [smem:[#allocation0]]
  $region93: #{tpu_custom_call.1} parent=0
    _
  %s12 = ssub.s32 1, %s10
  %s13 = scalar_select 0, %s12, %s10
  $region1: #{tpu_custom_call.1} parent=0
    #allocation2 [shape = 'u8[196608]{0}', space=vmem, size = 0x30000, scoped, tag = 'input window, operand 0']
    #allocation3 [shape = 's32[2]{0}', space=sflag, size = 0x8, scoped, tag = 'scoped memory for tpu_custom_call.1']
    #allocation4 [shape = 's32[2]{0}', space=sflag, size = 0x8, scoped, tag = 'scoped memory for tpu_custom_call.1']
    #allocation5 [shape = 'u8[196608]{0}', space=vmem, size = 0x30000, scoped, tag = 'input window, operand 1']
    #allocation6 [shape = 's32[2]{0}', space=sflag, size = 0x8, scoped, tag = 'scoped memory for tpu_custom_call.1']
    #allocation7 [shape = 'u8[32768]{0}', space=vmem, size = 0x8000, scoped, tag = 'input window, operand 2, single buffered']
    #allocation8 [shape = 'u8[65536]{0}', space=vmem, size = 0x10000, scoped, tag = 'input window, operand 4, single buffered']
    #allocation9 [shape = 's32[1]{0}', space=sflag, size = 0x4, scoped, tag = 'scoped memory for tpu_custom_call.1']
    #allocation10 [shape = 'u8[32768]{0}', space=vmem, size = 0x8000, scoped, tag = 'input window, operand 6, single buffered']
    #allocation11 [shape = 'u8[131072]{0}', space=vmem, size = 0x20000, scoped, tag = 'input window, operand 8, single buffered']
    #allocation12 [shape = 's32[1]{0}', space=sflag, size = 0x4, scoped, tag = 'scoped memory for tpu_custom_call.1']
    #allocation13 [shape = 'u8[196608]{0}', space=vmem, size = 0x30000, scoped, tag = 'output window, operand 0']
    %14 = vsyncpa [#allocation3], 0
    %s15 = scalar_lea.sflag [#allocation3], 1
    %16 = vsyncpa %s15, 0
    %17 = vsyncpa [#allocation6], 0
    %s18 = scalar_lea.sflag [#allocation6], 1
    %19 = vsyncpa %s18, 0
    %20 = vsyncpa [#allocation9], 0
    %21 = vsyncpa [#allocation12], 0
    %22 = vsyncpa [#allocation4], 0
    %s23 = scalar_lea.sflag [#allocation4], 1
    %24 = vsyncpa %s23, 0
    loop: start=0, step=1, limit=4
    $region2: #{tpu_custom_call.1} parent=1 // loop_pre_header
      _
    $region3: #{tpu_custom_call.1} parent=1 // loop_header
      %s26 = sphi 0, %s30
      %p27 = scmp.ge.s32.totalorder %s26, 4
      %s36 = sphi 0, %s38
      %s39 = sphi 0, %s36
      %s40 = sphi 0, %s39
      %s56 = sphi 0, %s40
      %s62 = sphi 0, %s64
      %s65 = sphi 0, %s62
      %s66 = sphi 0, %s65
      %s82 = sphi 0, %s66
      %s86 = sphi 0, %s86
      %s88 = sphi 0, %s86
      %s89 = sphi 0, %s88
      %s103 = sphi 0, %s89
      %s107 = sphi 0, %s107
      %s109 = sphi 0, %s107
      %s110 = sphi 0, %s109
      %s124 = sphi 0, %s110
      %s128 = sphi 0, %s128
      %s130 = sphi 0, %s128
      %s131 = sphi 0, %s130
      %s145 = sphi 0, %s131
      %s149 = sphi 0, %s149
      %s151 = sphi 0, %s149
      %s152 = sphi 0, %s151
      %s166 = sphi 0, %s152
      %s170 = sphi 0, %s170
      %s172 = sphi 0, %s170
      %s173 = sphi 0, %s172
      %s187 = sphi 0, %s173
      %s191 = sphi 0, %s191
      %s193 = sphi 0, %s191
      %s194 = sphi 0, %s193
      %s208 = sphi 0, %s194
      %s212 = sphi 0, %s212
      %s214 = sphi 0, %s212
      %s215 = sphi 0, %s214
      %s229 = sphi 0, %s215
      %s235 = sphi 0, %s237
      %s238 = sphi 0, %s235
      %s239 = sphi 0, %s238
      %s255 = sphi 0, %s239
    $region4: #{tpu_custom_call.1} parent=1 // loop_header_branch
      %29 = sbr.rel (%p27) target = $region8
    $region5: #{tpu_custom_call.1} parent=1 // loop_body
      %s31 = ssub.s32 %s26, 1
      %s32 = ssub.s32 %s26, 2
      %s33 = sadd.s32 %s26, 1
      %s34 = ssub.s32 %s26, %s33
      %p35 = scmp.eq.s32.totalorder %s34, 0
      %s37 = sadd.s32 %s36, 1
      %s38 = scalar_select %p35, %s36, %s37
      %p41 = pneg %p35
      %p42 = scmp.eq.s32.totalorder %s26, 1
      %p43 = por %p41, %p42
      %p44 = scmp.ne.s32.totalorder %s36, %s39
      %p45 = scmp.eq.s32.totalorder %s26, 0
      %p46 = por %p44, %p45
      %p47 = scmp.ne.s32.totalorder %s36, %s39
      %p48 = scmp.eq.s32.totalorder %s31, 1
      %p49 = por %p47, %p48
      %p50 = scmp.ne.s32.totalorder %s39, %s40
      %p51 = scmp.eq.s32.totalorder %s31, 0
      %p52 = por %p50, %p51
      %p53 = scmp.ne.s32.totalorder %s39, %s40
      %p54 = scmp.eq.s32.totalorder %s32, 1
      %p55 = por %p53, %p54
      %p57 = scmp.ne.s32.totalorder %s40, %s56
      %p58 = scmp.eq.s32.totalorder %s32, 0
      %p59 = por %p57, %p58
      %s60 = ssub.s32 %s26, %s33
      %p61 = scmp.eq.s32.totalorder %s60, 0
      %s63 = sadd.s32 %s62, 1
      %s64 = scalar_select %p61, %s62, %s63
      %p67 = pneg %p61
      %p68 = scmp.eq.s32.totalorder %s26, 1
      %p69 = por %p67, %p68
      %p70 = scmp.ne.s32.totalorder %s62, %s65
      %p71 = scmp.eq.s32.totalorder %s26, 0
      %p72 = por %p70, %p71
      %p73 = scmp.ne.s32.totalorder %s62, %s65
      %p74 = scmp.eq.s32.totalorder %s31, 1
      %p75 = por %p73, %p74
      %p76 = scmp.ne.s32.totalorder %s65, %s66
      %p77 = scmp.eq.s32.totalorder %s31, 0
      %p78 = por %p76, %p77
      %p79 = scmp.ne.s32.totalorder %s65, %s66
      %p80 = scmp.eq.s32.totalorder %s32, 1
      %p81 = por %p79, %p80
      %p83 = scmp.ne.s32.totalorder %s66, %s82
      %p84 = scmp.eq.s32.totalorder %s32, 0
      %p85 = por %p83, %p84
      %s87 = sadd.s32 %s86, 1
      %p90 = scmp.eq.s32.totalorder %s26, 1
      %p91 = scmp.ne.s32.totalorder %s86, %s88
      %p92 = scmp.eq.s32.totalorder %s26, 0
      %p93 = por %p91, %p92
      %p94 = scmp.ne.s32.totalorder %s86, %s88
      %p95 = scmp.eq.s32.totalorder %s31, 1
      %p96 = por %p94, %p95
      %p97 = scmp.ne.s32.totalorder %s88, %s89
      %p98 = scmp.eq.s32.totalorder %s31, 0
      %p99 = por %p97, %p98
      %p100 = scmp.ne.s32.totalorder %s88, %s89
      %p101 = scmp.eq.s32.totalorder %s32, 1
      %p102 = por %p100, %p101
      %p104 = scmp.ne.s32.totalorder %s89, %s103
      %p105 = scmp.eq.s32.totalorder %s32, 0
      %p106 = por %p104, %p105
      %s108 = sadd.s32 %s107, 1
      %p111 = scmp.eq.s32.totalorder %s26, 1
      %p112 = scmp.ne.s32.totalorder %s107, %s109
      %p113 = scmp.eq.s32.totalorder %s26, 0
      %p114 = por %p112, %p113
      %p115 = scmp.ne.s32.totalorder %s107, %s109
      %p116 = scmp.eq.s32.totalorder %s31, 1
      %p117 = por %p115, %p116
      %p118 = scmp.ne.s32.totalorder %s109, %s110
      %p119 = scmp.eq.s32.totalorder %s31, 0
      %p120 = por %p118, %p119
      %p121 = scmp.ne.s32.totalorder %s109, %s110
      %p122 = scmp.eq.s32.totalorder %s32, 1
      %p123 = por %p121, %p122
      %p125 = scmp.ne.s32.totalorder %s110, %s124
      %p126 = scmp.eq.s32.totalorder %s32, 0
      %p127 = por %p125, %p126
      %s129 = sadd.s32 %s128, 1
      %p132 = scmp.eq.s32.totalorder %s26, 1
      %p133 = scmp.ne.s32.totalorder %s128, %s130
      %p134 = scmp.eq.s32.totalorder %s26, 0
      %p135 = por %p133, %p134
      %p136 = scmp.ne.s32.totalorder %s128, %s130
      %p137 = scmp.eq.s32.totalorder %s31, 1
      %p138 = por %p136, %p137
      %p139 = scmp.ne.s32.totalorder %s130, %s131
      %p140 = scmp.eq.s32.totalorder %s31, 0
      %p141 = por %p139, %p140
      %p142 = scmp.ne.s32.totalorder %s130, %s131
      %p143 = scmp.eq.s32.totalorder %s32, 1
      %p144 = por %p142, %p143
      %p146 = scmp.ne.s32.totalorder %s131, %s145
      %p147 = scmp.eq.s32.totalorder %s32, 0
      %p148 = por %p146, %p147
      %s150 = sadd.s32 %s149, 1
      %p153 = scmp.eq.s32.totalorder %s26, 1
      %p154 = scmp.ne.s32.totalorder %s149, %s151
      %p155 = scmp.eq.s32.totalorder %s26, 0
      %p156 = por %p154, %p155
      %p157 = scmp.ne.s32.totalorder %s149, %s151
      %p158 = scmp.eq.s32.totalorder %s31, 1
      %p159 = por %p157, %p158
      %p160 = scmp.ne.s32.totalorder %s151, %s152
      %p161 = scmp.eq.s32.totalorder %s31, 0
      %p162 = por %p160, %p161
      %p163 = scmp.ne.s32.totalorder %s151, %s152
      %p164 = scmp.eq.s32.totalorder %s32, 1
      %p165 = por %p163, %p164
      %p167 = scmp.ne.s32.totalorder %s152, %s166
      %p168 = scmp.eq.s32.totalorder %s32, 0
      %p169 = por %p167, %p168
      %s171 = sadd.s32 %s170, 1
      %p174 = scmp.eq.s32.totalorder %s26, 1
      %p175 = scmp.ne.s32.totalorder %s170, %s172
      %p176 = scmp.eq.s32.totalorder %s26, 0
      %p177 = por %p175, %p176
      %p178 = scmp.ne.s32.totalorder %s170, %s172
      %p179 = scmp.eq.s32.totalorder %s31, 1
      %p180 = por %p178, %p179
      %p181 = scmp.ne.s32.totalorder %s172, %s173
      %p182 = scmp.eq.s32.totalorder %s31, 0
      %p183 = por %p181, %p182
      %p184 = scmp.ne.s32.totalorder %s172, %s173
      %p185 = scmp.eq.s32.totalorder %s32, 1
      %p186 = por %p184, %p185
      %p188 = scmp.ne.s32.totalorder %s173, %s187
      %p189 = scmp.eq.s32.totalorder %s32, 0
      %p190 = por %p188, %p189
      %s192 = sadd.s32 %s191, 1
      %p195 = scmp.eq.s32.totalorder %s26, 1
      %p196 = scmp.ne.s32.totalorder %s191, %s193
      %p197 = scmp.eq.s32.totalorder %s26, 0
      %p198 = por %p196, %p197
      %p199 = scmp.ne.s32.totalorder %s191, %s193
      %p200 = scmp.eq.s32.totalorder %s31, 1
      %p201 = por %p199, %p200
      %p202 = scmp.ne.s32.totalorder %s193, %s194
      %p203 = scmp.eq.s32.totalorder %s31, 0
      %p204 = por %p202, %p203
      %p205 = scmp.ne.s32.totalorder %s193, %s194
      %p206 = scmp.eq.s32.totalorder %s32, 1
      %p207 = por %p205, %p206
      %p209 = scmp.ne.s32.totalorder %s194, %s208
      %p210 = scmp.eq.s32.totalorder %s32, 0
      %p211 = por %p209, %p210
      %s213 = sadd.s32 %s212, 1
      %p216 = scmp.eq.s32.totalorder %s26, 1
      %p217 = scmp.ne.s32.totalorder %s212, %s214
      %p218 = scmp.eq.s32.totalorder %s26, 0
      %p219 = por %p217, %p218
      %p220 = scmp.ne.s32.totalorder %s212, %s214
      %p221 = scmp.eq.s32.totalorder %s31, 1
      %p222 = por %p220, %p221
      %p223 = scmp.ne.s32.totalorder %s214, %s215
      %p224 = scmp.eq.s32.totalorder %s31, 0
      %p225 = por %p223, %p224
      %p226 = scmp.ne.s32.totalorder %s214, %s215
      %p227 = scmp.eq.s32.totalorder %s32, 1
      %p228 = por %p226, %p227
      %p230 = scmp.ne.s32.totalorder %s215, %s229
      %p231 = scmp.eq.s32.totalorder %s32, 0
      %p232 = por %p230, %p231
      %s233 = ssub.s32 %s26, %s33
      %p234 = scmp.eq.s32.totalorder %s233, 0
      %s236 = sadd.s32 %s235, 1
      %s237 = scalar_select %p234, %s235, %s236
      %p240 = pneg %p234
      %p241 = scmp.eq.s32.totalorder %s26, 1
      %p242 = por %p240, %p241
      %p243 = scmp.ne.s32.totalorder %s235, %s238
      %p244 = scmp.eq.s32.totalorder %s26, 0
      %p245 = por %p243, %p244
      %p246 = scmp.ne.s32.totalorder %s235, %s238
      %p247 = scmp.eq.s32.totalorder %s31, 1
      %p248 = por %p246, %p247
      %p249 = scmp.ne.s32.totalorder %s238, %s239
      %p250 = scmp.eq.s32.totalorder %s31, 0
      %p251 = por %p249, %p250
      %p252 = scmp.ne.s32.totalorder %s238, %s239
      %p253 = scmp.eq.s32.totalorder %s32, 1
      %p254 = por %p252, %p253
      %p256 = scmp.ne.s32.totalorder %s239, %s255
      %p257 = scmp.eq.s32.totalorder %s32, 0
      %p258 = por %p256, %p257
      %p259 = scmp.le.s32.totalorder 1, %s26
      %p260 = scmp.lt.s32.totalorder %s26, 3
      %p261 = pnand %p259, %p260
      %p262 = pneg %p261
      // Predicated region
      $region9: #{tpu_custom_call.1} parent=5 // pred_check
        _
      $region10: #{tpu_custom_call.1} parent=5 // pred_check_branch
        %264 = sbr.rel (%p261) target = $region12
      $region11: #{tpu_custom_call.1} parent=5 // pred_region
        %s265 = ssub.s32 %s26, 1
        // Predicated region
        $region13: #{tpu_custom_call.1} parent=11 // pred_check
          %p266 = pneg %p99
        $region14: #{tpu_custom_call.1} parent=11 // pred_check_branch
          %268 = sbr.rel (%p266) target = $region16
        $region15: #{tpu_custom_call.1} parent=11 // pred_region
          %s270 = ssub.s32 1024, 1024
          %271 = vsyncadd [#allocation6], %s270
          %s272 = sshll.u32 [#allocation7], 4
          %s273 = int_to_ptr.vmem [resolvable:$true] %s272
          %278 = dma.hbm_to_vmem [thread:$0]  %s2, 1024, %s273, [#allocation6], 64, 64, 4
        $region16: #{tpu_custom_call.1} parent=11 // pred_fallthru
          _
        // Predicated region
        $region17: #{tpu_custom_call.1} parent=11 // pred_check
          %p279 = pneg %p120
        $region18: #{tpu_custom_call.1} parent=11 // pred_check_branch
          %281 = sbr.rel (%p279) target = $region20
        $region19: #{tpu_custom_call.1} parent=11 // pred_region
          _
        $region20: #{tpu_custom_call.1} parent=11 // pred_fallthru
          _
        // Predicated region
        $region21: #{tpu_custom_call.1} parent=11 // pred_check
          %p282 = pneg %p141
        $region22: #{tpu_custom_call.1} parent=11 // pred_check_branch
          %284 = sbr.rel (%p282) target = $region24
        $region23: #{tpu_custom_call.1} parent=11 // pred_region
          %s286 = ssub.s32 2048, 2048
          %287 = vsyncadd [#allocation9], %s286
          %s288 = sshll.u32 [#allocation8], 4
          %s289 = int_to_ptr.vmem [resolvable:$true] %s288
          %294 = dma.hbm_to_vmem [thread:$0]  %s4, 2048, %s289, [#allocation9], 128, 128, 8
        $region24: #{tpu_custom_call.1} parent=11 // pred_fallthru
          _
        // Predicated region
        $region25: #{tpu_custom_call.1} parent=11 // pred_check
          %p295 = pneg %p162
        $region26: #{tpu_custom_call.1} parent=11 // pred_check_branch
          %297 = sbr.rel (%p295) target = $region28
        $region27: #{tpu_custom_call.1} parent=11 // pred_region
          _
        $region28: #{tpu_custom_call.1} parent=11 // pred_fallthru
          _
        // Predicated region
        $region29: #{tpu_custom_call.1} parent=11 // pred_check
          %p298 = pneg %p183
        $region30: #{tpu_custom_call.1} parent=11 // pred_check_branch
          %300 = sbr.rel (%p298) target = $region32
        $region31: #{tpu_custom_call.1} parent=11 // pred_region
          %s302 = ssub.s32 1024, 1024
          %303 = vsyncadd [#allocation9], %s302
          %s304 = sshll.u32 [#allocation10], 4
          %s305 = int_to_ptr.vmem [resolvable:$true] %s304
          %310 = dma.hbm_to_vmem [thread:$0]  %s6, 1024, %s305, [#allocation9], 64, 64, 4
        $region32: #{tpu_custom_call.1} parent=11 // pred_fallthru
          _
        // Predicated region
        $region33: #{tpu_custom_call.1} parent=11 // pred_check
          %p311 = pneg %p204
        $region34: #{tpu_custom_call.1} parent=11 // pred_check_branch
          %313 = sbr.rel (%p311) target = $region36
        $region35: #{tpu_custom_call.1} parent=11 // pred_region
          _
        $region36: #{tpu_custom_call.1} parent=11 // pred_fallthru
          _
        // Predicated region
        $region37: #{tpu_custom_call.1} parent=11 // pred_check
          %p314 = pneg %p225
        $region38: #{tpu_custom_call.1} parent=11 // pred_check_branch
          %316 = sbr.rel (%p314) target = $region40
        $region39: #{tpu_custom_call.1} parent=11 // pred_region
          %s318 = ssub.s32 4096, 4096
          %319 = vsyncadd [#allocation12], %s318
          %s320 = sshll.u32 [#allocation11], 4
          %s321 = int_to_ptr.vmem [resolvable:$true] %s320
          %326 = dma.hbm_to_vmem [thread:$0]  %s8, 4096, %s321, [#allocation12], 128, 128, 8
        $region40: #{tpu_custom_call.1} parent=11 // pred_fallthru
          _
      $region12: #{tpu_custom_call.1} parent=5 // pred_fallthru
        _
      %p327 = scmp.lt.s32.totalorder %s26, 2
      // Predicated region
      $region41: #{tpu_custom_call.1} parent=5 // pred_check
        %p328 = pneg %p327
      $region42: #{tpu_custom_call.1} parent=5 // pred_check_branch
        %330 = sbr.rel (%p328) target = $region44
      $region43: #{tpu_custom_call.1} parent=5 // pred_region
        // Predicated region
        $region45: #{tpu_custom_call.1} parent=43 // pred_check
          %p331 = pneg %p46
        $region46: #{tpu_custom_call.1} parent=43 // pred_check_branch
          %333 = sbr.rel (%p331) target = $region48
        $region47: #{tpu_custom_call.1} parent=43 // pred_region
          %s334 = sand.u32 %s36, 1
          %s335 = scalar_lea.sflag [#allocation3], %s334
          %s336 = sand.u32 %s36, 1
          %s337 = smul.addr %s336, 192
          %s338 = scalar_lea.vmem [#allocation2], %s337
          %s339 = smul.u32 3, %s26
          %s341 = ssub.s32 3072, 3072
          %342 = vsyncadd %s335, %s341
          %s343 = smul.addr %s339, 8
          %s344 = smul.addr %s343, 128
          %s345 = scalar_lea.hbm %s0, %s344
          %s346 = sshll.u32 %s338, 4
          %s347 = int_to_ptr.vmem [resolvable:$true] %s346
          %352 = dma.hbm_to_vmem [thread:$0]  %s345, 3072, %s347, %s335, 128, 128, 8
        $region48: #{tpu_custom_call.1} parent=43 // pred_fallthru
          _
        // Predicated region
        $region49: #{tpu_custom_call.1} parent=43 // pred_check
          %p353 = pneg %p72
        $region50: #{tpu_custom_call.1} parent=43 // pred_check_branch
          %355 = sbr.rel (%p353) target = $region52
        $region51: #{tpu_custom_call.1} parent=43 // pred_region
          %s356 = sand.u32 %s26, 1
          %s357 = scalar_lea.sflag [#allocation6], %s356
          %s358 = sand.u32 %s62, 1
          %s359 = smul.addr %s358, 192
          %s360 = scalar_lea.vmem [#allocation5], %s359
          %s361 = smul.u32 3, %s26
          %s363 = ssub.s32 3072, 3072
          %364 = vsyncadd %s357, %s363
          %s365 = smul.addr %s361, 8
          %s366 = smul.addr %s365, 128
          %s367 = scalar_lea.hbm %s1, %s366
          %s368 = sshll.u32 %s360, 4
          %s369 = int_to_ptr.vmem [resolvable:$true] %s368
          %374 = dma.hbm_to_vmem [thread:$0]  %s367, 3072, %s369, %s357, 128, 128, 8
        $region52: #{tpu_custom_call.1} parent=43 // pred_fallthru
          _
      $region44: #{tpu_custom_call.1} parent=5 // pred_fallthru
        _
      %p375 = scmp.le.s32.totalorder 1, %s26
      %p376 = scmp.lt.s32.totalorder %s26, 3
      %p377 = pnand %p375, %p376
      %p378 = pneg %p377
      // Predicated region
      $region53: #{tpu_custom_call.1} parent=5 // pred_check
        _
      $region54: #{tpu_custom_call.1} parent=5 // pred_check_branch
        %380 = sbr.rel (%p377) target = $region56
      $region55: #{tpu_custom_call.1} parent=5 // pred_region
        %s381 = ssub.s32 %s26, 1
        %s382 = sand.u32 %s39, 1
        %s383 = scalar_lea.sflag [#allocation3], %s382
        %s384 = sand.u32 %s39, 1
        %s385 = smul.addr %s384, 192
        %s386 = scalar_lea.vmem [#allocation2], %s385
        // Predicated region
        $region57: #{tpu_custom_call.1} parent=55 // pred_check
          %p387 = pneg %p52
        $region58: #{tpu_custom_call.1} parent=55 // pred_check_branch
          %389 = sbr.rel (%p387) target = $region60
        $region59: #{tpu_custom_call.1} parent=55 // pred_region
          %390 = dma.done %s383, 3072
        $region60: #{tpu_custom_call.1} parent=55 // pred_fallthru
          _
        %s391 = sand.u32 %s31, 1
        %s392 = scalar_lea.sflag [#allocation6], %s391
        %s393 = sand.u32 %s65, 1
        %s394 = smul.addr %s393, 192
        %s395 = scalar_lea.vmem [#allocation5], %s394
        // Predicated region
        $region61: #{tpu_custom_call.1} parent=55 // pred_check
          %p396 = pneg %p78
        $region62: #{tpu_custom_call.1} parent=55 // pred_check_branch
          %398 = sbr.rel (%p396) target = $region64
        $region63: #{tpu_custom_call.1} parent=55 // pred_region
          %399 = dma.done %s392, 3072
        $region64: #{tpu_custom_call.1} parent=55 // pred_fallthru
          _
        // Predicated region
        $region65: #{tpu_custom_call.1} parent=55 // pred_check
          %p400 = pneg %p99
        $region66: #{tpu_custom_call.1} parent=55 // pred_check_branch
          %402 = sbr.rel (%p400) target = $region68
        $region67: #{tpu_custom_call.1} parent=55 // pred_region
          %403 = dma.done [#allocation6], 1024
        $region68: #{tpu_custom_call.1} parent=55 // pred_fallthru
          _
        // Predicated region
        $region69: #{tpu_custom_call.1} parent=55 // pred_check
          %p404 = pneg %p141
        $region70: #{tpu_custom_call.1} parent=55 // pred_check_branch
          %406 = sbr.rel (%p404) target = $region72
        $region71: #{tpu_custom_call.1} parent=55 // pred_region
          %407 = dma.done [#allocation9], 2048
        $region72: #{tpu_custom_call.1} parent=55 // pred_fallthru
          _
        // Predicated region
        $region73: #{tpu_custom_call.1} parent=55 // pred_check
          %p408 = pneg %p183
        $region74: #{tpu_custom_call.1} parent=55 // pred_check_branch
          %410 = sbr.rel (%p408) target = $region76
        $region75: #{tpu_custom_call.1} parent=55 // pred_region
          %411 = dma.done [#allocation9], 1024
        $region76: #{tpu_custom_call.1} parent=55 // pred_fallthru
          _
        // Predicated region
        $region77: #{tpu_custom_call.1} parent=55 // pred_check
          %p412 = pneg %p225
        $region78: #{tpu_custom_call.1} parent=55 // pred_check_branch
          %414 = sbr.rel (%p412) target = $region80
        $region79: #{tpu_custom_call.1} parent=55 // pred_region
          %415 = dma.done [#allocation12], 4096
        $region80: #{tpu_custom_call.1} parent=55 // pred_fallthru
          _
        %s416 = sand.u32 %s39, 1
        %s417 = scalar_lea.sflag [#allocation3], %s416
        %s418 = sand.u32 %s39, 1
        %s419 = smul.addr %s418, 192
        %s420 = scalar_lea.vmem [#allocation2], %s419
        %p421 = pneg %p52
        %p422 = pneg %p49
        %s423 = sand.u32 %s31, 1
        %s424 = scalar_lea.sflag [#allocation6], %s423
        %s425 = sand.u32 %s65, 1
        %s426 = smul.addr %s425, 192
        %s427 = scalar_lea.vmem [#allocation5], %s426
        %p428 = pneg %p78
        %p429 = pneg %p75
        %p430 = pneg %p99
        %p431 = pneg %p96
        %p432 = pneg %p120
        %p433 = pneg %p117
        %p434 = pneg %p141
        %p435 = pneg %p138
        %p436 = pneg %p162
        %p437 = pneg %p159
        %p438 = pneg %p183
        %p439 = pneg %p180
        %p440 = pneg %p204
        %p441 = pneg %p201
        %p442 = pneg %p225
        %p443 = pneg %p222
        %p444 = pneg %p251
        %p445 = pneg %p248
        %s446 = sand.u32 %s238, 1
        %s447 = scalar_lea.sflag [#allocation4], %s446
        %s448 = sand.u32 %s238, 1
        %s449 = smul.addr %s448, 192
        %s450 = scalar_lea.vmem [#allocation13], %s449
        %s451 = smul.u32 3, %s31
        %s452 = smul.u32 3, %s31
        %s453 = smul.u32 3, %s31
        %v455 = vld [vmem:[%s386] sm:$0xff]
        %v456 = vld [vmem:[%s386 + $0x8] sm:$0xff]
        %v457 = vld [vmem:[%s386 + $0x10] sm:$0xff]
        %v458 = vld [vmem:[%s386 + $0x18] sm:$0xff]
        %v459 = vld [vmem:[%s386 + $0x20] sm:$0xff]
        %v460 = vld [vmem:[%s386 + $0x28] sm:$0xff]
        %v461 = vld [vmem:[%s386 + $0x30] sm:$0xff]
        %v462 = vld [vmem:[%s386 + $0x38] sm:$0xff]
        %v463 = vld [vmem:[%s386 + $0x40] sm:$0xff]
        %v464 = vld [vmem:[%s386 + $0x48] sm:$0xff]
        %v465 = vld [vmem:[%s386 + $0x50] sm:$0xff]
        %v466 = vld [vmem:[%s386 + $0x58] sm:$0xff]
        %v467 = vld [vmem:[%s386 + $0x60] sm:$0xff]
        %v468 = vld [vmem:[%s386 + $0x68] sm:$0xff]
        %v469 = vld [vmem:[%s386 + $0x70] sm:$0xff]
        %v470 = vld [vmem:[%s386 + $0x78] sm:$0xff]
        %v471 = vld [vmem:[%s386 + $0x80] sm:$0xff]
        %v472 = vld [vmem:[%s386 + $0x88] sm:$0xff]
        %v473 = vld [vmem:[%s386 + $0x90] sm:$0xff]
        %v474 = vld [vmem:[%s386 + $0x98] sm:$0xff]
        %v475 = vld [vmem:[%s386 + $0xa0] sm:$0xff]
        %v476 = vld [vmem:[%s386 + $0xa8] sm:$0xff]
        %v477 = vld [vmem:[%s386 + $0xb0] sm:$0xff]
        %v478 = vld [vmem:[%s386 + $0xb8] sm:$0xff]
        %v479 = vpack.c.bf16 %v456, %v455
        %v480 = vpack.c.bf16 %v458, %v457
        %v481 = vpack.c.bf16 %v460, %v459
        %v482 = vpack.c.bf16 %v462, %v461
        %v483 = vpack.c.bf16 %v464, %v463
        %v484 = vpack.c.bf16 %v466, %v465
        %v485 = vpack.c.bf16 %v468, %v467
        %v486 = vpack.c.bf16 %v470, %v469
        %v487 = vpack.c.bf16 %v472, %v471
        %v488 = vpack.c.bf16 %v474, %v473
        %v489 = vpack.c.bf16 %v476, %v475
        %v490 = vpack.c.bf16 %v478, %v477
        %v491 = vld [vmem:[%s395] sm:$0xff]
        %v492 = vld [vmem:[%s395 + $0x8] sm:$0xff]
        %v493 = vld [vmem:[%s395 + $0x10] sm:$0xff]
        %v494 = vld [vmem:[%s395 + $0x18] sm:$0xff]
        %v495 = vld [vmem:[%s395 + $0x20] sm:$0xff]
        %v496 = vld [vmem:[%s395 + $0x28] sm:$0xff]
        %v497 = vld [vmem:[%s395 + $0x30] sm:$0xff]
        %v498 = vld [vmem:[%s395 + $0x38] sm:$0xff]
        %v499 = vld [vmem:[%s395 + $0x40] sm:$0xff]
        %v500 = vld [vmem:[%s395 + $0x48] sm:$0xff]
        %v501 = vld [vmem:[%s395 + $0x50] sm:$0xff]
        %v502 = vld [vmem:[%s395 + $0x58] sm:$0xff]
        %v503 = vld [vmem:[%s395 + $0x60] sm:$0xff]
        %v504 = vld [vmem:[%s395 + $0x68] sm:$0xff]
        %v505 = vld [vmem:[%s395 + $0x70] sm:$0xff]
        %v506 = vld [vmem:[%s395 + $0x78] sm:$0xff]
        %v507 = vld [vmem:[%s395 + $0x80] sm:$0xff]
        %v508 = vld [vmem:[%s395 + $0x88] sm:$0xff]
        %v509 = vld [vmem:[%s395 + $0x90] sm:$0xff]
        %v510 = vld [vmem:[%s395 + $0x98] sm:$0xff]
        %v511 = vld [vmem:[%s395 + $0xa0] sm:$0xff]
        %v512 = vld [vmem:[%s395 + $0xa8] sm:$0xff]
        %v513 = vld [vmem:[%s395 + $0xb0] sm:$0xff]
        %v514 = vld [vmem:[%s395 + $0xb8] sm:$0xff]
        %v515 = vpack.c.bf16 %v492, %v491
        %v516 = vpack.c.bf16 %v494, %v493
        %v517 = vpack.c.bf16 %v496, %v495
        %v518 = vpack.c.bf16 %v498, %v497
        %v519 = vpack.c.bf16 %v500, %v499
        %v520 = vpack.c.bf16 %v502, %v501
        %v521 = vpack.c.bf16 %v504, %v503
        %v522 = vpack.c.bf16 %v506, %v505
        %v523 = vpack.c.bf16 %v508, %v507
        %v524 = vpack.c.bf16 %v510, %v509
        %v525 = vpack.c.bf16 %v512, %v511
        %v526 = vpack.c.bf16 %v514, %v513
        %v527 = vld [vmem:[#allocation7] sm:$0xf]
        %v528 = vld [vmem:[#allocation7 + $0x4] sm:$0xf]
        %v529 = vld [vmem:[#allocation7 + $0x8] sm:$0xf]
        %v530 = vld [vmem:[#allocation7 + $0xc] sm:$0xf]
        %v531 = vld [vmem:[#allocation7 + $0x10] sm:$0xf]
        %v532 = vld [vmem:[#allocation7 + $0x14] sm:$0xf]
        %v533 = vld [vmem:[#allocation7 + $0x18] sm:$0xf]
        %v534 = vld [vmem:[#allocation7 + $0x1c] sm:$0xf]
        %v535 = vld [vmem:[#allocation7 + $0x20] sm:$0xf]
        %v536 = vld [vmem:[#allocation7 + $0x24] sm:$0xf]
        %v537 = vld [vmem:[#allocation7 + $0x28] sm:$0xf]
        %v538 = vld [vmem:[#allocation7 + $0x2c] sm:$0xf]
        %v539 = vld [vmem:[#allocation7 + $0x30] sm:$0xf]
        %v540 = vld [vmem:[#allocation7 + $0x34] sm:$0xf]
        %v541 = vld [vmem:[#allocation7 + $0x38] sm:$0xf]
        %v542 = vld [vmem:[#allocation7 + $0x3c] sm:$0xf]
        %v543 = vld [vmem:[%s3] sm:$0x1]
        %v545 = vlaneseq
        %v546 = vshrl.u32 %v545, 7
        %v547 = vsub.s32 0, %v546
        %v548 = vrot.slane %v543, %v547
        %v566 = vunpack.c.l.b16 %v527
        %v567 = vunpack.c.l.b16 %v528
        %v568 = vunpack.c.l.b16 %v529
        %v569 = vunpack.c.l.b16 %v530
        %v570 = vunpack.c.l.b16 %v531
        %v571 = vunpack.c.l.b16 %v532
        %v572 = vunpack.c.l.b16 %v533
        %v573 = vunpack.c.l.b16 %v534
        %v574 = vunpack.c.l.b16 %v535
        %v575 = vunpack.c.l.b16 %v536
        %v576 = vunpack.c.l.b16 %v537
        %v577 = vunpack.c.l.b16 %v538
        %v578 = vunpack.c.l.b16 %v539
        %v579 = vunpack.c.l.b16 %v540
        %v580 = vunpack.c.l.b16 %v541
        %v581 = vunpack.c.l.b16 %v542
        %v582 = vpack.c.b16 %v567, %v566
        %v583 = vpack.c.b16 %v569, %v568
        %v584 = vpack.c.b16 %v571, %v570
        %v585 = vpack.c.b16 %v573, %v572
        %v586 = vpack.c.b16 %v575, %v574
        %v587 = vpack.c.b16 %v577, %v576
        %v588 = vpack.c.b16 %v579, %v578
        %v589 = vpack.c.b16 %v581, %v580
        %598 = vmatprep.subr.bf16.mxu0 0
        %599 = vmatpush1.bf16.msra.mxu0 %v589
        %600 = vmatprep.subr.bf16.mxu0 0
        %601 = vmatpush1.bf16.msra.mxu0 %v588
        %602 = vmatprep.subr.bf16.mxu0 0
        %603 = vmatpush1.bf16.msra.mxu0 %v587
        %604 = vmatprep.subr.bf16.mxu0 0
        %605 = vmatpush1.bf16.msra.mxu0 %v586
        %606 = vmatprep.subr.bf16.mxu0 0
        %607 = vmatpush1.bf16.msra.mxu0 %v585
        %608 = vmatprep.subr.bf16.mxu0 0
        %609 = vmatpush1.bf16.msra.mxu0 %v584
        %610 = vmatprep.subr.bf16.mxu0 0
        %611 = vmatpush1.bf16.msra.mxu0 %v583
        %612 = vmatprep.subr.bf16.mxu0 0
        %613 = vmatpush1.bf16.msra.mxu0 %v582
        %614 = vmatprep.subr.bf16.mxu0 0
        %615 = vmatpush2.bf16.msra.mxu0 0
        %616 = vmatprep.subr.bf16.mxu0 0
        %617 = vmatpush2.bf16.msra.mxu0 0
        %618 = vmatprep.subr.bf16.mxu0 0
        %619 = vmatpush2.bf16.msra.mxu0 0
        %620 = vmatprep.subr.bf16.mxu0 0
        %621 = vmatpush2.bf16.msra.mxu0 0
        %622 = vmatprep.subr.bf16.mxu0 0
        %623 = vmatpush2.bf16.msra.mxu0 0
        %624 = vmatprep.subr.bf16.mxu0 0
        %625 = vmatpush2.bf16.msra.mxu0 0
        %626 = vmatprep.subr.bf16.mxu0 0
        %627 = vmatpush2.bf16.msra.mxu0 0
        %628 = vmatprep.subr.bf16.mxu0 0
        %629 = vmatpush2.bf16.msra.mxu0 0
        %630 = vmatprep.mubr.bf16.mxu0 0
        %631 = vmatmul.mubr.bf16.gmra.mxu0 %v479
        %v632 = vpop.f32.mrf.mxu0
        %v633 = vadd.f32 %v548, %v632
        %v634 = vpop.f32.mrf.mxu0
        %v635 = vpop.f32.mrf.mxu0
        %v636 = vadd.f32 %v548, %v635
        %v637 = vpop.f32.mrf.mxu0
        %638 = vmatprep.mubr.bf16.mxu0 0
        %639 = vmatmul.mubr.bf16.gmra.mxu0 %v480
        %v640 = vpop.f32.mrf.mxu0
        %v641 = vadd.f32 %v548, %v640
        %v642 = vpop.f32.mrf.mxu0
        %v643 = vpop.f32.mrf.mxu0
        %v644 = vadd.f32 %v548, %v643
        %v645 = vpop.f32.mrf.mxu0
        %646 = vmatprep.mubr.bf16.mxu0 0
        %647 = vmatmul.mubr.bf16.gmra.mxu0 %v481
        %v648 = vpop.f32.mrf.mxu0
        %v649 = vadd.f32 %v548, %v648
        %v650 = vpop.f32.mrf.mxu0
        %v651 = vpop.f32.mrf.mxu0
        %v652 = vadd.f32 %v548, %v651
        %v653 = vpop.f32.mrf.mxu0
        %654 = vmatprep.mubr.bf16.mxu0 0
        %655 = vmatmul.mubr.bf16.gmra.mxu0 %v482
        %v656 = vpop.f32.mrf.mxu0
        %v657 = vadd.f32 %v548, %v656
        %v658 = vpop.f32.mrf.mxu0
        %v659 = vpop.f32.mrf.mxu0
        %v660 = vadd.f32 %v548, %v659
        %v661 = vpop.f32.mrf.mxu0
        %662 = vmatprep.mubr.bf16.mxu0 0
        %663 = vmatmul.mubr.bf16.gmra.mxu0 %v483
        %v664 = vpop.f32.mrf.mxu0
        %v665 = vadd.f32 %v548, %v664
        %v666 = vpop.f32.mrf.mxu0
        %v667 = vpop.f32.mrf.mxu0
        %v668 = vadd.f32 %v548, %v667
        %v669 = vpop.f32.mrf.mxu0
        %670 = vmatprep.mubr.bf16.mxu0 0
        %671 = vmatmul.mubr.bf16.gmra.mxu0 %v484
        %v672 = vpop.f32.mrf.mxu0
        %v673 = vadd.f32 %v548, %v672
        %v674 = vpop.f32.mrf.mxu0
        %v675 = vpop.f32.mrf.mxu0
        %v676 = vadd.f32 %v548, %v675
        %v677 = vpop.f32.mrf.mxu0
        %678 = vmatprep.mubr.bf16.mxu0 0
        %679 = vmatmul.mubr.bf16.gmra.mxu0 %v485
        %v680 = vpop.f32.mrf.mxu0
        %v681 = vadd.f32 %v548, %v680
        %v682 = vpop.f32.mrf.mxu0
        %v683 = vpop.f32.mrf.mxu0
        %v684 = vadd.f32 %v548, %v683
        %v685 = vpop.f32.mrf.mxu0
        %686 = vmatprep.mubr.bf16.mxu0 0
        %687 = vmatmul.mubr.bf16.gmra.mxu0 %v486
        %v688 = vpop.f32.mrf.mxu0
        %v689 = vadd.f32 %v548, %v688
        %v690 = vpop.f32.mrf.mxu0
        %v691 = vpop.f32.mrf.mxu0
        %v692 = vadd.f32 %v548, %v691
        %v693 = vpop.f32.mrf.mxu0
        %694 = vmatprep.mubr.bf16.mxu0 0
        %695 = vmatmul.mubr.bf16.gmra.mxu0 %v487
        %v696 = vpop.f32.mrf.mxu0
        %v697 = vadd.f32 %v548, %v696
        %v698 = vpop.f32.mrf.mxu0
        %v699 = vpop.f32.mrf.mxu0
        %v700 = vadd.f32 %v548, %v699
        %v701 = vpop.f32.mrf.mxu0
        %702 = vmatprep.mubr.bf16.mxu0 0
        %703 = vmatmul.mubr.bf16.gmra.mxu0 %v488
        %v704 = vpop.f32.mrf.mxu0
        %v705 = vadd.f32 %v548, %v704
        %v706 = vpop.f32.mrf.mxu0
        %v707 = vpop.f32.mrf.mxu0
        %v708 = vadd.f32 %v548, %v707
        %v709 = vpop.f32.mrf.mxu0
        %710 = vmatprep.mubr.bf16.mxu0 0
        %711 = vmatmul.mubr.bf16.gmra.mxu0 %v489
        %v712 = vpop.f32.mrf.mxu0
        %v713 = vadd.f32 %v548, %v712
        %v714 = vpop.f32.mrf.mxu0
        %v715 = vpop.f32.mrf.mxu0
        %v716 = vadd.f32 %v548, %v715
        %v717 = vpop.f32.mrf.mxu0
        %718 = vmatprep.mubr.bf16.mxu0 0
        %719 = vmatmul.mubr.bf16.gmra.mxu0 %v490
        %v720 = vpop.f32.mrf.mxu0
        %v721 = vadd.f32 %v548, %v720
        %v722 = vpop.f32.mrf.mxu0
        %v723 = vpop.f32.mrf.mxu0
        %v724 = vadd.f32 %v548, %v723
        %v725 = vpop.f32.mrf.mxu0
        %726 = vdwg.mxu0
        %v727 = vpack.c.bf16 %v636, %v633
        %v728 = vpack.c.bf16 %v644, %v641
        %v729 = vpack.c.bf16 %v652, %v649
        %v730 = vpack.c.bf16 %v660, %v657
        %v731 = vpack.c.bf16 %v668, %v665
        %v732 = vpack.c.bf16 %v676, %v673
        %v733 = vpack.c.bf16 %v684, %v681
        %v734 = vpack.c.bf16 %v692, %v689
        %v735 = vpack.c.bf16 %v700, %v697
        %v736 = vpack.c.bf16 %v708, %v705
        %v737 = vpack.c.bf16 %v716, %v713
        %v738 = vpack.c.bf16 %v724, %v721
        %v739 = vld [vmem:[#allocation8] sm:$0xff]
        %v740 = vld [vmem:[#allocation8 + $0x8] sm:$0xff]
        %v741 = vld [vmem:[#allocation8 + $0x10] sm:$0xff]
        %v742 = vld [vmem:[#allocation8 + $0x18] sm:$0xff]
        %v743 = vld [vmem:[#allocation8 + $0x20] sm:$0xff]
        %v744 = vld [vmem:[#allocation8 + $0x28] sm:$0xff]
        %v745 = vld [vmem:[#allocation8 + $0x30] sm:$0xff]
        %v746 = vld [vmem:[#allocation8 + $0x38] sm:$0xff]
        %v747 = vld [vmem:[#allocation8 + $0x40] sm:$0xff]
        %v748 = vld [vmem:[#allocation8 + $0x48] sm:$0xff]
        %v749 = vld [vmem:[#allocation8 + $0x50] sm:$0xff]
        %v750 = vld [vmem:[#allocation8 + $0x58] sm:$0xff]
        %v751 = vld [vmem:[#allocation8 + $0x60] sm:$0xff]
        %v752 = vld [vmem:[#allocation8 + $0x68] sm:$0xff]
        %v753 = vld [vmem:[#allocation8 + $0x70] sm:$0xff]
        %v754 = vld [vmem:[#allocation8 + $0x78] sm:$0xff]
        %v755 = vld [vmem:[%s5] sm:$0x3]
        %v757 = vlaneseq
        %v758 = vshrl.u32 %v757, 7
        %v759 = vsub.s32 0, %v758
        %v760 = vrot.slane %v755, %v759
        %v761 = vlaneseq
        %v762 = vshrl.u32 %v761, 7
        %v763 = vsub.s32 1, %v762
        %v764 = vrot.slane %v755, %v763
        %v783 = vunpack.c.l.b16 %v739
        %v784 = vunpack.c.h.b16 %v739
        %v785 = vunpack.c.l.b16 %v740
        %v786 = vunpack.c.h.b16 %v740
        %v787 = vunpack.c.l.b16 %v741
        %v788 = vunpack.c.h.b16 %v741
        %v789 = vunpack.c.l.b16 %v742
        %v790 = vunpack.c.h.b16 %v742
        %v791 = vunpack.c.l.b16 %v743
        %v792 = vunpack.c.h.b16 %v743
        %v793 = vunpack.c.l.b16 %v744
        %v794 = vunpack.c.h.b16 %v744
        %v795 = vunpack.c.l.b16 %v745
        %v796 = vunpack.c.h.b16 %v745
        %v797 = vunpack.c.l.b16 %v746
        %v798 = vunpack.c.h.b16 %v746
        %v799 = vunpack.c.l.b16 %v747
        %v800 = vunpack.c.h.b16 %v747
        %v801 = vunpack.c.l.b16 %v748
        %v802 = vunpack.c.h.b16 %v748
        %v803 = vunpack.c.l.b16 %v749
        %v804 = vunpack.c.h.b16 %v749
        %v805 = vunpack.c.l.b16 %v750
        %v806 = vunpack.c.h.b16 %v750
        %v807 = vunpack.c.l.b16 %v751
        %v808 = vunpack.c.h.b16 %v751
        %v809 = vunpack.c.l.b16 %v752
        %v810 = vunpack.c.h.b16 %v752
        %v811 = vunpack.c.l.b16 %v753
        %v812 = vunpack.c.h.b16 %v753
        %v813 = vunpack.c.l.b16 %v754
        %v814 = vunpack.c.h.b16 %v754
        %v815 = vpack.c.b16 %v785, %v783
        %v816 = vpack.c.b16 %v786, %v784
        %v817 = vpack.c.b16 %v789, %v787
        %v818 = vpack.c.b16 %v790, %v788
        %v819 = vpack.c.b16 %v793, %v791
        %v820 = vpack.c.b16 %v794, %v792
        %v821 = vpack.c.b16 %v797, %v795
        %v822 = vpack.c.b16 %v798, %v796
        %v823 = vpack.c.b16 %v801, %v799
        %v824 = vpack.c.b16 %v802, %v800
        %v825 = vpack.c.b16 %v805, %v803
        %v826 = vpack.c.b16 %v806, %v804
        %v827 = vpack.c.b16 %v809, %v807
        %v828 = vpack.c.b16 %v810, %v808
        %v829 = vpack.c.b16 %v813, %v811
        %v830 = vpack.c.b16 %v814, %v812
        %847 = vmatprep.subr.bf16.mxu0 %v830
        %848 = vmatpush1.bf16.msra.mxu0 %v829
        %849 = vmatprep.subr.bf16.mxu0 %v828
        %850 = vmatpush1.bf16.msra.mxu0 %v827
        %851 = vmatprep.subr.bf16.mxu0 %v826
        %852 = vmatpush1.bf16.msra.mxu0 %v825
        %853 = vmatprep.subr.bf16.mxu0 %v824
        %854 = vmatpush1.bf16.msra.mxu0 %v823
        %855 = vmatprep.subr.bf16.mxu0 %v822
        %856 = vmatpush1.bf16.msra.mxu0 %v821
        %857 = vmatprep.subr.bf16.mxu0 %v820
        %858 = vmatpush1.bf16.msra.mxu0 %v819
        %859 = vmatprep.subr.bf16.mxu0 %v818
        %860 = vmatpush1.bf16.msra.mxu0 %v817
        %861 = vmatprep.subr.bf16.mxu0 %v816
        %862 = vmatpush1.bf16.msra.mxu0 %v815
        %863 = vmatprep.subr.bf16.mxu0 0
        %864 = vmatpush2.bf16.msra.mxu0 0
        %865 = vmatprep.subr.bf16.mxu0 0
        %866 = vmatpush2.bf16.msra.mxu0 0
        %867 = vmatprep.subr.bf16.mxu0 0
        %868 = vmatpush2.bf16.msra.mxu0 0
        %869 = vmatprep.subr.bf16.mxu0 0
        %870 = vmatpush2.bf16.msra.mxu0 0
        %871 = vmatprep.subr.bf16.mxu0 0
        %872 = vmatpush2.bf16.msra.mxu0 0
        %873 = vmatprep.subr.bf16.mxu0 0
        %874 = vmatpush2.bf16.msra.mxu0 0
        %875 = vmatprep.subr.bf16.mxu0 0
        %876 = vmatpush2.bf16.msra.mxu0 0
        %877 = vmatprep.subr.bf16.mxu0 0
        %878 = vmatpush2.bf16.msra.mxu0 0
        %879 = vmatprep.mubr.bf16.mxu0 0
        %880 = vmatmul.mubr.bf16.gmra.mxu0 %v515
        %v881 = vpop.f32.mrf.mxu0
        %v882 = vadd.f32 %v760, %v881
        %v883 = vpop.f32.mrf.mxu0
        %v884 = vadd.f32 %v764, %v883
        %v885 = vpop.f32.mrf.mxu0
        %v886 = vadd.f32 %v760, %v885
        %v887 = vpop.f32.mrf.mxu0
        %v888 = vadd.f32 %v764, %v887
        %889 = vmatprep.mubr.bf16.mxu0 0
        %890 = vmatmul.mubr.bf16.gmra.mxu0 %v516
        %v891 = vpop.f32.mrf.mxu0
        %v892 = vadd.f32 %v760, %v891
        %v893 = vpop.f32.mrf.mxu0
        %v894 = vadd.f32 %v764, %v893
        %v895 = vpop.f32.mrf.mxu0
        %v896 = vadd.f32 %v760, %v895
        %v897 = vpop.f32.mrf.mxu0
        %v898 = vadd.f32 %v764, %v897
        %899 = vmatprep.mubr.bf16.mxu0 0
        %900 = vmatmul.mubr.bf16.gmra.mxu0 %v517
        %v901 = vpop.f32.mrf.mxu0
        %v902 = vadd.f32 %v760, %v901
        %v903 = vpop.f32.mrf.mxu0
        %v904 = vadd.f32 %v764, %v903
        %v905 = vpop.f32.mrf.mxu0
        %v906 = vadd.f32 %v760, %v905
        %v907 = vpop.f32.mrf.mxu0
        %v908 = vadd.f32 %v764, %v907
        %909 = vmatprep.mubr.bf16.mxu0 0
        %910 = vmatmul.mubr.bf16.gmra.mxu0 %v518
        %v911 = vpop.f32.mrf.mxu0
        %v912 = vadd.f32 %v760, %v911
        %v913 = vpop.f32.mrf.mxu0
        %v914 = vadd.f32 %v764, %v913
        %v915 = vpop.f32.mrf.mxu0
        %v916 = vadd.f32 %v760, %v915
        %v917 = vpop.f32.mrf.mxu0
        %v918 = vadd.f32 %v764, %v917
        %919 = vmatprep.mubr.bf16.mxu0 0
        %920 = vmatmul.mubr.bf16.gmra.mxu0 %v519
        %v921 = vpop.f32.mrf.mxu0
        %v922 = vadd.f32 %v760, %v921
        %v923 = vpop.f32.mrf.mxu0
        %v924 = vadd.f32 %v764, %v923
        %v925 = vpop.f32.mrf.mxu0
        %v926 = vadd.f32 %v760, %v925
        %v927 = vpop.f32.mrf.mxu0
        %v928 = vadd.f32 %v764, %v927
        %929 = vmatprep.mubr.bf16.mxu0 0
        %930 = vmatmul.mubr.bf16.gmra.mxu0 %v520
        %v931 = vpop.f32.mrf.mxu0
        %v932 = vadd.f32 %v760, %v931
        %v933 = vpop.f32.mrf.mxu0
        %v934 = vadd.f32 %v764, %v933
        %v935 = vpop.f32.mrf.mxu0
        %v936 = vadd.f32 %v760, %v935
        %v937 = vpop.f32.mrf.mxu0
        %v938 = vadd.f32 %v764, %v937
        %939 = vmatprep.mubr.bf16.mxu0 0
        %940 = vmatmul.mubr.bf16.gmra.mxu0 %v521
        %v941 = vpop.f32.mrf.mxu0
        %v942 = vadd.f32 %v760, %v941
        %v943 = vpop.f32.mrf.mxu0
        %v944 = vadd.f32 %v764, %v943
        %v945 = vpop.f32.mrf.mxu0
        %v946 = vadd.f32 %v760, %v945
        %v947 = vpop.f32.mrf.mxu0
        %v948 = vadd.f32 %v764, %v947
        %949 = vmatprep.mubr.bf16.mxu0 0
        %950 = vmatmul.mubr.bf16.gmra.mxu0 %v522
        %v951 = vpop.f32.mrf.mxu0
        %v952 = vadd.f32 %v760, %v951
        %v953 = vpop.f32.mrf.mxu0
        %v954 = vadd.f32 %v764, %v953
        %v955 = vpop.f32.mrf.mxu0
        %v956 = vadd.f32 %v760, %v955
        %v957 = vpop.f32.mrf.mxu0
        %v958 = vadd.f32 %v764, %v957
        %959 = vmatprep.mubr.bf16.mxu0 0
        %960 = vmatmul.mubr.bf16.gmra.mxu0 %v523
        %v961 = vpop.f32.mrf.mxu0
        %v962 = vadd.f32 %v760, %v961
        %v963 = vpop.f32.mrf.mxu0
        %v964 = vadd.f32 %v764, %v963
        %v965 = vpop.f32.mrf.mxu0
        %v966 = vadd.f32 %v760, %v965
        %v967 = vpop.f32.mrf.mxu0
        %v968 = vadd.f32 %v764, %v967
        %969 = vmatprep.mubr.bf16.mxu0 0
        %970 = vmatmul.mubr.bf16.gmra.mxu0 %v524
        %v971 = vpop.f32.mrf.mxu0
        %v972 = vadd.f32 %v760, %v971
        %v973 = vpop.f32.mrf.mxu0
        %v974 = vadd.f32 %v764, %v973
        %v975 = vpop.f32.mrf.mxu0
        %v976 = vadd.f32 %v760, %v975
        %v977 = vpop.f32.mrf.mxu0
        %v978 = vadd.f32 %v764, %v977
        %979 = vmatprep.mubr.bf16.mxu0 0
        %980 = vmatmul.mubr.bf16.gmra.mxu0 %v525
        %v981 = vpop.f32.mrf.mxu0
        %v982 = vadd.f32 %v760, %v981
        %v983 = vpop.f32.mrf.mxu0
        %v984 = vadd.f32 %v764, %v983
        %v985 = vpop.f32.mrf.mxu0
        %v986 = vadd.f32 %v760, %v985
        %v987 = vpop.f32.mrf.mxu0
        %v988 = vadd.f32 %v764, %v987
        %989 = vmatprep.mubr.bf16.mxu0 0
        %990 = vmatmul.mubr.bf16.gmra.mxu0 %v526
        %v991 = vpop.f32.mrf.mxu0
        %v992 = vadd.f32 %v760, %v991
        %v993 = vpop.f32.mrf.mxu0
        %v994 = vadd.f32 %v764, %v993
        %v995 = vpop.f32.mrf.mxu0
        %v996 = vadd.f32 %v760, %v995
        %v997 = vpop.f32.mrf.mxu0
        %v998 = vadd.f32 %v764, %v997
        %999 = vdwg.mxu0
        %v1000 = vpack.c.bf16 %v886, %v882
        %v1001 = vpack.c.bf16 %v888, %v884
        %v1002 = vpack.c.bf16 %v896, %v892
        %v1003 = vpack.c.bf16 %v898, %v894
        %v1004 = vpack.c.bf16 %v906, %v902
        %v1005 = vpack.c.bf16 %v908, %v904
        %v1006 = vpack.c.bf16 %v916, %v912
        %v1007 = vpack.c.bf16 %v918, %v914
        %v1008 = vpack.c.bf16 %v926, %v922
        %v1009 = vpack.c.bf16 %v928, %v924
        %v1010 = vpack.c.bf16 %v936, %v932
        %v1011 = vpack.c.bf16 %v938, %v934
        %v1012 = vpack.c.bf16 %v946, %v942
        %v1013 = vpack.c.bf16 %v948, %v944
        %v1014 = vpack.c.bf16 %v956, %v952
        %v1015 = vpack.c.bf16 %v958, %v954
        %v1016 = vpack.c.bf16 %v966, %v962
        %v1017 = vpack.c.bf16 %v968, %v964
        %v1018 = vpack.c.bf16 %v976, %v972
        %v1019 = vpack.c.bf16 %v978, %v974
        %v1020 = vpack.c.bf16 %v986, %v982
        %v1021 = vpack.c.bf16 %v988, %v984
        %v1022 = vpack.c.bf16 %v996, %v992
        %v1023 = vpack.c.bf16 %v998, %v994
        %1036 = vrot.lane.b32.xlu0 %v727, 96
        %v1037 = vpop.permute.xlu0 %1036
        %1038 = vrot.lane.b32.xlu0 %v728, 96
        %v1039 = vpop.permute.xlu0 %1038
        %1040 = vrot.lane.b32.xlu0 %v729, 96
        %v1041 = vpop.permute.xlu0 %1040
        %1042 = vrot.lane.b32.xlu0 %v730, 96
        %v1043 = vpop.permute.xlu0 %1042
        %1044 = vrot.lane.b32.xlu0 %v731, 96
        %v1045 = vpop.permute.xlu0 %1044
        %1046 = vrot.lane.b32.xlu0 %v732, 96
        %v1047 = vpop.permute.xlu0 %1046
        %1048 = vrot.lane.b32.xlu0 %v733, 96
        %v1049 = vpop.permute.xlu0 %1048
        %1050 = vrot.lane.b32.xlu0 %v734, 96
        %v1051 = vpop.permute.xlu0 %1050
        %1052 = vrot.lane.b32.xlu0 %v735, 96
        %v1053 = vpop.permute.xlu0 %1052
        %1054 = vrot.lane.b32.xlu0 %v736, 96
        %v1055 = vpop.permute.xlu0 %1054
        %1056 = vrot.lane.b32.xlu0 %v737, 96
        %v1057 = vpop.permute.xlu0 %1056
        %1058 = vrot.lane.b32.xlu0 %v738, 96
        %v1059 = vpop.permute.xlu0 %1058
        %1060 = vrot.lane.b32.xlu0 %v727, 64
        %v1061 = vpop.permute.xlu0 %1060
        %1062 = vrot.lane.b32.xlu0 %v728, 64
        %v1063 = vpop.permute.xlu0 %1062
        %1064 = vrot.lane.b32.xlu0 %v729, 64
        %v1065 = vpop.permute.xlu0 %1064
        %1066 = vrot.lane.b32.xlu0 %v730, 64
        %v1067 = vpop.permute.xlu0 %1066
        %1068 = vrot.lane.b32.xlu0 %v731, 64
        %v1069 = vpop.permute.xlu0 %1068
        %1070 = vrot.lane.b32.xlu0 %v732, 64
        %v1071 = vpop.permute.xlu0 %1070
        %1072 = vrot.lane.b32.xlu0 %v733, 64
        %v1073 = vpop.permute.xlu0 %1072
        %1074 = vrot.lane.b32.xlu0 %v734, 64
        %v1075 = vpop.permute.xlu0 %1074
        %1076 = vrot.lane.b32.xlu0 %v735, 64
        %v1077 = vpop.permute.xlu0 %1076
        %1078 = vrot.lane.b32.xlu0 %v736, 64
        %v1079 = vpop.permute.xlu0 %1078
        %1080 = vrot.lane.b32.xlu0 %v737, 64
        %v1081 = vpop.permute.xlu0 %1080
        %1082 = vrot.lane.b32.xlu0 %v738, 64
        %v1083 = vpop.permute.xlu0 %1082
        %1084 = vrot.lane.b32.xlu0 %v727, 32
        %v1085 = vpop.permute.xlu0 %1084
        %1086 = vrot.lane.b32.xlu0 %v728, 32
        %v1087 = vpop.permute.xlu0 %1086
        %1088 = vrot.lane.b32.xlu0 %v729, 32
        %v1089 = vpop.permute.xlu0 %1088
        %1090 = vrot.lane.b32.xlu0 %v730, 32
        %v1091 = vpop.permute.xlu0 %1090
        %1092 = vrot.lane.b32.xlu0 %v731, 32
        %v1093 = vpop.permute.xlu0 %1092
        %1094 = vrot.lane.b32.xlu0 %v732, 32
        %v1095 = vpop.permute.xlu0 %1094
        %1096 = vrot.lane.b32.xlu0 %v733, 32
        %v1097 = vpop.permute.xlu0 %1096
        %1098 = vrot.lane.b32.xlu0 %v734, 32
        %v1099 = vpop.permute.xlu0 %1098
        %1100 = vrot.lane.b32.xlu0 %v735, 32
        %v1101 = vpop.permute.xlu0 %1100
        %1102 = vrot.lane.b32.xlu0 %v736, 32
        %v1103 = vpop.permute.xlu0 %1102
        %1104 = vrot.lane.b32.xlu0 %v737, 32
        %v1105 = vpop.permute.xlu0 %1104
        %1106 = vrot.lane.b32.xlu0 %v738, 32
        %v1107 = vpop.permute.xlu0 %1106
        %1120 = vrot.lane.b32.xlu0 %v1000, 96
        %v1121 = vpop.permute.xlu0 %1120
        %1122 = vrot.lane.b32.xlu0 %v1002, 96
        %v1123 = vpop.permute.xlu0 %1122
        %1124 = vrot.lane.b32.xlu0 %v1004, 96
        %v1125 = vpop.permute.xlu0 %1124
        %1126 = vrot.lane.b32.xlu0 %v1006, 96
        %v1127 = vpop.permute.xlu0 %1126
        %1128 = vrot.lane.b32.xlu0 %v1008, 96
        %v1129 = vpop.permute.xlu0 %1128
        %1130 = vrot.lane.b32.xlu0 %v1010, 96
        %v1131 = vpop.permute.xlu0 %1130
        %1132 = vrot.lane.b32.xlu0 %v1012, 96
        %v1133 = vpop.permute.xlu0 %1132
        %1134 = vrot.lane.b32.xlu0 %v1014, 96
        %v1135 = vpop.permute.xlu0 %1134
        %1136 = vrot.lane.b32.xlu0 %v1016, 96
        %v1137 = vpop.permute.xlu0 %1136
        %1138 = vrot.lane.b32.xlu0 %v1018, 96
        %v1139 = vpop.permute.xlu0 %1138
        %1140 = vrot.lane.b32.xlu0 %v1020, 96
        %v1141 = vpop.permute.xlu0 %1140
        %1142 = vrot.lane.b32.xlu0 %v1022, 96
        %v1143 = vpop.permute.xlu0 %1142
        %1144 = vrot.lane.b32.xlu0 %v1000, 64
        %v1145 = vpop.permute.xlu0 %1144
        %1146 = vrot.lane.b32.xlu0 %v1002, 64
        %v1147 = vpop.permute.xlu0 %1146
        %1148 = vrot.lane.b32.xlu0 %v1004, 64
        %v1149 = vpop.permute.xlu0 %1148
        %1150 = vrot.lane.b32.xlu0 %v1006, 64
        %v1151 = vpop.permute.xlu0 %1150
        %1152 = vrot.lane.b32.xlu0 %v1008, 64
        %v1153 = vpop.permute.xlu0 %1152
        %1154 = vrot.lane.b32.xlu0 %v1010, 64
        %v1155 = vpop.permute.xlu0 %1154
        %1156 = vrot.lane.b32.xlu0 %v1012, 64
        %v1157 = vpop.permute.xlu0 %1156
        %1158 = vrot.lane.b32.xlu0 %v1014, 64
        %v1159 = vpop.permute.xlu0 %1158
        %1160 = vrot.lane.b32.xlu0 %v1016, 64
        %v1161 = vpop.permute.xlu0 %1160
        %1162 = vrot.lane.b32.xlu0 %v1018, 64
        %v1163 = vpop.permute.xlu0 %1162
        %1164 = vrot.lane.b32.xlu0 %v1020, 64
        %v1165 = vpop.permute.xlu0 %1164
        %1166 = vrot.lane.b32.xlu0 %v1022, 64
        %v1167 = vpop.permute.xlu0 %1166
        %1168 = vrot.lane.b32.xlu0 %v1000, 32
        %v1169 = vpop.permute.xlu0 %1168
        %1170 = vrot.lane.b32.xlu0 %v1002, 32
        %v1171 = vpop.permute.xlu0 %1170
        %1172 = vrot.lane.b32.xlu0 %v1004, 32
        %v1173 = vpop.permute.xlu0 %1172
        %1174 = vrot.lane.b32.xlu0 %v1006, 32
        %v1175 = vpop.permute.xlu0 %1174
        %1176 = vrot.lane.b32.xlu0 %v1008, 32
        %v1177 = vpop.permute.xlu0 %1176
        %1178 = vrot.lane.b32.xlu0 %v1010, 32
        %v1179 = vpop.permute.xlu0 %1178
        %1180 = vrot.lane.b32.xlu0 %v1012, 32
        %v1181 = vpop.permute.xlu0 %1180
        %1182 = vrot.lane.b32.xlu0 %v1014, 32
        %v1183 = vpop.permute.xlu0 %1182
        %1184 = vrot.lane.b32.xlu0 %v1016, 32
        %v1185 = vpop.permute.xlu0 %1184
        %1186 = vrot.lane.b32.xlu0 %v1018, 32
        %v1187 = vpop.permute.xlu0 %1186
        %1188 = vrot.lane.b32.xlu0 %v1020, 32
        %v1189 = vpop.permute.xlu0 %1188
        %1190 = vrot.lane.b32.xlu0 %v1022, 32
        %v1191 = vpop.permute.xlu0 %1190
        %1204 = vrot.lane.b32.xlu0 %v1001, 96
        %v1205 = vpop.permute.xlu0 %1204
        %1206 = vrot.lane.b32.xlu0 %v1003, 96
        %v1207 = vpop.permute.xlu0 %1206
        %1208 = vrot.lane.b32.xlu0 %v1005, 96
        %v1209 = vpop.permute.xlu0 %1208
        %1210 = vrot.lane.b32.xlu0 %v1007, 96
        %v1211 = vpop.permute.xlu0 %1210
        %1212 = vrot.lane.b32.xlu0 %v1009, 96
        %v1213 = vpop.permute.xlu0 %1212
        %1214 = vrot.lane.b32.xlu0 %v1011, 96
        %v1215 = vpop.permute.xlu0 %1214
        %1216 = vrot.lane.b32.xlu0 %v1013, 96
        %v1217 = vpop.permute.xlu0 %1216
        %1218 = vrot.lane.b32.xlu0 %v1015, 96
        %v1219 = vpop.permute.xlu0 %1218
        %1220 = vrot.lane.b32.xlu0 %v1017, 96
        %v1221 = vpop.permute.xlu0 %1220
        %1222 = vrot.lane.b32.xlu0 %v1019, 96
        %v1223 = vpop.permute.xlu0 %1222
        %1224 = vrot.lane.b32.xlu0 %v1021, 96
        %v1225 = vpop.permute.xlu0 %1224
        %1226 = vrot.lane.b32.xlu0 %v1023, 96
        %v1227 = vpop.permute.xlu0 %1226
        %1240 = vrot.lane.b32.xlu0 %v1001, 64
        %v1241 = vpop.permute.xlu0 %1240
        %1242 = vrot.lane.b32.xlu0 %v1003, 64
        %v1243 = vpop.permute.xlu0 %1242
        %1244 = vrot.lane.b32.xlu0 %v1005, 64
        %v1245 = vpop.permute.xlu0 %1244
        %1246 = vrot.lane.b32.xlu0 %v1007, 64
        %v1247 = vpop.permute.xlu0 %1246
        %1248 = vrot.lane.b32.xlu0 %v1009, 64
        %v1249 = vpop.permute.xlu0 %1248
        %1250 = vrot.lane.b32.xlu0 %v1011, 64
        %v1251 = vpop.permute.xlu0 %1250
        %1252 = vrot.lane.b32.xlu0 %v1013, 64
        %v1253 = vpop.permute.xlu0 %1252
        %1254 = vrot.lane.b32.xlu0 %v1015, 64
        %v1255 = vpop.permute.xlu0 %1254
        %1256 = vrot.lane.b32.xlu0 %v1017, 64
        %v1257 = vpop.permute.xlu0 %1256
        %1258 = vrot.lane.b32.xlu0 %v1019, 64
        %v1259 = vpop.permute.xlu0 %1258
        %1260 = vrot.lane.b32.xlu0 %v1021, 64
        %v1261 = vpop.permute.xlu0 %1260
        %1262 = vrot.lane.b32.xlu0 %v1023, 64
        %v1263 = vpop.permute.xlu0 %1262
        %1276 = vrot.lane.b32.xlu0 %v1001, 32
        %v1277 = vpop.permute.xlu0 %1276
        %1278 = vrot.lane.b32.xlu0 %v1003, 32
        %v1279 = vpop.permute.xlu0 %1278
        %1280 = vrot.lane.b32.xlu0 %v1005, 32
        %v1281 = vpop.permute.xlu0 %1280
        %1282 = vrot.lane.b32.xlu0 %v1007, 32
        %v1283 = vpop.permute.xlu0 %1282
        %1284 = vrot.lane.b32.xlu0 %v1009, 32
        %v1285 = vpop.permute.xlu0 %1284
        %1286 = vrot.lane.b32.xlu0 %v1011, 32
        %v1287 = vpop.permute.xlu0 %1286
        %1288 = vrot.lane.b32.xlu0 %v1013, 32
        %v1289 = vpop.permute.xlu0 %1288
        %1290 = vrot.lane.b32.xlu0 %v1015, 32
        %v1291 = vpop.permute.xlu0 %1290
        %1292 = vrot.lane.b32.xlu0 %v1017, 32
        %v1293 = vpop.permute.xlu0 %1292
        %1294 = vrot.lane.b32.xlu0 %v1019, 32
        %v1295 = vpop.permute.xlu0 %1294
        %1296 = vrot.lane.b32.xlu0 %v1021, 32
        %v1297 = vpop.permute.xlu0 %1296
        %1298 = vrot.lane.b32.xlu0 %v1023, 32
        %v1299 = vpop.permute.xlu0 %1298
        %vm1312 = vcmask 261120
        %v1314 = vsel %vm1312, %v727, 0
        %v1317 = vsel %vm1312, %v728, 0
        %v1320 = vsel %vm1312, %v729, 0
        %v1323 = vsel %vm1312, %v730, 0
        %v1326 = vsel %vm1312, %v1000, 0
        %v1329 = vsel %vm1312, %v1002, 0
        %v1332 = vsel %vm1312, %v1004, 0
        %v1335 = vsel %vm1312, %v1006, 0
        %1337 = vmatprep.subr.bf16.mxu0 0
        %1338 = vmatpush1.bf16.xpose.msra.mxu0 0
        %1339 = vmatprep.subr.bf16.mxu0 0
        %1340 = vmatpush1.bf16.xpose.msra.mxu0 0
        %1341 = vmatprep.subr.bf16.mxu0 0
        %1342 = vmatpush1.bf16.xpose.msra.mxu0 0
        %1343 = vmatprep.subr.bf16.mxu0 0
        %1344 = vmatpush1.bf16.xpose.msra.mxu0 0
        %1345 = vmatprep.subr.bf16.mxu0 0
        %1346 = vmatpush1.bf16.xpose.msra.mxu0 %v1335
        %1347 = vmatprep.subr.bf16.mxu0 0
        %1348 = vmatpush1.bf16.xpose.msra.mxu0 %v1332
        %1349 = vmatprep.subr.bf16.mxu0 0
        %1350 = vmatpush1.bf16.xpose.msra.mxu0 %v1329
        %1351 = vmatprep.subr.bf16.mxu0 0
        %1352 = vmatpush1.bf16.xpose.msra.mxu0 %v1326
        %1353 = vmatprep.subr.bf16.mxu0 0
        %1354 = vmatpush2.bf16.xpose.msra.mxu0 0
        %1355 = vmatprep.subr.bf16.mxu0 0
        %1356 = vmatpush2.bf16.xpose.msra.mxu0 0
        %1357 = vmatprep.subr.bf16.mxu0 0
        %1358 = vmatpush2.bf16.xpose.msra.mxu0 0
        %1359 = vmatprep.subr.bf16.mxu0 0
        %1360 = vmatpush2.bf16.xpose.msra.mxu0 0
        %1361 = vmatprep.subr.bf16.mxu0 0
        %1362 = vmatpush2.bf16.xpose.msra.mxu0 0
        %1363 = vmatprep.subr.bf16.mxu0 0
        %1364 = vmatpush2.bf16.xpose.msra.mxu0 0
        %1365 = vmatprep.subr.bf16.mxu0 0
        %1366 = vmatpush2.bf16.xpose.msra.mxu0 0
        %1367 = vmatprep.subr.bf16.mxu0 0
        %1368 = vmatpush2.bf16.xpose.msra.mxu0 0
        %1369 = vmatprep.mubr.bf16.mxu0 0
        %1370 = vmatmul.mubr.bf16.gmra.mxu0 %v1314
        %v1371 = vpop.f32.mrf.mxu0
        %v1372 = vadd.f32 0.0, %v1371
        %v1373 = vpop.f32.mrf.mxu0
        %v1374 = vpop.f32.mrf.mxu0
        %v1375 = vadd.f32 0.0, %v1374
        %v1376 = vpop.f32.mrf.mxu0
        %1377 = vmatprep.mubr.bf16.mxu0 0
        %1378 = vmatmul.mubr.bf16.gmra.mxu0 %v1317
        %v1379 = vpop.f32.mrf.mxu0
        %v1380 = vadd.f32 0.0, %v1379
        %v1381 = vpop.f32.mrf.mxu0
        %v1382 = vpop.f32.mrf.mxu0
        %v1383 = vadd.f32 0.0, %v1382
        %v1384 = vpop.f32.mrf.mxu0
        %1385 = vmatprep.mubr.bf16.mxu0 0
        %1386 = vmatmul.mubr.bf16.gmra.mxu0 %v1320
        %v1387 = vpop.f32.mrf.mxu0
        %v1388 = vadd.f32 0.0, %v1387
        %v1389 = vpop.f32.mrf.mxu0
        %v1390 = vpop.f32.mrf.mxu0
        %v1391 = vadd.f32 0.0, %v1390
        %v1392 = vpop.f32.mrf.mxu0
        %1393 = vmatprep.mubr.bf16.mxu0 0
        %1394 = vmatmul.mubr.bf16.gmra.mxu0 %v1323
        %v1395 = vpop.f32.mrf.mxu0
        %v1396 = vadd.f32 0.0, %v1395
        %v1397 = vpop.f32.mrf.mxu0
        %v1398 = vpop.f32.mrf.mxu0
        %v1399 = vadd.f32 0.0, %v1398
        %v1400 = vpop.f32.mrf.mxu0
        %1401 = vdwg.mxu0
        %v1403 = vsel %vm1312, %v731, 0
        %v1406 = vsel %vm1312, %v732, 0
        %v1409 = vsel %vm1312, %v733, 0
        %v1412 = vsel %vm1312, %v734, 0
        %v1415 = vsel %vm1312, %v1008, 0
        %v1418 = vsel %vm1312, %v1010, 0
        %v1421 = vsel %vm1312, %v1012, 0
        %v1424 = vsel %vm1312, %v1014, 0
        %1426 = vmatprep.subr.bf16.mxu0 0
        %1427 = vmatpush1.bf16.xpose.msra.mxu0 0
        %1428 = vmatprep.subr.bf16.mxu0 0
        %1429 = vmatpush1.bf16.xpose.msra.mxu0 0
        %1430 = vmatprep.subr.bf16.mxu0 0
        %1431 = vmatpush1.bf16.xpose.msra.mxu0 0
        %1432 = vmatprep.subr.bf16.mxu0 0
        %1433 = vmatpush1.bf16.xpose.msra.mxu0 0
        %1434 = vmatprep.subr.bf16.mxu0 0
        %1435 = vmatpush1.bf16.xpose.msra.mxu0 %v1424
        %1436 = vmatprep.subr.bf16.mxu0 0
        %1437 = vmatpush1.bf16.xpose.msra.mxu0 %v1421
        %1438 = vmatprep.subr.bf16.mxu0 0
        %1439 = vmatpush1.bf16.xpose.msra.mxu0 %v1418
        %1440 = vmatprep.subr.bf16.mxu0 0
        %1441 = vmatpush1.bf16.xpose.msra.mxu0 %v1415
        %1442 = vmatprep.subr.bf16.mxu0 0
        %1443 = vmatpush2.bf16.xpose.msra.mxu0 0
        %1444 = vmatprep.subr.bf16.mxu0 0
        %1445 = vmatpush2.bf16.xpose.msra.mxu0 0
        %1446 = vmatprep.subr.bf16.mxu0 0
        %1447 = vmatpush2.bf16.xpose.msra.mxu0 0
        %1448 = vmatprep.subr.bf16.mxu0 0
        %1449 = vmatpush2.bf16.xpose.msra.mxu0 0
        %1450 = vmatprep.subr.bf16.mxu0 0
        %1451 = vmatpush2.bf16.xpose.msra.mxu0 0
        %1452 = vmatprep.subr.bf16.mxu0 0
        %1453 = vmatpush2.bf16.xpose.msra.mxu0 0
        %1454 = vmatprep.subr.bf16.mxu0 0
        %1455 = vmatpush2.bf16.xpose.msra.mxu0 0
        %1456 = vmatprep.subr.bf16.mxu0 0
        %1457 = vmatpush2.bf16.xpose.msra.mxu0 0
        %1458 = vmatprep.mubr.bf16.mxu0 0
        %1459 = vmatmul.mubr.bf16.gmra.mxu0 %v1403
        %v1460 = vpop.f32.mrf.mxu0
        %v1461 = vadd.f32 0.0, %v1460
        %v1462 = vpop.f32.mrf.mxu0
        %v1463 = vpop.f32.mrf.mxu0
        %v1464 = vadd.f32 0.0, %v1463
        %v1465 = vpop.f32.mrf.mxu0
        %1466 = vmatprep.mubr.bf16.mxu0 0
        %1467 = vmatmul.mubr.bf16.gmra.mxu0 %v1406
        %v1468 = vpop.f32.mrf.mxu0
        %v1469 = vadd.f32 0.0, %v1468
        %v1470 = vpop.f32.mrf.mxu0
        %v1471 = vpop.f32.mrf.mxu0
        %v1472 = vadd.f32 0.0, %v1471
        %v1473 = vpop.f32.mrf.mxu0
        %1474 = vmatprep.mubr.bf16.mxu0 0
        %1475 = vmatmul.mubr.bf16.gmra.mxu0 %v1409
        %v1476 = vpop.f32.mrf.mxu0
        %v1477 = vadd.f32 0.0, %v1476
        %v1478 = vpop.f32.mrf.mxu0
        %v1479 = vpop.f32.mrf.mxu0
        %v1480 = vadd.f32 0.0, %v1479
        %v1481 = vpop.f32.mrf.mxu0
        %1482 = vmatprep.mubr.bf16.mxu0 0
        %1483 = vmatmul.mubr.bf16.gmra.mxu0 %v1412
        %v1484 = vpop.f32.mrf.mxu0
        %v1485 = vadd.f32 0.0, %v1484
        %v1486 = vpop.f32.mrf.mxu0
        %v1487 = vpop.f32.mrf.mxu0
        %v1488 = vadd.f32 0.0, %v1487
        %v1489 = vpop.f32.mrf.mxu0
        %1490 = vdwg.mxu0
        %v1492 = vsel %vm1312, %v735, 0
        %v1495 = vsel %vm1312, %v736, 0
        %v1498 = vsel %vm1312, %v737, 0
        %v1501 = vsel %vm1312, %v738, 0
        %v1504 = vsel %vm1312, %v1016, 0
        %v1507 = vsel %vm1312, %v1018, 0
        %v1510 = vsel %vm1312, %v1020, 0
        %v1513 = vsel %vm1312, %v1022, 0
        %1515 = vmatprep.subr.bf16.mxu0 0
        %1516 = vmatpush1.bf16.xpose.msra.mxu0 0
        %1517 = vmatprep.subr.bf16.mxu0 0
        %1518 = vmatpush1.bf16.xpose.msra.mxu0 0
        %1519 = vmatprep.subr.bf16.mxu0 0
        %1520 = vmatpush1.bf16.xpose.msra.mxu0 0
        %1521 = vmatprep.subr.bf16.mxu0 0
        %1522 = vmatpush1.bf16.xpose.msra.mxu0 0
        %1523 = vmatprep.subr.bf16.mxu0 0
        %1524 = vmatpush1.bf16.xpose.msra.mxu0 %v1513
        %1525 = vmatprep.subr.bf16.mxu0 0
        %1526 = vmatpush1.bf16.xpose.msra.mxu0 %v1510
        %1527 = vmatprep.subr.bf16.mxu0 0
        %1528 = vmatpush1.bf16.xpose.msra.mxu0 %v1507
        %1529 = vmatprep.subr.bf16.mxu0 0
        %1530 = vmatpush1.bf16.xpose.msra.mxu0 %v1504
        %1531 = vmatprep.subr.bf16.mxu0 0
        %1532 = vmatpush2.bf16.xpose.msra.mxu0 0
        %1533 = vmatprep.subr.bf16.mxu0 0
        %1534 = vmatpush2.bf16.xpose.msra.mxu0 0
        %1535 = vmatprep.subr.bf16.mxu0 0
        %1536 = vmatpush2.bf16.xpose.msra.mxu0 0
        %1537 = vmatprep.subr.bf16.mxu0 0
        %1538 = vmatpush2.bf16.xpose.msra.mxu0 0
        %1539 = vmatprep.subr.bf16.mxu0 0
        %1540 = vmatpush2.bf16.xpose.msra.mxu0 0
        %1541 = vmatprep.subr.bf16.mxu0 0
        %1542 = vmatpush2.bf16.xpose.msra.mxu0 0
        %1543 = vmatprep.subr.bf16.mxu0 0
        %1544 = vmatpush2.bf16.xpose.msra.mxu0 0
        %1545 = vmatprep.subr.bf16.mxu0 0
        %1546 = vmatpush2.bf16.xpose.msra.mxu0 0
        %1547 = vmatprep.mubr.bf16.mxu0 0
        %1548 = vmatmul.mubr.bf16.gmra.mxu0 %v1492
        %v1549 = vpop.f32.mrf.mxu0
        %v1550 = vadd.f32 0.0, %v1549
        %v1551 = vpop.f32.mrf.mxu0
        %v1552 = vpop.f32.mrf.mxu0
        %v1553 = vadd.f32 0.0, %v1552
        %v1554 = vpop.f32.mrf.mxu0
        %1555 = vmatprep.mubr.bf16.mxu0 0
        %1556 = vmatmul.mubr.bf16.gmra.mxu0 %v1495
        %v1557 = vpop.f32.mrf.mxu0
        %v1558 = vadd.f32 0.0, %v1557
        %v1559 = vpop.f32.mrf.mxu0
        %v1560 = vpop.f32.mrf.mxu0
        %v1561 = vadd.f32 0.0, %v1560
        %v1562 = vpop.f32.mrf.mxu0
        %1563 = vmatprep.mubr.bf16.mxu0 0
        %1564 = vmatmul.mubr.bf16.gmra.mxu0 %v1498
        %v1565 = vpop.f32.mrf.mxu0
        %v1566 = vadd.f32 0.0, %v1565
        %v1567 = vpop.f32.mrf.mxu0
        %v1568 = vpop.f32.mrf.mxu0
        %v1569 = vadd.f32 0.0, %v1568
        %v1570 = vpop.f32.mrf.mxu0
        %1571 = vmatprep.mubr.bf16.mxu0 0
        %1572 = vmatmul.mubr.bf16.gmra.mxu0 %v1501
        %v1573 = vpop.f32.mrf.mxu0
        %v1574 = vadd.f32 0.0, %v1573
        %v1575 = vpop.f32.mrf.mxu0
        %v1576 = vpop.f32.mrf.mxu0
        %v1577 = vadd.f32 0.0, %v1576
        %v1578 = vpop.f32.mrf.mxu0
        %1579 = vdwg.mxu0
        %v1581 = vsel %vm1312, %v1037, 0
        %v1584 = vsel %vm1312, %v1039, 0
        %v1587 = vsel %vm1312, %v1041, 0
        %v1590 = vsel %vm1312, %v1043, 0
        %v1593 = vsel %vm1312, %v1121, 0
        %v1596 = vsel %vm1312, %v1123, 0
        %v1599 = vsel %vm1312, %v1125, 0
        %v1602 = vsel %vm1312, %v1127, 0
        %1604 = vmatprep.subr.bf16.mxu0 0
        %1605 = vmatpush1.bf16.xpose.msra.mxu0 0
        %1606 = vmatprep.subr.bf16.mxu0 0
        %1607 = vmatpush1.bf16.xpose.msra.mxu0 0
        %1608 = vmatprep.subr.bf16.mxu0 0
        %1609 = vmatpush1.bf16.xpose.msra.mxu0 0
        %1610 = vmatprep.subr.bf16.mxu0 0
        %1611 = vmatpush1.bf16.xpose.msra.mxu0 0
        %1612 = vmatprep.subr.bf16.mxu0 0
        %1613 = vmatpush1.bf16.xpose.msra.mxu0 %v1602
        %1614 = vmatprep.subr.bf16.mxu0 0
        %1615 = vmatpush1.bf16.xpose.msra.mxu0 %v1599
        %1616 = vmatprep.subr.bf16.mxu0 0
        %1617 = vmatpush1.bf16.xpose.msra.mxu0 %v1596
        %1618 = vmatprep.subr.bf16.mxu0 0
        %1619 = vmatpush1.bf16.xpose.msra.mxu0 %v1593
        %1620 = vmatprep.subr.bf16.mxu0 0
        %1621 = vmatpush2.bf16.xpose.msra.mxu0 0
        %1622 = vmatprep.subr.bf16.mxu0 0
        %1623 = vmatpush2.bf16.xpose.msra.mxu0 0
        %1624 = vmatprep.subr.bf16.mxu0 0
        %1625 = vmatpush2.bf16.xpose.msra.mxu0 0
        %1626 = vmatprep.subr.bf16.mxu0 0
        %1627 = vmatpush2.bf16.xpose.msra.mxu0 0
        %1628 = vmatprep.subr.bf16.mxu0 0
        %1629 = vmatpush2.bf16.xpose.msra.mxu0 0
        %1630 = vmatprep.subr.bf16.mxu0 0
        %1631 = vmatpush2.bf16.xpose.msra.mxu0 0
        %1632 = vmatprep.subr.bf16.mxu0 0
        %1633 = vmatpush2.bf16.xpose.msra.mxu0 0
        %1634 = vmatprep.subr.bf16.mxu0 0
        %1635 = vmatpush2.bf16.xpose.msra.mxu0 0
        %1636 = vmatprep.mubr.bf16.mxu0 0
        %1637 = vmatmul.mubr.bf16.gmra.mxu0 %v1581
        %v1638 = vpop.f32.mrf.mxu0
        %v1639 = vadd.f32 0.0, %v1638
        %v1640 = vpop.f32.mrf.mxu0
        %v1641 = vpop.f32.mrf.mxu0
        %v1642 = vadd.f32 0.0, %v1641
        %v1643 = vpop.f32.mrf.mxu0
        %1644 = vmatprep.mubr.bf16.mxu0 0
        %1645 = vmatmul.mubr.bf16.gmra.mxu0 %v1584
        %v1646 = vpop.f32.mrf.mxu0
        %v1647 = vadd.f32 0.0, %v1646
        %v1648 = vpop.f32.mrf.mxu0
        %v1649 = vpop.f32.mrf.mxu0
        %v1650 = vadd.f32 0.0, %v1649
        %v1651 = vpop.f32.mrf.mxu0
        %1652 = vmatprep.mubr.bf16.mxu0 0
        %1653 = vmatmul.mubr.bf16.gmra.mxu0 %v1587
        %v1654 = vpop.f32.mrf.mxu0
        %v1655 = vadd.f32 0.0, %v1654
        %v1656 = vpop.f32.mrf.mxu0
        %v1657 = vpop.f32.mrf.mxu0
        %v1658 = vadd.f32 0.0, %v1657
        %v1659 = vpop.f32.mrf.mxu0
        %1660 = vmatprep.mubr.bf16.mxu0 0
        %1661 = vmatmul.mubr.bf16.gmra.mxu0 %v1590
        %v1662 = vpop.f32.mrf.mxu0
        %v1663 = vadd.f32 0.0, %v1662
        %v1664 = vpop.f32.mrf.mxu0
        %v1665 = vpop.f32.mrf.mxu0
        %v1666 = vadd.f32 0.0, %v1665
        %v1667 = vpop.f32.mrf.mxu0
        %1668 = vdwg.mxu0
        %v1670 = vsel %vm1312, %v1045, 0
        %v1673 = vsel %vm1312, %v1047, 0
        %v1676 = vsel %vm1312, %v1049, 0
        %v1679 = vsel %vm1312, %v1051, 0
        %v1682 = vsel %vm1312, %v1129, 0
        %v1685 = vsel %vm1312, %v1131, 0
        %v1688 = vsel %vm1312, %v1133, 0
        %v1691 = vsel %vm1312, %v1135, 0
        %1693 = vmatprep.subr.bf16.mxu0 0
        %1694 = vmatpush1.bf16.xpose.msra.mxu0 0
        %1695 = vmatprep.subr.bf16.mxu0 0
        %1696 = vmatpush1.bf16.xpose.msra.mxu0 0
        %1697 = vmatprep.subr.bf16.mxu0 0
        %1698 = vmatpush1.bf16.xpose.msra.mxu0 0
        %1699 = vmatprep.subr.bf16.mxu0 0
        %1700 = vmatpush1.bf16.xpose.msra.mxu0 0
        %1701 = vmatprep.subr.bf16.mxu0 0
        %1702 = vmatpush1.bf16.xpose.msra.mxu0 %v1691
        %1703 = vmatprep.subr.bf16.mxu0 0
        %1704 = vmatpush1.bf16.xpose.msra.mxu0 %v1688
        %1705 = vmatprep.subr.bf16.mxu0 0
        %1706 = vmatpush1.bf16.xpose.msra.mxu0 %v1685
        %1707 = vmatprep.subr.bf16.mxu0 0
        %1708 = vmatpush1.bf16.xpose.msra.mxu0 %v1682
        %1709 = vmatprep.subr.bf16.mxu0 0
        %1710 = vmatpush2.bf16.xpose.msra.mxu0 0
        %1711 = vmatprep.subr.bf16.mxu0 0
        %1712 = vmatpush2.bf16.xpose.msra.mxu0 0
        %1713 = vmatprep.subr.bf16.mxu0 0
        %1714 = vmatpush2.bf16.xpose.msra.mxu0 0
        %1715 = vmatprep.subr.bf16.mxu0 0
        %1716 = vmatpush2.bf16.xpose.msra.mxu0 0
        %1717 = vmatprep.subr.bf16.mxu0 0
        %1718 = vmatpush2.bf16.xpose.msra.mxu0 0
        %1719 = vmatprep.subr.bf16.mxu0 0
        %1720 = vmatpush2.bf16.xpose.msra.mxu0 0
        %1721 = vmatprep.subr.bf16.mxu0 0
        %1722 = vmatpush2.bf16.xpose.msra.mxu0 0
        %1723 = vmatprep.subr.bf16.mxu0 0
        %1724 = vmatpush2.bf16.xpose.msra.mxu0 0
        %1725 = vmatprep.mubr.bf16.mxu0 0
        %1726 = vmatmul.mubr.bf16.gmra.mxu0 %v1670
        %v1727 = vpop.f32.mrf.mxu0
        %v1728 = vadd.f32 0.0, %v1727
        %v1729 = vpop.f32.mrf.mxu0
        %v1730 = vpop.f32.mrf.mxu0
        %v1731 = vadd.f32 0.0, %v1730
        %v1732 = vpop.f32.mrf.mxu0
        %1733 = vmatprep.mubr.bf16.mxu0 0
        %1734 = vmatmul.mubr.bf16.gmra.mxu0 %v1673
        %v1735 = vpop.f32.mrf.mxu0
        %v1736 = vadd.f32 0.0, %v1735
        %v1737 = vpop.f32.mrf.mxu0
        %v1738 = vpop.f32.mrf.mxu0
        %v1739 = vadd.f32 0.0, %v1738
        %v1740 = vpop.f32.mrf.mxu0
        %1741 = vmatprep.mubr.bf16.mxu0 0
        %1742 = vmatmul.mubr.bf16.gmra.mxu0 %v1676
        %v1743 = vpop.f32.mrf.mxu0
        %v1744 = vadd.f32 0.0, %v1743
        %v1745 = vpop.f32.mrf.mxu0
        %v1746 = vpop.f32.mrf.mxu0
        %v1747 = vadd.f32 0.0, %v1746
        %v1748 = vpop.f32.mrf.mxu0
        %1749 = vmatprep.mubr.bf16.mxu0 0
        %1750 = vmatmul.mubr.bf16.gmra.mxu0 %v1679
        %v1751 = vpop.f32.mrf.mxu0
        %v1752 = vadd.f32 0.0, %v1751
        %v1753 = vpop.f32.mrf.mxu0
        %v1754 = vpop.f32.mrf.mxu0
        %v1755 = vadd.f32 0.0, %v1754
        %v1756 = vpop.f32.mrf.mxu0
        %1757 = vdwg.mxu0
        %v1759 = vsel %vm1312, %v1053, 0
        %v1762 = vsel %vm1312, %v1055, 0
        %v1765 = vsel %vm1312, %v1057, 0
        %v1768 = vsel %vm1312, %v1059, 0
        %v1771 = vsel %vm1312, %v1137, 0
        %v1774 = vsel %vm1312, %v1139, 0
        %v1777 = vsel %vm1312, %v1141, 0
        %v1780 = vsel %vm1312, %v1143, 0
        %1782 = vmatprep.subr.bf16.mxu0 0
        %1783 = vmatpush1.bf16.xpose.msra.mxu0 0
        %1784 = vmatprep.subr.bf16.mxu0 0
        %1785 = vmatpush1.bf16.xpose.msra.mxu0 0
        %1786 = vmatprep.subr.bf16.mxu0 0
        %1787 = vmatpush1.bf16.xpose.msra.mxu0 0
        %1788 = vmatprep.subr.bf16.mxu0 0
        %1789 = vmatpush1.bf16.xpose.msra.mxu0 0
        %1790 = vmatprep.subr.bf16.mxu0 0
        %1791 = vmatpush1.bf16.xpose.msra.mxu0 %v1780
        %1792 = vmatprep.subr.bf16.mxu0 0
        %1793 = vmatpush1.bf16.xpose.msra.mxu0 %v1777
        %1794 = vmatprep.subr.bf16.mxu0 0
        %1795 = vmatpush1.bf16.xpose.msra.mxu0 %v1774
        %1796 = vmatprep.subr.bf16.mxu0 0
        %1797 = vmatpush1.bf16.xpose.msra.mxu0 %v1771
        %1798 = vmatprep.subr.bf16.mxu0 0
        %1799 = vmatpush2.bf16.xpose.msra.mxu0 0
        %1800 = vmatprep.subr.bf16.mxu0 0
        %1801 = vmatpush2.bf16.xpose.msra.mxu0 0
        %1802 = vmatprep.subr.bf16.mxu0 0
        %1803 = vmatpush2.bf16.xpose.msra.mxu0 0
        %1804 = vmatprep.subr.bf16.mxu0 0
        %1805 = vmatpush2.bf16.xpose.msra.mxu0 0
        %1806 = vmatprep.subr.bf16.mxu0 0
        %1807 = vmatpush2.bf16.xpose.msra.mxu0 0
        %1808 = vmatprep.subr.bf16.mxu0 0
        %1809 = vmatpush2.bf16.xpose.msra.mxu0 0
        %1810 = vmatprep.subr.bf16.mxu0 0
        %1811 = vmatpush2.bf16.xpose.msra.mxu0 0
        %1812 = vmatprep.subr.bf16.mxu0 0
        %1813 = vmatpush2.bf16.xpose.msra.mxu0 0
        %1814 = vmatprep.mubr.bf16.mxu0 0
        %1815 = vmatmul.mubr.bf16.gmra.mxu0 %v1759
        %v1816 = vpop.f32.mrf.mxu0
        %v1817 = vadd.f32 0.0, %v1816
        %v1818 = vpop.f32.mrf.mxu0
        %v1819 = vpop.f32.mrf.mxu0
        %v1820 = vadd.f32 0.0, %v1819
        %v1821 = vpop.f32.mrf.mxu0
        %1822 = vmatprep.mubr.bf16.mxu0 0
        %1823 = vmatmul.mubr.bf16.gmra.mxu0 %v1762
        %v1824 = vpop.f32.mrf.mxu0
        %v1825 = vadd.f32 0.0, %v1824
        %v1826 = vpop.f32.mrf.mxu0
        %v1827 = vpop.f32.mrf.mxu0
        %v1828 = vadd.f32 0.0, %v1827
        %v1829 = vpop.f32.mrf.mxu0
        %1830 = vmatprep.mubr.bf16.mxu0 0
        %1831 = vmatmul.mubr.bf16.gmra.mxu0 %v1765
        %v1832 = vpop.f32.mrf.mxu0
        %v1833 = vadd.f32 0.0, %v1832
        %v1834 = vpop.f32.mrf.mxu0
        %v1835 = vpop.f32.mrf.mxu0
        %v1836 = vadd.f32 0.0, %v1835
        %v1837 = vpop.f32.mrf.mxu0
        %1838 = vmatprep.mubr.bf16.mxu0 0
        %1839 = vmatmul.mubr.bf16.gmra.mxu0 %v1768
        %v1840 = vpop.f32.mrf.mxu0
        %v1841 = vadd.f32 0.0, %v1840
        %v1842 = vpop.f32.mrf.mxu0
        %v1843 = vpop.f32.mrf.mxu0
        %v1844 = vadd.f32 0.0, %v1843
        %v1845 = vpop.f32.mrf.mxu0
        %1846 = vdwg.mxu0
        %v1848 = vsel %vm1312, %v1061, 0
        %v1851 = vsel %vm1312, %v1063, 0
        %v1854 = vsel %vm1312, %v1065, 0
        %v1857 = vsel %vm1312, %v1067, 0
        %v1860 = vsel %vm1312, %v1145, 0
        %v1863 = vsel %vm1312, %v1147, 0
        %v1866 = vsel %vm1312, %v1149, 0
        %v1869 = vsel %vm1312, %v1151, 0
        %1871 = vmatprep.subr.bf16.mxu0 0
        %1872 = vmatpush1.bf16.xpose.msra.mxu0 0
        %1873 = vmatprep.subr.bf16.mxu0 0
        %1874 = vmatpush1.bf16.xpose.msra.mxu0 0
        %1875 = vmatprep.subr.bf16.mxu0 0
        %1876 = vmatpush1.bf16.xpose.msra.mxu0 0
        %1877 = vmatprep.subr.bf16.mxu0 0
        %1878 = vmatpush1.bf16.xpose.msra.mxu0 0
        %1879 = vmatprep.subr.bf16.mxu0 0
        %1880 = vmatpush1.bf16.xpose.msra.mxu0 %v1869
        %1881 = vmatprep.subr.bf16.mxu0 0
        %1882 = vmatpush1.bf16.xpose.msra.mxu0 %v1866
        %1883 = vmatprep.subr.bf16.mxu0 0
        %1884 = vmatpush1.bf16.xpose.msra.mxu0 %v1863
        %1885 = vmatprep.subr.bf16.mxu0 0
        %1886 = vmatpush1.bf16.xpose.msra.mxu0 %v1860
        %1887 = vmatprep.subr.bf16.mxu0 0
        %1888 = vmatpush2.bf16.xpose.msra.mxu0 0
        %1889 = vmatprep.subr.bf16.mxu0 0
        %1890 = vmatpush2.bf16.xpose.msra.mxu0 0
        %1891 = vmatprep.subr.bf16.mxu0 0
        %1892 = vmatpush2.bf16.xpose.msra.mxu0 0
        %1893 = vmatprep.subr.bf16.mxu0 0
        %1894 = vmatpush2.bf16.xpose.msra.mxu0 0
        %1895 = vmatprep.subr.bf16.mxu0 0
        %1896 = vmatpush2.bf16.xpose.msra.mxu0 0
        %1897 = vmatprep.subr.bf16.mxu0 0
        %1898 = vmatpush2.bf16.xpose.msra.mxu0 0
        %1899 = vmatprep.subr.bf16.mxu0 0
        %1900 = vmatpush2.bf16.xpose.msra.mxu0 0
        %1901 = vmatprep.subr.bf16.mxu0 0
        %1902 = vmatpush2.bf16.xpose.msra.mxu0 0
        %1903 = vmatprep.mubr.bf16.mxu0 0
        %1904 = vmatmul.mubr.bf16.gmra.mxu0 %v1848
        %v1905 = vpop.f32.mrf.mxu0
        %v1906 = vadd.f32 0.0, %v1905
        %v1907 = vpop.f32.mrf.mxu0
        %v1908 = vpop.f32.mrf.mxu0
        %v1909 = vadd.f32 0.0, %v1908
        %v1910 = vpop.f32.mrf.mxu0
        %1911 = vmatprep.mubr.bf16.mxu0 0
        %1912 = vmatmul.mubr.bf16.gmra.mxu0 %v1851
        %v1913 = vpop.f32.mrf.mxu0
        %v1914 = vadd.f32 0.0, %v1913
        %v1915 = vpop.f32.mrf.mxu0
        %v1916 = vpop.f32.mrf.mxu0
        %v1917 = vadd.f32 0.0, %v1916
        %v1918 = vpop.f32.mrf.mxu0
        %1919 = vmatprep.mubr.bf16.mxu0 0
        %1920 = vmatmul.mubr.bf16.gmra.mxu0 %v1854
        %v1921 = vpop.f32.mrf.mxu0
        %v1922 = vadd.f32 0.0, %v1921
        %v1923 = vpop.f32.mrf.mxu0
        %v1924 = vpop.f32.mrf.mxu0
        %v1925 = vadd.f32 0.0, %v1924
        %v1926 = vpop.f32.mrf.mxu0
        %1927 = vmatprep.mubr.bf16.mxu0 0
        %1928 = vmatmul.mubr.bf16.gmra.mxu0 %v1857
        %v1929 = vpop.f32.mrf.mxu0
        %v1930 = vadd.f32 0.0, %v1929
        %v1931 = vpop.f32.mrf.mxu0
        %v1932 = vpop.f32.mrf.mxu0
        %v1933 = vadd.f32 0.0, %v1932
        %v1934 = vpop.f32.mrf.mxu0
        %1935 = vdwg.mxu0
        %v1937 = vsel %vm1312, %v1069, 0
        %v1940 = vsel %vm1312, %v1071, 0
        %v1943 = vsel %vm1312, %v1073, 0
        %v1946 = vsel %vm1312, %v1075, 0
        %v1949 = vsel %vm1312, %v1153, 0
        %v1952 = vsel %vm1312, %v1155, 0
        %v1955 = vsel %vm1312, %v1157, 0
        %v1958 = vsel %vm1312, %v1159, 0
        %1960 = vmatprep.subr.bf16.mxu0 0
        %1961 = vmatpush1.bf16.xpose.msra.mxu0 0
        %1962 = vmatprep.subr.bf16.mxu0 0
        %1963 = vmatpush1.bf16.xpose.msra.mxu0 0
        %1964 = vmatprep.subr.bf16.mxu0 0
        %1965 = vmatpush1.bf16.xpose.msra.mxu0 0
        %1966 = vmatprep.subr.bf16.mxu0 0
        %1967 = vmatpush1.bf16.xpose.msra.mxu0 0
        %1968 = vmatprep.subr.bf16.mxu0 0
        %1969 = vmatpush1.bf16.xpose.msra.mxu0 %v1958
        %1970 = vmatprep.subr.bf16.mxu0 0
        %1971 = vmatpush1.bf16.xpose.msra.mxu0 %v1955
        %1972 = vmatprep.subr.bf16.mxu0 0
        %1973 = vmatpush1.bf16.xpose.msra.mxu0 %v1952
        %1974 = vmatprep.subr.bf16.mxu0 0
        %1975 = vmatpush1.bf16.xpose.msra.mxu0 %v1949
        %1976 = vmatprep.subr.bf16.mxu0 0
        %1977 = vmatpush2.bf16.xpose.msra.mxu0 0
        %1978 = vmatprep.subr.bf16.mxu0 0
        %1979 = vmatpush2.bf16.xpose.msra.mxu0 0
        %1980 = vmatprep.subr.bf16.mxu0 0
        %1981 = vmatpush2.bf16.xpose.msra.mxu0 0
        %1982 = vmatprep.subr.bf16.mxu0 0
        %1983 = vmatpush2.bf16.xpose.msra.mxu0 0
        %1984 = vmatprep.subr.bf16.mxu0 0
        %1985 = vmatpush2.bf16.xpose.msra.mxu0 0
        %1986 = vmatprep.subr.bf16.mxu0 0
        %1987 = vmatpush2.bf16.xpose.msra.mxu0 0
        %1988 = vmatprep.subr.bf16.mxu0 0
        %1989 = vmatpush2.bf16.xpose.msra.mxu0 0
        %1990 = vmatprep.subr.bf16.mxu0 0
        %1991 = vmatpush2.bf16.xpose.msra.mxu0 0
        %1992 = vmatprep.mubr.bf16.mxu0 0
        %1993 = vmatmul.mubr.bf16.gmra.mxu0 %v1937
        %v1994 = vpop.f32.mrf.mxu0
        %v1995 = vadd.f32 0.0, %v1994
        %v1996 = vpop.f32.mrf.mxu0
        %v1997 = vpop.f32.mrf.mxu0
        %v1998 = vadd.f32 0.0, %v1997
        %v1999 = vpop.f32.mrf.mxu0
        %2000 = vmatprep.mubr.bf16.mxu0 0
        %2001 = vmatmul.mubr.bf16.gmra.mxu0 %v1940
        %v2002 = vpop.f32.mrf.mxu0
        %v2003 = vadd.f32 0.0, %v2002
        %v2004 = vpop.f32.mrf.mxu0
        %v2005 = vpop.f32.mrf.mxu0
        %v2006 = vadd.f32 0.0, %v2005
        %v2007 = vpop.f32.mrf.mxu0
        %2008 = vmatprep.mubr.bf16.mxu0 0
        %2009 = vmatmul.mubr.bf16.gmra.mxu0 %v1943
        %v2010 = vpop.f32.mrf.mxu0
        %v2011 = vadd.f32 0.0, %v2010
        %v2012 = vpop.f32.mrf.mxu0
        %v2013 = vpop.f32.mrf.mxu0
        %v2014 = vadd.f32 0.0, %v2013
        %v2015 = vpop.f32.mrf.mxu0
        %2016 = vmatprep.mubr.bf16.mxu0 0
        %2017 = vmatmul.mubr.bf16.gmra.mxu0 %v1946
        %v2018 = vpop.f32.mrf.mxu0
        %v2019 = vadd.f32 0.0, %v2018
        %v2020 = vpop.f32.mrf.mxu0
        %v2021 = vpop.f32.mrf.mxu0
        %v2022 = vadd.f32 0.0, %v2021
        %v2023 = vpop.f32.mrf.mxu0
        %2024 = vdwg.mxu0
        %v2026 = vsel %vm1312, %v1077, 0
        %v2029 = vsel %vm1312, %v1079, 0
        %v2032 = vsel %vm1312, %v1081, 0
        %v2035 = vsel %vm1312, %v1083, 0
        %v2038 = vsel %vm1312, %v1161, 0
        %v2041 = vsel %vm1312, %v1163, 0
        %v2044 = vsel %vm1312, %v1165, 0
        %v2047 = vsel %vm1312, %v1167, 0
        %2049 = vmatprep.subr.bf16.mxu0 0
        %2050 = vmatpush1.bf16.xpose.msra.mxu0 0
        %2051 = vmatprep.subr.bf16.mxu0 0
        %2052 = vmatpush1.bf16.xpose.msra.mxu0 0
        %2053 = vmatprep.subr.bf16.mxu0 0
        %2054 = vmatpush1.bf16.xpose.msra.mxu0 0
        %2055 = vmatprep.subr.bf16.mxu0 0
        %2056 = vmatpush1.bf16.xpose.msra.mxu0 0
        %2057 = vmatprep.subr.bf16.mxu0 0
        %2058 = vmatpush1.bf16.xpose.msra.mxu0 %v2047
        %2059 = vmatprep.subr.bf16.mxu0 0
        %2060 = vmatpush1.bf16.xpose.msra.mxu0 %v2044
        %2061 = vmatprep.subr.bf16.mxu0 0
        %2062 = vmatpush1.bf16.xpose.msra.mxu0 %v2041
        %2063 = vmatprep.subr.bf16.mxu0 0
        %2064 = vmatpush1.bf16.xpose.msra.mxu0 %v2038
        %2065 = vmatprep.subr.bf16.mxu0 0
        %2066 = vmatpush2.bf16.xpose.msra.mxu0 0
        %2067 = vmatprep.subr.bf16.mxu0 0
        %2068 = vmatpush2.bf16.xpose.msra.mxu0 0
        %2069 = vmatprep.subr.bf16.mxu0 0
        %2070 = vmatpush2.bf16.xpose.msra.mxu0 0
        %2071 = vmatprep.subr.bf16.mxu0 0
        %2072 = vmatpush2.bf16.xpose.msra.mxu0 0
        %2073 = vmatprep.subr.bf16.mxu0 0
        %2074 = vmatpush2.bf16.xpose.msra.mxu0 0
        %2075 = vmatprep.subr.bf16.mxu0 0
        %2076 = vmatpush2.bf16.xpose.msra.mxu0 0
        %2077 = vmatprep.subr.bf16.mxu0 0
        %2078 = vmatpush2.bf16.xpose.msra.mxu0 0
        %2079 = vmatprep.subr.bf16.mxu0 0
        %2080 = vmatpush2.bf16.xpose.msra.mxu0 0
        %2081 = vmatprep.mubr.bf16.mxu0 0
        %2082 = vmatmul.mubr.bf16.gmra.mxu0 %v2026
        %v2083 = vpop.f32.mrf.mxu0
        %v2084 = vadd.f32 0.0, %v2083
        %v2085 = vpop.f32.mrf.mxu0
        %v2086 = vpop.f32.mrf.mxu0
        %v2087 = vadd.f32 0.0, %v2086
        %v2088 = vpop.f32.mrf.mxu0
        %2089 = vmatprep.mubr.bf16.mxu0 0
        %2090 = vmatmul.mubr.bf16.gmra.mxu0 %v2029
        %v2091 = vpop.f32.mrf.mxu0
        %v2092 = vadd.f32 0.0, %v2091
        %v2093 = vpop.f32.mrf.mxu0
        %v2094 = vpop.f32.mrf.mxu0
        %v2095 = vadd.f32 0.0, %v2094
        %v2096 = vpop.f32.mrf.mxu0
        %2097 = vmatprep.mubr.bf16.mxu0 0
        %2098 = vmatmul.mubr.bf16.gmra.mxu0 %v2032
        %v2099 = vpop.f32.mrf.mxu0
        %v2100 = vadd.f32 0.0, %v2099
        %v2101 = vpop.f32.mrf.mxu0
        %v2102 = vpop.f32.mrf.mxu0
        %v2103 = vadd.f32 0.0, %v2102
        %v2104 = vpop.f32.mrf.mxu0
        %2105 = vmatprep.mubr.bf16.mxu0 0
        %2106 = vmatmul.mubr.bf16.gmra.mxu0 %v2035
        %v2107 = vpop.f32.mrf.mxu0
        %v2108 = vadd.f32 0.0, %v2107
        %v2109 = vpop.f32.mrf.mxu0
        %v2110 = vpop.f32.mrf.mxu0
        %v2111 = vadd.f32 0.0, %v2110
        %v2112 = vpop.f32.mrf.mxu0
        %2113 = vdwg.mxu0
        %v2115 = vsel %vm1312, %v1085, 0
        %v2118 = vsel %vm1312, %v1087, 0
        %v2121 = vsel %vm1312, %v1089, 0
        %v2124 = vsel %vm1312, %v1091, 0
        %v2127 = vsel %vm1312, %v1169, 0
        %v2130 = vsel %vm1312, %v1171, 0
        %v2133 = vsel %vm1312, %v1173, 0
        %v2136 = vsel %vm1312, %v1175, 0
        %2138 = vmatprep.subr.bf16.mxu0 0
        %2139 = vmatpush1.bf16.xpose.msra.mxu0 0
        %2140 = vmatprep.subr.bf16.mxu0 0
        %2141 = vmatpush1.bf16.xpose.msra.mxu0 0
        %2142 = vmatprep.subr.bf16.mxu0 0
        %2143 = vmatpush1.bf16.xpose.msra.mxu0 0
        %2144 = vmatprep.subr.bf16.mxu0 0
        %2145 = vmatpush1.bf16.xpose.msra.mxu0 0
        %2146 = vmatprep.subr.bf16.mxu0 0
        %2147 = vmatpush1.bf16.xpose.msra.mxu0 %v2136
        %2148 = vmatprep.subr.bf16.mxu0 0
        %2149 = vmatpush1.bf16.xpose.msra.mxu0 %v2133
        %2150 = vmatprep.subr.bf16.mxu0 0
        %2151 = vmatpush1.bf16.xpose.msra.mxu0 %v2130
        %2152 = vmatprep.subr.bf16.mxu0 0
        %2153 = vmatpush1.bf16.xpose.msra.mxu0 %v2127
        %2154 = vmatprep.subr.bf16.mxu0 0
        %2155 = vmatpush2.bf16.xpose.msra.mxu0 0
        %2156 = vmatprep.subr.bf16.mxu0 0
        %2157 = vmatpush2.bf16.xpose.msra.mxu0 0
        %2158 = vmatprep.subr.bf16.mxu0 0
        %2159 = vmatpush2.bf16.xpose.msra.mxu0 0
        %2160 = vmatprep.subr.bf16.mxu0 0
        %2161 = vmatpush2.bf16.xpose.msra.mxu0 0
        %2162 = vmatprep.subr.bf16.mxu0 0
        %2163 = vmatpush2.bf16.xpose.msra.mxu0 0
        %2164 = vmatprep.subr.bf16.mxu0 0
        %2165 = vmatpush2.bf16.xpose.msra.mxu0 0
        %2166 = vmatprep.subr.bf16.mxu0 0
        %2167 = vmatpush2.bf16.xpose.msra.mxu0 0
        %2168 = vmatprep.subr.bf16.mxu0 0
        %2169 = vmatpush2.bf16.xpose.msra.mxu0 0
        %2170 = vmatprep.mubr.bf16.mxu0 0
        %2171 = vmatmul.mubr.bf16.gmra.mxu0 %v2115
        %v2172 = vpop.f32.mrf.mxu0
        %v2173 = vadd.f32 0.0, %v2172
        %v2174 = vpop.f32.mrf.mxu0
        %v2175 = vpop.f32.mrf.mxu0
        %v2176 = vadd.f32 0.0, %v2175
        %v2177 = vpop.f32.mrf.mxu0
        %2178 = vmatprep.mubr.bf16.mxu0 0
        %2179 = vmatmul.mubr.bf16.gmra.mxu0 %v2118
        %v2180 = vpop.f32.mrf.mxu0
        %v2181 = vadd.f32 0.0, %v2180
        %v2182 = vpop.f32.mrf.mxu0
        %v2183 = vpop.f32.mrf.mxu0
        %v2184 = vadd.f32 0.0, %v2183
        %v2185 = vpop.f32.mrf.mxu0
        %2186 = vmatprep.mubr.bf16.mxu0 0
        %2187 = vmatmul.mubr.bf16.gmra.mxu0 %v2121
        %v2188 = vpop.f32.mrf.mxu0
        %v2189 = vadd.f32 0.0, %v2188
        %v2190 = vpop.f32.mrf.mxu0
        %v2191 = vpop.f32.mrf.mxu0
        %v2192 = vadd.f32 0.0, %v2191
        %v2193 = vpop.f32.mrf.mxu0
        %2194 = vmatprep.mubr.bf16.mxu0 0
        %2195 = vmatmul.mubr.bf16.gmra.mxu0 %v2124
        %v2196 = vpop.f32.mrf.mxu0
        %v2197 = vadd.f32 0.0, %v2196
        %v2198 = vpop.f32.mrf.mxu0
        %v2199 = vpop.f32.mrf.mxu0
        %v2200 = vadd.f32 0.0, %v2199
        %v2201 = vpop.f32.mrf.mxu0
        %2202 = vdwg.mxu0
        %v2204 = vsel %vm1312, %v1093, 0
        %v2207 = vsel %vm1312, %v1095, 0
        %v2210 = vsel %vm1312, %v1097, 0
        %v2213 = vsel %vm1312, %v1099, 0
        %v2216 = vsel %vm1312, %v1177, 0
        %v2219 = vsel %vm1312, %v1179, 0
        %v2222 = vsel %vm1312, %v1181, 0
        %v2225 = vsel %vm1312, %v1183, 0
        %2227 = vmatprep.subr.bf16.mxu0 0
        %2228 = vmatpush1.bf16.xpose.msra.mxu0 0
        %2229 = vmatprep.subr.bf16.mxu0 0
        %2230 = vmatpush1.bf16.xpose.msra.mxu0 0
        %2231 = vmatprep.subr.bf16.mxu0 0
        %2232 = vmatpush1.bf16.xpose.msra.mxu0 0
        %2233 = vmatprep.subr.bf16.mxu0 0
        %2234 = vmatpush1.bf16.xpose.msra.mxu0 0
        %2235 = vmatprep.subr.bf16.mxu0 0
        %2236 = vmatpush1.bf16.xpose.msra.mxu0 %v2225
        %2237 = vmatprep.subr.bf16.mxu0 0
        %2238 = vmatpush1.bf16.xpose.msra.mxu0 %v2222
        %2239 = vmatprep.subr.bf16.mxu0 0
        %2240 = vmatpush1.bf16.xpose.msra.mxu0 %v2219
        %2241 = vmatprep.subr.bf16.mxu0 0
        %2242 = vmatpush1.bf16.xpose.msra.mxu0 %v2216
        %2243 = vmatprep.subr.bf16.mxu0 0
        %2244 = vmatpush2.bf16.xpose.msra.mxu0 0
        %2245 = vmatprep.subr.bf16.mxu0 0
        %2246 = vmatpush2.bf16.xpose.msra.mxu0 0
        %2247 = vmatprep.subr.bf16.mxu0 0
        %2248 = vmatpush2.bf16.xpose.msra.mxu0 0
        %2249 = vmatprep.subr.bf16.mxu0 0
        %2250 = vmatpush2.bf16.xpose.msra.mxu0 0
        %2251 = vmatprep.subr.bf16.mxu0 0
        %2252 = vmatpush2.bf16.xpose.msra.mxu0 0
        %2253 = vmatprep.subr.bf16.mxu0 0
        %2254 = vmatpush2.bf16.xpose.msra.mxu0 0
        %2255 = vmatprep.subr.bf16.mxu0 0
        %2256 = vmatpush2.bf16.xpose.msra.mxu0 0
        %2257 = vmatprep.subr.bf16.mxu0 0
        %2258 = vmatpush2.bf16.xpose.msra.mxu0 0
        %2259 = vmatprep.mubr.bf16.mxu0 0
        %2260 = vmatmul.mubr.bf16.gmra.mxu0 %v2204
        %v2261 = vpop.f32.mrf.mxu0
        %v2262 = vadd.f32 0.0, %v2261
        %v2263 = vpop.f32.mrf.mxu0
        %v2264 = vpop.f32.mrf.mxu0
        %v2265 = vadd.f32 0.0, %v2264
        %v2266 = vpop.f32.mrf.mxu0
        %2267 = vmatprep.mubr.bf16.mxu0 0
        %2268 = vmatmul.mubr.bf16.gmra.mxu0 %v2207
        %v2269 = vpop.f32.mrf.mxu0
        %v2270 = vadd.f32 0.0, %v2269
        %v2271 = vpop.f32.mrf.mxu0
        %v2272 = vpop.f32.mrf.mxu0
        %v2273 = vadd.f32 0.0, %v2272
        %v2274 = vpop.f32.mrf.mxu0
        %2275 = vmatprep.mubr.bf16.mxu0 0
        %2276 = vmatmul.mubr.bf16.gmra.mxu0 %v2210
        %v2277 = vpop.f32.mrf.mxu0
        %v2278 = vadd.f32 0.0, %v2277
        %v2279 = vpop.f32.mrf.mxu0
        %v2280 = vpop.f32.mrf.mxu0
        %v2281 = vadd.f32 0.0, %v2280
        %v2282 = vpop.f32.mrf.mxu0
        %2283 = vmatprep.mubr.bf16.mxu0 0
        %2284 = vmatmul.mubr.bf16.gmra.mxu0 %v2213
        %v2285 = vpop.f32.mrf.mxu0
        %v2286 = vadd.f32 0.0, %v2285
        %v2287 = vpop.f32.mrf.mxu0
        %v2288 = vpop.f32.mrf.mxu0
        %v2289 = vadd.f32 0.0, %v2288
        %v2290 = vpop.f32.mrf.mxu0
        %2291 = vdwg.mxu0
        %v2293 = vsel %vm1312, %v1101, 0
        %v2296 = vsel %vm1312, %v1103, 0
        %v2299 = vsel %vm1312, %v1105, 0
        %v2302 = vsel %vm1312, %v1107, 0
        %v2305 = vsel %vm1312, %v1185, 0
        %v2308 = vsel %vm1312, %v1187, 0
        %v2311 = vsel %vm1312, %v1189, 0
        %v2314 = vsel %vm1312, %v1191, 0
        %2316 = vmatprep.subr.bf16.mxu0 0
        %2317 = vmatpush1.bf16.xpose.msra.mxu0 0
        %2318 = vmatprep.subr.bf16.mxu0 0
        %2319 = vmatpush1.bf16.xpose.msra.mxu0 0
        %2320 = vmatprep.subr.bf16.mxu0 0
        %2321 = vmatpush1.bf16.xpose.msra.mxu0 0
        %2322 = vmatprep.subr.bf16.mxu0 0
        %2323 = vmatpush1.bf16.xpose.msra.mxu0 0
        %2324 = vmatprep.subr.bf16.mxu0 0
        %2325 = vmatpush1.bf16.xpose.msra.mxu0 %v2314
        %2326 = vmatprep.subr.bf16.mxu0 0
        %2327 = vmatpush1.bf16.xpose.msra.mxu0 %v2311
        %2328 = vmatprep.subr.bf16.mxu0 0
        %2329 = vmatpush1.bf16.xpose.msra.mxu0 %v2308
        %2330 = vmatprep.subr.bf16.mxu0 0
        %2331 = vmatpush1.bf16.xpose.msra.mxu0 %v2305
        %2332 = vmatprep.subr.bf16.mxu0 0
        %2333 = vmatpush2.bf16.xpose.msra.mxu0 0
        %2334 = vmatprep.subr.bf16.mxu0 0
        %2335 = vmatpush2.bf16.xpose.msra.mxu0 0
        %2336 = vmatprep.subr.bf16.mxu0 0
        %2337 = vmatpush2.bf16.xpose.msra.mxu0 0
        %2338 = vmatprep.subr.bf16.mxu0 0
        %2339 = vmatpush2.bf16.xpose.msra.mxu0 0
        %2340 = vmatprep.subr.bf16.mxu0 0
        %2341 = vmatpush2.bf16.xpose.msra.mxu0 0
        %2342 = vmatprep.subr.bf16.mxu0 0
        %2343 = vmatpush2.bf16.xpose.msra.mxu0 0
        %2344 = vmatprep.subr.bf16.mxu0 0
        %2345 = vmatpush2.bf16.xpose.msra.mxu0 0
        %2346 = vmatprep.subr.bf16.mxu0 0
        %2347 = vmatpush2.bf16.xpose.msra.mxu0 0
        %2348 = vmatprep.mubr.bf16.mxu0 0
        %2349 = vmatmul.mubr.bf16.gmra.mxu0 %v2293
        %v2350 = vpop.f32.mrf.mxu0
        %v2351 = vadd.f32 0.0, %v2350
        %v2352 = vpop.f32.mrf.mxu0
        %v2353 = vpop.f32.mrf.mxu0
        %v2354 = vadd.f32 0.0, %v2353
        %v2355 = vpop.f32.mrf.mxu0
        %2356 = vmatprep.mubr.bf16.mxu0 0
        %2357 = vmatmul.mubr.bf16.gmra.mxu0 %v2296
        %v2358 = vpop.f32.mrf.mxu0
        %v2359 = vadd.f32 0.0, %v2358
        %v2360 = vpop.f32.mrf.mxu0
        %v2361 = vpop.f32.mrf.mxu0
        %v2362 = vadd.f32 0.0, %v2361
        %v2363 = vpop.f32.mrf.mxu0
        %2364 = vmatprep.mubr.bf16.mxu0 0
        %2365 = vmatmul.mubr.bf16.gmra.mxu0 %v2299
        %v2366 = vpop.f32.mrf.mxu0
        %v2367 = vadd.f32 0.0, %v2366
        %v2368 = vpop.f32.mrf.mxu0
        %v2369 = vpop.f32.mrf.mxu0
        %v2370 = vadd.f32 0.0, %v2369
        %v2371 = vpop.f32.mrf.mxu0
        %2372 = vmatprep.mubr.bf16.mxu0 0
        %2373 = vmatmul.mubr.bf16.gmra.mxu0 %v2302
        %v2374 = vpop.f32.mrf.mxu0
        %v2375 = vadd.f32 0.0, %v2374
        %v2376 = vpop.f32.mrf.mxu0
        %v2377 = vpop.f32.mrf.mxu0
        %v2378 = vadd.f32 0.0, %v2377
        %v2379 = vpop.f32.mrf.mxu0
        %2380 = vdwg.mxu0
        %v2381 = vld [vmem:[#allocation11] sm:$0xff]
        %v2382 = vld [vmem:[#allocation11 + $0x8] sm:$0xff]
        %v2383 = vld [vmem:[#allocation11 + $0x10] sm:$0xff]
        %v2384 = vld [vmem:[#allocation11 + $0x18] sm:$0xff]
        %v2385 = vld [vmem:[#allocation11 + $0x20] sm:$0xff]
        %v2386 = vld [vmem:[#allocation11 + $0x28] sm:$0xff]
        %v2387 = vld [vmem:[#allocation11 + $0x30] sm:$0xff]
        %v2388 = vld [vmem:[#allocation11 + $0x38] sm:$0xff]
        %v2389 = vld [vmem:[#allocation11 + $0x40] sm:$0xff]
        %v2390 = vld [vmem:[#allocation11 + $0x48] sm:$0xff]
        %v2391 = vld [vmem:[#allocation11 + $0x50] sm:$0xff]
        %v2392 = vld [vmem:[#allocation11 + $0x58] sm:$0xff]
        %v2393 = vld [vmem:[#allocation11 + $0x60] sm:$0xff]
        %v2394 = vld [vmem:[#allocation11 + $0x68] sm:$0xff]
        %v2395 = vld [vmem:[#allocation11 + $0x70] sm:$0xff]
        %v2396 = vld [vmem:[#allocation11 + $0x78] sm:$0xff]
        %v2397 = vld [vmem:[#allocation11 + $0x80] sm:$0xff]
        %v2398 = vld [vmem:[#allocation11 + $0x88] sm:$0xff]
        %v2399 = vld [vmem:[#allocation11 + $0x90] sm:$0xff]
        %v2400 = vld [vmem:[#allocation11 + $0x98] sm:$0xff]
        %v2401 = vld [vmem:[#allocation11 + $0xa0] sm:$0xff]
        %v2402 = vld [vmem:[#allocation11 + $0xa8] sm:$0xff]
        %v2403 = vld [vmem:[#allocation11 + $0xb0] sm:$0xff]
        %v2404 = vld [vmem:[#allocation11 + $0xb8] sm:$0xff]
        %v2405 = vld [vmem:[#allocation11 + $0xc0] sm:$0xff]
        %v2406 = vld [vmem:[#allocation11 + $0xc8] sm:$0xff]
        %v2407 = vld [vmem:[#allocation11 + $0xd0] sm:$0xff]
        %v2408 = vld [vmem:[#allocation11 + $0xd8] sm:$0xff]
        %v2409 = vld [vmem:[#allocation11 + $0xe0] sm:$0xff]
        %v2410 = vld [vmem:[#allocation11 + $0xe8] sm:$0xff]
        %v2411 = vld [vmem:[#allocation11 + $0xf0] sm:$0xff]
        %v2412 = vld [vmem:[#allocation11 + $0xf8] sm:$0xff]
        %v2413 = vadd.f32 %v1372, %v2381
        %v2414 = vadd.f32 %v1375, %v2382
        %v2415 = vadd.f32 %v1380, %v2383
        %v2416 = vadd.f32 %v1383, %v2384
        %v2417 = vadd.f32 %v1388, %v2385
        %v2418 = vadd.f32 %v1391, %v2386
        %v2419 = vadd.f32 %v1396, %v2387
        %v2420 = vadd.f32 %v1399, %v2388
        %v2421 = vadd.f32 %v1461, %v2381
        %v2422 = vadd.f32 %v1464, %v2382
        %v2423 = vadd.f32 %v1469, %v2383
        %v2424 = vadd.f32 %v1472, %v2384
        %v2425 = vadd.f32 %v1477, %v2385
        %v2426 = vadd.f32 %v1480, %v2386
        %v2427 = vadd.f32 %v1485, %v2387
        %v2428 = vadd.f32 %v1488, %v2388
        %v2429 = vadd.f32 %v1550, %v2381
        %v2430 = vadd.f32 %v1553, %v2382
        %v2431 = vadd.f32 %v1558, %v2383
        %v2432 = vadd.f32 %v1561, %v2384
        %v2433 = vadd.f32 %v1566, %v2385
        %v2434 = vadd.f32 %v1569, %v2386
        %v2435 = vadd.f32 %v1574, %v2387
        %v2436 = vadd.f32 %v1577, %v2388
        %v2437 = vadd.f32 %v1639, %v2389
        %v2438 = vadd.f32 %v1642, %v2390
        %v2439 = vadd.f32 %v1647, %v2391
        %v2440 = vadd.f32 %v1650, %v2392
        %v2441 = vadd.f32 %v1655, %v2393
        %v2442 = vadd.f32 %v1658, %v2394
        %v2443 = vadd.f32 %v1663, %v2395
        %v2444 = vadd.f32 %v1666, %v2396
        %v2445 = vadd.f32 %v1728, %v2389
        %v2446 = vadd.f32 %v1731, %v2390
        %v2447 = vadd.f32 %v1736, %v2391
        %v2448 = vadd.f32 %v1739, %v2392
        %v2449 = vadd.f32 %v1744, %v2393
        %v2450 = vadd.f32 %v1747, %v2394
        %v2451 = vadd.f32 %v1752, %v2395
        %v2452 = vadd.f32 %v1755, %v2396
        %v2453 = vadd.f32 %v1817, %v2389
        %v2454 = vadd.f32 %v1820, %v2390
        %v2455 = vadd.f32 %v1825, %v2391
        %v2456 = vadd.f32 %v1828, %v2392
        %v2457 = vadd.f32 %v1833, %v2393
        %v2458 = vadd.f32 %v1836, %v2394
        %v2459 = vadd.f32 %v1841, %v2395
        %v2460 = vadd.f32 %v1844, %v2396
        %v2461 = vadd.f32 %v1906, %v2397
        %v2462 = vadd.f32 %v1909, %v2398
        %v2463 = vadd.f32 %v1914, %v2399
        %v2464 = vadd.f32 %v1917, %v2400
        %v2465 = vadd.f32 %v1922, %v2401
        %v2466 = vadd.f32 %v1925, %v2402
        %v2467 = vadd.f32 %v1930, %v2403
        %v2468 = vadd.f32 %v1933, %v2404
        %v2469 = vadd.f32 %v1995, %v2397
        %v2470 = vadd.f32 %v1998, %v2398
        %v2471 = vadd.f32 %v2003, %v2399
        %v2472 = vadd.f32 %v2006, %v2400
        %v2473 = vadd.f32 %v2011, %v2401
        %v2474 = vadd.f32 %v2014, %v2402
        %v2475 = vadd.f32 %v2019, %v2403
        %v2476 = vadd.f32 %v2022, %v2404
        %v2477 = vadd.f32 %v2084, %v2397
        %v2478 = vadd.f32 %v2087, %v2398
        %v2479 = vadd.f32 %v2092, %v2399
        %v2480 = vadd.f32 %v2095, %v2400
        %v2481 = vadd.f32 %v2100, %v2401
        %v2482 = vadd.f32 %v2103, %v2402
        %v2483 = vadd.f32 %v2108, %v2403
        %v2484 = vadd.f32 %v2111, %v2404
        %v2485 = vadd.f32 %v2173, %v2405
        %v2486 = vadd.f32 %v2176, %v2406
        %v2487 = vadd.f32 %v2181, %v2407
        %v2488 = vadd.f32 %v2184, %v2408
        %v2489 = vadd.f32 %v2189, %v2409
        %v2490 = vadd.f32 %v2192, %v2410
        %v2491 = vadd.f32 %v2197, %v2411
        %v2492 = vadd.f32 %v2200, %v2412
        %v2493 = vadd.f32 %v2262, %v2405
        %v2494 = vadd.f32 %v2265, %v2406
        %v2495 = vadd.f32 %v2270, %v2407
        %v2496 = vadd.f32 %v2273, %v2408
        %v2497 = vadd.f32 %v2278, %v2409
        %v2498 = vadd.f32 %v2281, %v2410
        %v2499 = vadd.f32 %v2286, %v2411
        %v2500 = vadd.f32 %v2289, %v2412
        %v2501 = vadd.f32 %v2351, %v2405
        %v2502 = vadd.f32 %v2354, %v2406
        %v2503 = vadd.f32 %v2359, %v2407
        %v2504 = vadd.f32 %v2362, %v2408
        %v2505 = vadd.f32 %v2367, %v2409
        %v2506 = vadd.f32 %v2370, %v2410
        %v2507 = vadd.f32 %v2375, %v2411
        %v2508 = vadd.f32 %v2378, %v2412
        %vm2509 = vcmask 523264
        %v2510 = vsel %vm2509, %v2413, -inf
        %2511 = vmax.xlane.f32.xlu0 %v2510
        %v2512 = vpop.xlane.xlu0 %2511
        %v2513 = vsel %vm2509, %v2414, -inf
        %2514 = vmax.xlane.f32.xlu0 %v2513
        %v2515 = vpop.xlane.xlu0 %2514
        %v2516 = vsel %vm2509, %v2415, -inf
        %2517 = vmax.xlane.f32.xlu0 %v2516
        %v2518 = vpop.xlane.xlu0 %2517
        %v2519 = vsel %vm2509, %v2416, -inf
        %2520 = vmax.xlane.f32.xlu0 %v2519
        %v2521 = vpop.xlane.xlu0 %2520
        %v2522 = vsel %vm2509, %v2417, -inf
        %2523 = vmax.xlane.f32.xlu0 %v2522
        %v2524 = vpop.xlane.xlu0 %2523
        %v2525 = vsel %vm2509, %v2418, -inf
        %2526 = vmax.xlane.f32.xlu0 %v2525
        %v2527 = vpop.xlane.xlu0 %2526
        %v2528 = vsel %vm2509, %v2419, -inf
        %2529 = vmax.xlane.f32.xlu0 %v2528
        %v2530 = vpop.xlane.xlu0 %2529
        %v2531 = vsel %vm2509, %v2420, -inf
        %2532 = vmax.xlane.f32.xlu0 %v2531
        %v2533 = vpop.xlane.xlu0 %2532
        %v2534 = vsel %vm2509, %v2421, -inf
        %2535 = vmax.xlane.f32.xlu0 %v2534
        %v2536 = vpop.xlane.xlu0 %2535
        %v2537 = vsel %vm2509, %v2422, -inf
        %2538 = vmax.xlane.f32.xlu0 %v2537
        %v2539 = vpop.xlane.xlu0 %2538
        %v2540 = vsel %vm2509, %v2423, -inf
        %2541 = vmax.xlane.f32.xlu0 %v2540
        %v2542 = vpop.xlane.xlu0 %2541
        %v2543 = vsel %vm2509, %v2424, -inf
        %2544 = vmax.xlane.f32.xlu0 %v2543
        %v2545 = vpop.xlane.xlu0 %2544
        %v2546 = vsel %vm2509, %v2425, -inf
        %2547 = vmax.xlane.f32.xlu0 %v2546
        %v2548 = vpop.xlane.xlu0 %2547
        %v2549 = vsel %vm2509, %v2426, -inf
        %2550 = vmax.xlane.f32.xlu0 %v2549
        %v2551 = vpop.xlane.xlu0 %2550
        %v2552 = vsel %vm2509, %v2427, -inf
        %2553 = vmax.xlane.f32.xlu0 %v2552
        %v2554 = vpop.xlane.xlu0 %2553
        %v2555 = vsel %vm2509, %v2428, -inf
        %2556 = vmax.xlane.f32.xlu0 %v2555
        %v2557 = vpop.xlane.xlu0 %2556
        %v2558 = vsel %vm2509, %v2429, -inf
        %2559 = vmax.xlane.f32.xlu0 %v2558
        %v2560 = vpop.xlane.xlu0 %2559
        %v2561 = vsel %vm2509, %v2430, -inf
        %2562 = vmax.xlane.f32.xlu0 %v2561
        %v2563 = vpop.xlane.xlu0 %2562
        %v2564 = vsel %vm2509, %v2431, -inf
        %2565 = vmax.xlane.f32.xlu0 %v2564
        %v2566 = vpop.xlane.xlu0 %2565
        %v2567 = vsel %vm2509, %v2432, -inf
        %2568 = vmax.xlane.f32.xlu0 %v2567
        %v2569 = vpop.xlane.xlu0 %2568
        %v2570 = vsel %vm2509, %v2433, -inf
        %2571 = vmax.xlane.f32.xlu0 %v2570
        %v2572 = vpop.xlane.xlu0 %2571
        %v2573 = vsel %vm2509, %v2434, -inf
        %2574 = vmax.xlane.f32.xlu0 %v2573
        %v2575 = vpop.xlane.xlu0 %2574
        %v2576 = vsel %vm2509, %v2435, -inf
        %2577 = vmax.xlane.f32.xlu0 %v2576
        %v2578 = vpop.xlane.xlu0 %2577
        %v2579 = vsel %vm2509, %v2436, -inf
        %2580 = vmax.xlane.f32.xlu0 %v2579
        %v2581 = vpop.xlane.xlu0 %2580
        %v2582 = vsel %vm2509, %v2437, -inf
        %2583 = vmax.xlane.f32.xlu0 %v2582
        %v2584 = vpop.xlane.xlu0 %2583
        %v2585 = vsel %vm2509, %v2438, -inf
        %2586 = vmax.xlane.f32.xlu0 %v2585
        %v2587 = vpop.xlane.xlu0 %2586
        %v2588 = vsel %vm2509, %v2439, -inf
        %2589 = vmax.xlane.f32.xlu0 %v2588
        %v2590 = vpop.xlane.xlu0 %2589
        %v2591 = vsel %vm2509, %v2440, -inf
        %2592 = vmax.xlane.f32.xlu0 %v2591
        %v2593 = vpop.xlane.xlu0 %2592
        %v2594 = vsel %vm2509, %v2441, -inf
        %2595 = vmax.xlane.f32.xlu0 %v2594
        %v2596 = vpop.xlane.xlu0 %2595
        %v2597 = vsel %vm2509, %v2442, -inf
        %2598 = vmax.xlane.f32.xlu0 %v2597
        %v2599 = vpop.xlane.xlu0 %2598
        %v2600 = vsel %vm2509, %v2443, -inf
        %2601 = vmax.xlane.f32.xlu0 %v2600
        %v2602 = vpop.xlane.xlu0 %2601
        %v2603 = vsel %vm2509, %v2444, -inf
        %2604 = vmax.xlane.f32.xlu0 %v2603
        %v2605 = vpop.xlane.xlu0 %2604
        %v2606 = vsel %vm2509, %v2445, -inf
        %2607 = vmax.xlane.f32.xlu0 %v2606
        %v2608 = vpop.xlane.xlu0 %2607
        %v2609 = vsel %vm2509, %v2446, -inf
        %2610 = vmax.xlane.f32.xlu0 %v2609
        %v2611 = vpop.xlane.xlu0 %2610
        %v2612 = vsel %vm2509, %v2447, -inf
        %2613 = vmax.xlane.f32.xlu0 %v2612
        %v2614 = vpop.xlane.xlu0 %2613
        %v2615 = vsel %vm2509, %v2448, -inf
        %2616 = vmax.xlane.f32.xlu0 %v2615
        %v2617 = vpop.xlane.xlu0 %2616
        %v2618 = vsel %vm2509, %v2449, -inf
        %2619 = vmax.xlane.f32.xlu0 %v2618
        %v2620 = vpop.xlane.xlu0 %2619
        %v2621 = vsel %vm2509, %v2450, -inf
        %2622 = vmax.xlane.f32.xlu0 %v2621
        %v2623 = vpop.xlane.xlu0 %2622
        %v2624 = vsel %vm2509, %v2451, -inf
        %2625 = vmax.xlane.f32.xlu0 %v2624
        %v2626 = vpop.xlane.xlu0 %2625
        %v2627 = vsel %vm2509, %v2452, -inf
        %2628 = vmax.xlane.f32.xlu0 %v2627
        %v2629 = vpop.xlane.xlu0 %2628
        %v2630 = vsel %vm2509, %v2453, -inf
        %2631 = vmax.xlane.f32.xlu0 %v2630
        %v2632 = vpop.xlane.xlu0 %2631
        %v2633 = vsel %vm2509, %v2454, -inf
        %2634 = vmax.xlane.f32.xlu0 %v2633
        %v2635 = vpop.xlane.xlu0 %2634
        %v2636 = vsel %vm2509, %v2455, -inf
        %2637 = vmax.xlane.f32.xlu0 %v2636
        %v2638 = vpop.xlane.xlu0 %2637
        %v2639 = vsel %vm2509, %v2456, -inf
        %2640 = vmax.xlane.f32.xlu0 %v2639
        %v2641 = vpop.xlane.xlu0 %2640
        %v2642 = vsel %vm2509, %v2457, -inf
        %2643 = vmax.xlane.f32.xlu0 %v2642
        %v2644 = vpop.xlane.xlu0 %2643
        %v2645 = vsel %vm2509, %v2458, -inf
        %2646 = vmax.xlane.f32.xlu0 %v2645
        %v2647 = vpop.xlane.xlu0 %2646
        %v2648 = vsel %vm2509, %v2459, -inf
        %2649 = vmax.xlane.f32.xlu0 %v2648
        %v2650 = vpop.xlane.xlu0 %2649
        %v2651 = vsel %vm2509, %v2460, -inf
        %2652 = vmax.xlane.f32.xlu0 %v2651
        %v2653 = vpop.xlane.xlu0 %2652
        %v2654 = vsel %vm2509, %v2461, -inf
        %2655 = vmax.xlane.f32.xlu0 %v2654
        %v2656 = vpop.xlane.xlu0 %2655
        %v2657 = vsel %vm2509, %v2462, -inf
        %2658 = vmax.xlane.f32.xlu0 %v2657
        %v2659 = vpop.xlane.xlu0 %2658
        %v2660 = vsel %vm2509, %v2463, -inf
        %2661 = vmax.xlane.f32.xlu0 %v2660
        %v2662 = vpop.xlane.xlu0 %2661
        %v2663 = vsel %vm2509, %v2464, -inf
        %2664 = vmax.xlane.f32.xlu0 %v2663
        %v2665 = vpop.xlane.xlu0 %2664
        %v2666 = vsel %vm2509, %v2465, -inf
        %2667 = vmax.xlane.f32.xlu0 %v2666
        %v2668 = vpop.xlane.xlu0 %2667
        %v2669 = vsel %vm2509, %v2466, -inf
        %2670 = vmax.xlane.f32.xlu0 %v2669
        %v2671 = vpop.xlane.xlu0 %2670
        %v2672 = vsel %vm2509, %v2467, -inf
        %2673 = vmax.xlane.f32.xlu0 %v2672
        %v2674 = vpop.xlane.xlu0 %2673
        %v2675 = vsel %vm2509, %v2468, -inf
        %2676 = vmax.xlane.f32.xlu0 %v2675
        %v2677 = vpop.xlane.xlu0 %2676
        %v2678 = vsel %vm2509, %v2469, -inf
        %2679 = vmax.xlane.f32.xlu0 %v2678
        %v2680 = vpop.xlane.xlu0 %2679
        %v2681 = vsel %vm2509, %v2470, -inf
        %2682 = vmax.xlane.f32.xlu0 %v2681
        %v2683 = vpop.xlane.xlu0 %2682
        %v2684 = vsel %vm2509, %v2471, -inf
        %2685 = vmax.xlane.f32.xlu0 %v2684
        %v2686 = vpop.xlane.xlu0 %2685
        %v2687 = vsel %vm2509, %v2472, -inf
        %2688 = vmax.xlane.f32.xlu0 %v2687
        %v2689 = vpop.xlane.xlu0 %2688
        %v2690 = vsel %vm2509, %v2473, -inf
        %2691 = vmax.xlane.f32.xlu0 %v2690
        %v2692 = vpop.xlane.xlu0 %2691
        %v2693 = vsel %vm2509, %v2474, -inf
        %2694 = vmax.xlane.f32.xlu0 %v2693
        %v2695 = vpop.xlane.xlu0 %2694
        %v2696 = vsel %vm2509, %v2475, -inf
        %2697 = vmax.xlane.f32.xlu0 %v2696
        %v2698 = vpop.xlane.xlu0 %2697
        %v2699 = vsel %vm2509, %v2476, -inf
        %2700 = vmax.xlane.f32.xlu0 %v2699
        %v2701 = vpop.xlane.xlu0 %2700
        %v2702 = vsel %vm2509, %v2477, -inf
        %2703 = vmax.xlane.f32.xlu0 %v2702
        %v2704 = vpop.xlane.xlu0 %2703
        %v2705 = vsel %vm2509, %v2478, -inf
        %2706 = vmax.xlane.f32.xlu0 %v2705
        %v2707 = vpop.xlane.xlu0 %2706
        %v2708 = vsel %vm2509, %v2479, -inf
        %2709 = vmax.xlane.f32.xlu0 %v2708
        %v2710 = vpop.xlane.xlu0 %2709
        %v2711 = vsel %vm2509, %v2480, -inf
        %2712 = vmax.xlane.f32.xlu0 %v2711
        %v2713 = vpop.xlane.xlu0 %2712
        %v2714 = vsel %vm2509, %v2481, -inf
        %2715 = vmax.xlane.f32.xlu0 %v2714
        %v2716 = vpop.xlane.xlu0 %2715
        %v2717 = vsel %vm2509, %v2482, -inf
        %2718 = vmax.xlane.f32.xlu0 %v2717
        %v2719 = vpop.xlane.xlu0 %2718
        %v2720 = vsel %vm2509, %v2483, -inf
        %2721 = vmax.xlane.f32.xlu0 %v2720
        %v2722 = vpop.xlane.xlu0 %2721
        %v2723 = vsel %vm2509, %v2484, -inf
        %2724 = vmax.xlane.f32.xlu0 %v2723
        %v2725 = vpop.xlane.xlu0 %2724
        %v2726 = vsel %vm2509, %v2485, -inf
        %2727 = vmax.xlane.f32.xlu0 %v2726
        %v2728 = vpop.xlane.xlu0 %2727
        %v2729 = vsel %vm2509, %v2486, -inf
        %2730 = vmax.xlane.f32.xlu0 %v2729
        %v2731 = vpop.xlane.xlu0 %2730
        %v2732 = vsel %vm2509, %v2487, -inf
        %2733 = vmax.xlane.f32.xlu0 %v2732
        %v2734 = vpop.xlane.xlu0 %2733
        %v2735 = vsel %vm2509, %v2488, -inf
        %2736 = vmax.xlane.f32.xlu0 %v2735
        %v2737 = vpop.xlane.xlu0 %2736
        %v2738 = vsel %vm2509, %v2489, -inf
        %2739 = vmax.xlane.f32.xlu0 %v2738
        %v2740 = vpop.xlane.xlu0 %2739
        %v2741 = vsel %vm2509, %v2490, -inf
        %2742 = vmax.xlane.f32.xlu0 %v2741
        %v2743 = vpop.xlane.xlu0 %2742
        %v2744 = vsel %vm2509, %v2491, -inf
        %2745 = vmax.xlane.f32.xlu0 %v2744
        %v2746 = vpop.xlane.xlu0 %2745
        %v2747 = vsel %vm2509, %v2492, -inf
        %2748 = vmax.xlane.f32.xlu0 %v2747
        %v2749 = vpop.xlane.xlu0 %2748
        %v2750 = vsel %vm2509, %v2493, -inf
        %2751 = vmax.xlane.f32.xlu0 %v2750
        %v2752 = vpop.xlane.xlu0 %2751
        %v2753 = vsel %vm2509, %v2494, -inf
        %2754 = vmax.xlane.f32.xlu0 %v2753
        %v2755 = vpop.xlane.xlu0 %2754
        %v2756 = vsel %vm2509, %v2495, -inf
        %2757 = vmax.xlane.f32.xlu0 %v2756
        %v2758 = vpop.xlane.xlu0 %2757
        %v2759 = vsel %vm2509, %v2496, -inf
        %2760 = vmax.xlane.f32.xlu0 %v2759
        %v2761 = vpop.xlane.xlu0 %2760
        %v2762 = vsel %vm2509, %v2497, -inf
        %2763 = vmax.xlane.f32.xlu0 %v2762
        %v2764 = vpop.xlane.xlu0 %2763
        %v2765 = vsel %vm2509, %v2498, -inf
        %2766 = vmax.xlane.f32.xlu0 %v2765
        %v2767 = vpop.xlane.xlu0 %2766
        %v2768 = vsel %vm2509, %v2499, -inf
        %2769 = vmax.xlane.f32.xlu0 %v2768
        %v2770 = vpop.xlane.xlu0 %2769
        %v2771 = vsel %vm2509, %v2500, -inf
        %2772 = vmax.xlane.f32.xlu0 %v2771
        %v2773 = vpop.xlane.xlu0 %2772
        %v2774 = vsel %vm2509, %v2501, -inf
        %2775 = vmax.xlane.f32.xlu0 %v2774
        %v2776 = vpop.xlane.xlu0 %2775
        %v2777 = vsel %vm2509, %v2502, -inf
        %2778 = vmax.xlane.f32.xlu0 %v2777
        %v2779 = vpop.xlane.xlu0 %2778
        %v2780 = vsel %vm2509, %v2503, -inf
        %2781 = vmax.xlane.f32.xlu0 %v2780
        %v2782 = vpop.xlane.xlu0 %2781
        %v2783 = vsel %vm2509, %v2504, -inf
        %2784 = vmax.xlane.f32.xlu0 %v2783
        %v2785 = vpop.xlane.xlu0 %2784
        %v2786 = vsel %vm2509, %v2505, -inf
        %2787 = vmax.xlane.f32.xlu0 %v2786
        %v2788 = vpop.xlane.xlu0 %2787
        %v2789 = vsel %vm2509, %v2506, -inf
        %2790 = vmax.xlane.f32.xlu0 %v2789
        %v2791 = vpop.xlane.xlu0 %2790
        %v2792 = vsel %vm2509, %v2507, -inf
        %2793 = vmax.xlane.f32.xlu0 %v2792
        %v2794 = vpop.xlane.xlu0 %2793
        %v2795 = vsel %vm2509, %v2508, -inf
        %2796 = vmax.xlane.f32.xlu0 %v2795
        %v2797 = vpop.xlane.xlu0 %2796
        %v2798 = vsub.f32 %v2413, %v2512
        %v2799 = vsub.f32 %v2414, %v2515
        %v2800 = vsub.f32 %v2415, %v2518
        %v2801 = vsub.f32 %v2416, %v2521
        %v2802 = vsub.f32 %v2417, %v2524
        %v2803 = vsub.f32 %v2418, %v2527
        %v2804 = vsub.f32 %v2419, %v2530
        %v2805 = vsub.f32 %v2420, %v2533
        %v2806 = vsub.f32 %v2421, %v2536
        %v2807 = vsub.f32 %v2422, %v2539
        %v2808 = vsub.f32 %v2423, %v2542
        %v2809 = vsub.f32 %v2424, %v2545
        %v2810 = vsub.f32 %v2425, %v2548
        %v2811 = vsub.f32 %v2426, %v2551
        %v2812 = vsub.f32 %v2427, %v2554
        %v2813 = vsub.f32 %v2428, %v2557
        %v2814 = vsub.f32 %v2429, %v2560
        %v2815 = vsub.f32 %v2430, %v2563
        %v2816 = vsub.f32 %v2431, %v2566
        %v2817 = vsub.f32 %v2432, %v2569
        %v2818 = vsub.f32 %v2433, %v2572
        %v2819 = vsub.f32 %v2434, %v2575
        %v2820 = vsub.f32 %v2435, %v2578
        %v2821 = vsub.f32 %v2436, %v2581
        %v2822 = vsub.f32 %v2437, %v2584
        %v2823 = vsub.f32 %v2438, %v2587
        %v2824 = vsub.f32 %v2439, %v2590
        %v2825 = vsub.f32 %v2440, %v2593
        %v2826 = vsub.f32 %v2441, %v2596
        %v2827 = vsub.f32 %v2442, %v2599
        %v2828 = vsub.f32 %v2443, %v2602
        %v2829 = vsub.f32 %v2444, %v2605
        %v2830 = vsub.f32 %v2445, %v2608
        %v2831 = vsub.f32 %v2446, %v2611
        %v2832 = vsub.f32 %v2447, %v2614
        %v2833 = vsub.f32 %v2448, %v2617
        %v2834 = vsub.f32 %v2449, %v2620
        %v2835 = vsub.f32 %v2450, %v2623
        %v2836 = vsub.f32 %v2451, %v2626
        %v2837 = vsub.f32 %v2452, %v2629
        %v2838 = vsub.f32 %v2453, %v2632
        %v2839 = vsub.f32 %v2454, %v2635
        %v2840 = vsub.f32 %v2455, %v2638
        %v2841 = vsub.f32 %v2456, %v2641
        %v2842 = vsub.f32 %v2457, %v2644
        %v2843 = vsub.f32 %v2458, %v2647
        %v2844 = vsub.f32 %v2459, %v2650
        %v2845 = vsub.f32 %v2460, %v2653
        %v2846 = vsub.f32 %v2461, %v2656
        %v2847 = vsub.f32 %v2462, %v2659
        %v2848 = vsub.f32 %v2463, %v2662
        %v2849 = vsub.f32 %v2464, %v2665
        %v2850 = vsub.f32 %v2465, %v2668
        %v2851 = vsub.f32 %v2466, %v2671
        %v2852 = vsub.f32 %v2467, %v2674
        %v2853 = vsub.f32 %v2468, %v2677
        %v2854 = vsub.f32 %v2469, %v2680
        %v2855 = vsub.f32 %v2470, %v2683
        %v2856 = vsub.f32 %v2471, %v2686
        %v2857 = vsub.f32 %v2472, %v2689
        %v2858 = vsub.f32 %v2473, %v2692
        %v2859 = vsub.f32 %v2474, %v2695
        %v2860 = vsub.f32 %v2475, %v2698
        %v2861 = vsub.f32 %v2476, %v2701
        %v2862 = vsub.f32 %v2477, %v2704
        %v2863 = vsub.f32 %v2478, %v2707
        %v2864 = vsub.f32 %v2479, %v2710
        %v2865 = vsub.f32 %v2480, %v2713
        %v2866 = vsub.f32 %v2481, %v2716
        %v2867 = vsub.f32 %v2482, %v2719
        %v2868 = vsub.f32 %v2483, %v2722
        %v2869 = vsub.f32 %v2484, %v2725
        %v2870 = vsub.f32 %v2485, %v2728
        %v2871 = vsub.f32 %v2486, %v2731
        %v2872 = vsub.f32 %v2487, %v2734
        %v2873 = vsub.f32 %v2488, %v2737
        %v2874 = vsub.f32 %v2489, %v2740
        %v2875 = vsub.f32 %v2490, %v2743
        %v2876 = vsub.f32 %v2491, %v2746
        %v2877 = vsub.f32 %v2492, %v2749
        %v2878 = vsub.f32 %v2493, %v2752
        %v2879 = vsub.f32 %v2494, %v2755
        %v2880 = vsub.f32 %v2495, %v2758
        %v2881 = vsub.f32 %v2496, %v2761
        %v2882 = vsub.f32 %v2497, %v2764
        %v2883 = vsub.f32 %v2498, %v2767
        %v2884 = vsub.f32 %v2499, %v2770
        %v2885 = vsub.f32 %v2500, %v2773
        %v2886 = vsub.f32 %v2501, %v2776
        %v2887 = vsub.f32 %v2502, %v2779
        %v2888 = vsub.f32 %v2503, %v2782
        %v2889 = vsub.f32 %v2504, %v2785
        %v2890 = vsub.f32 %v2505, %v2788
        %v2891 = vsub.f32 %v2506, %v2791
        %v2892 = vsub.f32 %v2507, %v2794
        %v2893 = vsub.f32 %v2508, %v2797
        %v2894 = vmul.f32 %v2798, 1.442695
        %v2895 = vpow.pop %v2894
        %v2896 = vmul.f32 %v2799, 1.442695
        %v2897 = vpow.pop %v2896
        %v2898 = vmul.f32 %v2800, 1.442695
        %v2899 = vpow.pop %v2898
        %v2900 = vmul.f32 %v2801, 1.442695
        %v2901 = vpow.pop %v2900
        %v2902 = vmul.f32 %v2802, 1.442695
        %v2903 = vpow.pop %v2902
        %v2904 = vmul.f32 %v2803, 1.442695
        %v2905 = vpow.pop %v2904
        %v2906 = vmul.f32 %v2804, 1.442695
        %v2907 = vpow.pop %v2906
        %v2908 = vmul.f32 %v2805, 1.442695
        %v2909 = vpow.pop %v2908
        %v2910 = vmul.f32 %v2806, 1.442695
        %v2911 = vpow.pop %v2910
        %v2912 = vmul.f32 %v2807, 1.442695
        %v2913 = vpow.pop %v2912
        %v2914 = vmul.f32 %v2808, 1.442695
        %v2915 = vpow.pop %v2914
        %v2916 = vmul.f32 %v2809, 1.442695
        %v2917 = vpow.pop %v2916
        %v2918 = vmul.f32 %v2810, 1.442695
        %v2919 = vpow.pop %v2918
        %v2920 = vmul.f32 %v2811, 1.442695
        %v2921 = vpow.pop %v2920
        %v2922 = vmul.f32 %v2812, 1.442695
        %v2923 = vpow.pop %v2922
        %v2924 = vmul.f32 %v2813, 1.442695
        %v2925 = vpow.pop %v2924
        %v2926 = vmul.f32 %v2814, 1.442695
        %v2927 = vpow.pop %v2926
        %v2928 = vmul.f32 %v2815, 1.442695
        %v2929 = vpow.pop %v2928
        %v2930 = vmul.f32 %v2816, 1.442695
        %v2931 = vpow.pop %v2930
        %v2932 = vmul.f32 %v2817, 1.442695
        %v2933 = vpow.pop %v2932
        %v2934 = vmul.f32 %v2818, 1.442695
        %v2935 = vpow.pop %v2934
        %v2936 = vmul.f32 %v2819, 1.442695
        %v2937 = vpow.pop %v2936
        %v2938 = vmul.f32 %v2820, 1.442695
        %v2939 = vpow.pop %v2938
        %v2940 = vmul.f32 %v2821, 1.442695
        %v2941 = vpow.pop %v2940
        %v2942 = vmul.f32 %v2822, 1.442695
        %v2943 = vpow.pop %v2942
        %v2944 = vmul.f32 %v2823, 1.442695
        %v2945 = vpow.pop %v2944
        %v2946 = vmul.f32 %v2824, 1.442695
        %v2947 = vpow.pop %v2946
        %v2948 = vmul.f32 %v2825, 1.442695
        %v2949 = vpow.pop %v2948
        %v2950 = vmul.f32 %v2826, 1.442695
        %v2951 = vpow.pop %v2950
        %v2952 = vmul.f32 %v2827, 1.442695
        %v2953 = vpow.pop %v2952
        %v2954 = vmul.f32 %v2828, 1.442695
        %v2955 = vpow.pop %v2954
        %v2956 = vmul.f32 %v2829, 1.442695
        %v2957 = vpow.pop %v2956
        %v2958 = vmul.f32 %v2830, 1.442695
        %v2959 = vpow.pop %v2958
        %v2960 = vmul.f32 %v2831, 1.442695
        %v2961 = vpow.pop %v2960
        %v2962 = vmul.f32 %v2832, 1.442695
        %v2963 = vpow.pop %v2962
        %v2964 = vmul.f32 %v2833, 1.442695
        %v2965 = vpow.pop %v2964
        %v2966 = vmul.f32 %v2834, 1.442695
        %v2967 = vpow.pop %v2966
        %v2968 = vmul.f32 %v2835, 1.442695
        %v2969 = vpow.pop %v2968
        %v2970 = vmul.f32 %v2836, 1.442695
        %v2971 = vpow.pop %v2970
        %v2972 = vmul.f32 %v2837, 1.442695
        %v2973 = vpow.pop %v2972
        %v2974 = vmul.f32 %v2838, 1.442695
        %v2975 = vpow.pop %v2974
        %v2976 = vmul.f32 %v2839, 1.442695
        %v2977 = vpow.pop %v2976
        %v2978 = vmul.f32 %v2840, 1.442695
        %v2979 = vpow.pop %v2978
        %v2980 = vmul.f32 %v2841, 1.442695
        %v2981 = vpow.pop %v2980
        %v2982 = vmul.f32 %v2842, 1.442695
        %v2983 = vpow.pop %v2982
        %v2984 = vmul.f32 %v2843, 1.442695
        %v2985 = vpow.pop %v2984
        %v2986 = vmul.f32 %v2844, 1.442695
        %v2987 = vpow.pop %v2986
        %v2988 = vmul.f32 %v2845, 1.442695
        %v2989 = vpow.pop %v2988
        %v2990 = vmul.f32 %v2846, 1.442695
        %v2991 = vpow.pop %v2990
        %v2992 = vmul.f32 %v2847, 1.442695
        %v2993 = vpow.pop %v2992
        %v2994 = vmul.f32 %v2848, 1.442695
        %v2995 = vpow.pop %v2994
        %v2996 = vmul.f32 %v2849, 1.442695
        %v2997 = vpow.pop %v2996
        %v2998 = vmul.f32 %v2850, 1.442695
        %v2999 = vpow.pop %v2998
        %v3000 = vmul.f32 %v2851, 1.442695
        %v3001 = vpow.pop %v3000
        %v3002 = vmul.f32 %v2852, 1.442695
        %v3003 = vpow.pop %v3002
        %v3004 = vmul.f32 %v2853, 1.442695
        %v3005 = vpow.pop %v3004
        %v3006 = vmul.f32 %v2854, 1.442695
        %v3007 = vpow.pop %v3006
        %v3008 = vmul.f32 %v2855, 1.442695
        %v3009 = vpow.pop %v3008
        %v3010 = vmul.f32 %v2856, 1.442695
        %v3011 = vpow.pop %v3010
        %v3012 = vmul.f32 %v2857, 1.442695
        %v3013 = vpow.pop %v3012
        %v3014 = vmul.f32 %v2858, 1.442695
        %v3015 = vpow.pop %v3014
        %v3016 = vmul.f32 %v2859, 1.442695
        %v3017 = vpow.pop %v3016
        %v3018 = vmul.f32 %v2860, 1.442695
        %v3019 = vpow.pop %v3018
        %v3020 = vmul.f32 %v2861, 1.442695
        %v3021 = vpow.pop %v3020
        %v3022 = vmul.f32 %v2862, 1.442695
        %v3023 = vpow.pop %v3022
        %v3024 = vmul.f32 %v2863, 1.442695
        %v3025 = vpow.pop %v3024
        %v3026 = vmul.f32 %v2864, 1.442695
        %v3027 = vpow.pop %v3026
        %v3028 = vmul.f32 %v2865, 1.442695
        %v3029 = vpow.pop %v3028
        %v3030 = vmul.f32 %v2866, 1.442695
        %v3031 = vpow.pop %v3030
        %v3032 = vmul.f32 %v2867, 1.442695
        %v3033 = vpow.pop %v3032
        %v3034 = vmul.f32 %v2868, 1.442695
        %v3035 = vpow.pop %v3034
        %v3036 = vmul.f32 %v2869, 1.442695
        %v3037 = vpow.pop %v3036
        %v3038 = vmul.f32 %v2870, 1.442695
        %v3039 = vpow.pop %v3038
        %v3040 = vmul.f32 %v2871, 1.442695
        %v3041 = vpow.pop %v3040
        %v3042 = vmul.f32 %v2872, 1.442695
        %v3043 = vpow.pop %v3042
        %v3044 = vmul.f32 %v2873, 1.442695
        %v3045 = vpow.pop %v3044
        %v3046 = vmul.f32 %v2874, 1.442695
        %v3047 = vpow.pop %v3046
        %v3048 = vmul.f32 %v2875, 1.442695
        %v3049 = vpow.pop %v3048
        %v3050 = vmul.f32 %v2876, 1.442695
        %v3051 = vpow.pop %v3050
        %v3052 = vmul.f32 %v2877, 1.442695
        %v3053 = vpow.pop %v3052
        %v3054 = vmul.f32 %v2878, 1.442695
        %v3055 = vpow.pop %v3054
        %v3056 = vmul.f32 %v2879, 1.442695
        %v3057 = vpow.pop %v3056
        %v3058 = vmul.f32 %v2880, 1.442695
        %v3059 = vpow.pop %v3058
        %v3060 = vmul.f32 %v2881, 1.442695
        %v3061 = vpow.pop %v3060
        %v3062 = vmul.f32 %v2882, 1.442695
        %v3063 = vpow.pop %v3062
        %v3064 = vmul.f32 %v2883, 1.442695
        %v3065 = vpow.pop %v3064
        %v3066 = vmul.f32 %v2884, 1.442695
        %v3067 = vpow.pop %v3066
        %v3068 = vmul.f32 %v2885, 1.442695
        %v3069 = vpow.pop %v3068
        %v3070 = vmul.f32 %v2886, 1.442695
        %v3071 = vpow.pop %v3070
        %v3072 = vmul.f32 %v2887, 1.442695
        %v3073 = vpow.pop %v3072
        %v3074 = vmul.f32 %v2888, 1.442695
        %v3075 = vpow.pop %v3074
        %v3076 = vmul.f32 %v2889, 1.442695
        %v3077 = vpow.pop %v3076
        %v3078 = vmul.f32 %v2890, 1.442695
        %v3079 = vpow.pop %v3078
        %v3080 = vmul.f32 %v2891, 1.442695
        %v3081 = vpow.pop %v3080
        %v3082 = vmul.f32 %v2892, 1.442695
        %v3083 = vpow.pop %v3082
        %v3084 = vmul.f32 %v2893, 1.442695
        %v3085 = vpow.pop %v3084
        %v3086 = vsel %vm2509, %v2895, 0.0
        %3087 = vadd.xlane.f32.xlu0 %v3086
        %v3088 = vpop.xlane.xlu0 %3087
        %v3089 = vsel %vm2509, %v2897, 0.0
        %3090 = vadd.xlane.f32.xlu0 %v3089
        %v3091 = vpop.xlane.xlu0 %3090
        %v3092 = vsel %vm2509, %v2899, 0.0
        %3093 = vadd.xlane.f32.xlu0 %v3092
        %v3094 = vpop.xlane.xlu0 %3093
        %v3095 = vsel %vm2509, %v2901, 0.0
        %3096 = vadd.xlane.f32.xlu0 %v3095
        %v3097 = vpop.xlane.xlu0 %3096
        %v3098 = vsel %vm2509, %v2903, 0.0
        %3099 = vadd.xlane.f32.xlu0 %v3098
        %v3100 = vpop.xlane.xlu0 %3099
        %v3101 = vsel %vm2509, %v2905, 0.0
        %3102 = vadd.xlane.f32.xlu0 %v3101
        %v3103 = vpop.xlane.xlu0 %3102
        %v3104 = vsel %vm2509, %v2907, 0.0
        %3105 = vadd.xlane.f32.xlu0 %v3104
        %v3106 = vpop.xlane.xlu0 %3105
        %v3107 = vsel %vm2509, %v2909, 0.0
        %3108 = vadd.xlane.f32.xlu0 %v3107
        %v3109 = vpop.xlane.xlu0 %3108
        %v3110 = vsel %vm2509, %v2911, 0.0
        %3111 = vadd.xlane.f32.xlu0 %v3110
        %v3112 = vpop.xlane.xlu0 %3111
        %v3113 = vsel %vm2509, %v2913, 0.0
        %3114 = vadd.xlane.f32.xlu0 %v3113
        %v3115 = vpop.xlane.xlu0 %3114
        %v3116 = vsel %vm2509, %v2915, 0.0
        %3117 = vadd.xlane.f32.xlu0 %v3116
        %v3118 = vpop.xlane.xlu0 %3117
        %v3119 = vsel %vm2509, %v2917, 0.0
        %3120 = vadd.xlane.f32.xlu0 %v3119
        %v3121 = vpop.xlane.xlu0 %3120
        %v3122 = vsel %vm2509, %v2919, 0.0
        %3123 = vadd.xlane.f32.xlu0 %v3122
        %v3124 = vpop.xlane.xlu0 %3123
        %v3125 = vsel %vm2509, %v2921, 0.0
        %3126 = vadd.xlane.f32.xlu0 %v3125
        %v3127 = vpop.xlane.xlu0 %3126
        %v3128 = vsel %vm2509, %v2923, 0.0
        %3129 = vadd.xlane.f32.xlu0 %v3128
        %v3130 = vpop.xlane.xlu0 %3129
        %v3131 = vsel %vm2509, %v2925, 0.0
        %3132 = vadd.xlane.f32.xlu0 %v3131
        %v3133 = vpop.xlane.xlu0 %3132
        %v3134 = vsel %vm2509, %v2927, 0.0
        %3135 = vadd.xlane.f32.xlu0 %v3134
        %v3136 = vpop.xlane.xlu0 %3135
        %v3137 = vsel %vm2509, %v2929, 0.0
        %3138 = vadd.xlane.f32.xlu0 %v3137
        %v3139 = vpop.xlane.xlu0 %3138
        %v3140 = vsel %vm2509, %v2931, 0.0
        %3141 = vadd.xlane.f32.xlu0 %v3140
        %v3142 = vpop.xlane.xlu0 %3141
        %v3143 = vsel %vm2509, %v2933, 0.0
        %3144 = vadd.xlane.f32.xlu0 %v3143
        %v3145 = vpop.xlane.xlu0 %3144
        %v3146 = vsel %vm2509, %v2935, 0.0
        %3147 = vadd.xlane.f32.xlu0 %v3146
        %v3148 = vpop.xlane.xlu0 %3147
        %v3149 = vsel %vm2509, %v2937, 0.0
        %3150 = vadd.xlane.f32.xlu0 %v3149
        %v3151 = vpop.xlane.xlu0 %3150
        %v3152 = vsel %vm2509, %v2939, 0.0
        %3153 = vadd.xlane.f32.xlu0 %v3152
        %v3154 = vpop.xlane.xlu0 %3153
        %v3155 = vsel %vm2509, %v2941, 0.0
        %3156 = vadd.xlane.f32.xlu0 %v3155
        %v3157 = vpop.xlane.xlu0 %3156
        %v3158 = vsel %vm2509, %v2943, 0.0
        %3159 = vadd.xlane.f32.xlu0 %v3158
        %v3160 = vpop.xlane.xlu0 %3159
        %v3161 = vsel %vm2509, %v2945, 0.0
        %3162 = vadd.xlane.f32.xlu0 %v3161
        %v3163 = vpop.xlane.xlu0 %3162
        %v3164 = vsel %vm2509, %v2947, 0.0
        %3165 = vadd.xlane.f32.xlu0 %v3164
        %v3166 = vpop.xlane.xlu0 %3165
        %v3167 = vsel %vm2509, %v2949, 0.0
        %3168 = vadd.xlane.f32.xlu0 %v3167
        %v3169 = vpop.xlane.xlu0 %3168
        %v3170 = vsel %vm2509, %v2951, 0.0
        %3171 = vadd.xlane.f32.xlu0 %v3170
        %v3172 = vpop.xlane.xlu0 %3171
        %v3173 = vsel %vm2509, %v2953, 0.0
        %3174 = vadd.xlane.f32.xlu0 %v3173
        %v3175 = vpop.xlane.xlu0 %3174
        %v3176 = vsel %vm2509, %v2955, 0.0
        %3177 = vadd.xlane.f32.xlu0 %v3176
        %v3178 = vpop.xlane.xlu0 %3177
        %v3179 = vsel %vm2509, %v2957, 0.0
        %3180 = vadd.xlane.f32.xlu0 %v3179
        %v3181 = vpop.xlane.xlu0 %3180
        %v3182 = vsel %vm2509, %v2959, 0.0
        %3183 = vadd.xlane.f32.xlu0 %v3182
        %v3184 = vpop.xlane.xlu0 %3183
        %v3185 = vsel %vm2509, %v2961, 0.0
        %3186 = vadd.xlane.f32.xlu0 %v3185
        %v3187 = vpop.xlane.xlu0 %3186
        %v3188 = vsel %vm2509, %v2963, 0.0
        %3189 = vadd.xlane.f32.xlu0 %v3188
        %v3190 = vpop.xlane.xlu0 %3189
        %v3191 = vsel %vm2509, %v2965, 0.0
        %3192 = vadd.xlane.f32.xlu0 %v3191
        %v3193 = vpop.xlane.xlu0 %3192
        %v3194 = vsel %vm2509, %v2967, 0.0
        %3195 = vadd.xlane.f32.xlu0 %v3194
        %v3196 = vpop.xlane.xlu0 %3195
        %v3197 = vsel %vm2509, %v2969, 0.0
        %3198 = vadd.xlane.f32.xlu0 %v3197
        %v3199 = vpop.xlane.xlu0 %3198
        %v3200 = vsel %vm2509, %v2971, 0.0
        %3201 = vadd.xlane.f32.xlu0 %v3200
        %v3202 = vpop.xlane.xlu0 %3201
        %v3203 = vsel %vm2509, %v2973, 0.0
        %3204 = vadd.xlane.f32.xlu0 %v3203
        %v3205 = vpop.xlane.xlu0 %3204
        %v3206 = vsel %vm2509, %v2975, 0.0
        %3207 = vadd.xlane.f32.xlu0 %v3206
        %v3208 = vpop.xlane.xlu0 %3207
        %v3209 = vsel %vm2509, %v2977, 0.0
        %3210 = vadd.xlane.f32.xlu0 %v3209
        %v3211 = vpop.xlane.xlu0 %3210
        %v3212 = vsel %vm2509, %v2979, 0.0
        %3213 = vadd.xlane.f32.xlu0 %v3212
        %v3214 = vpop.xlane.xlu0 %3213
        %v3215 = vsel %vm2509, %v2981, 0.0
        %3216 = vadd.xlane.f32.xlu0 %v3215
        %v3217 = vpop.xlane.xlu0 %3216
        %v3218 = vsel %vm2509, %v2983, 0.0
        %3219 = vadd.xlane.f32.xlu0 %v3218
        %v3220 = vpop.xlane.xlu0 %3219
        %v3221 = vsel %vm2509, %v2985, 0.0
        %3222 = vadd.xlane.f32.xlu0 %v3221
        %v3223 = vpop.xlane.xlu0 %3222
        %v3224 = vsel %vm2509, %v2987, 0.0
        %3225 = vadd.xlane.f32.xlu0 %v3224
        %v3226 = vpop.xlane.xlu0 %3225
        %v3227 = vsel %vm2509, %v2989, 0.0
        %3228 = vadd.xlane.f32.xlu0 %v3227
        %v3229 = vpop.xlane.xlu0 %3228
        %v3230 = vsel %vm2509, %v2991, 0.0
        %3231 = vadd.xlane.f32.xlu0 %v3230
        %v3232 = vpop.xlane.xlu0 %3231
        %v3233 = vsel %vm2509, %v2993, 0.0
        %3234 = vadd.xlane.f32.xlu0 %v3233
        %v3235 = vpop.xlane.xlu0 %3234
        %v3236 = vsel %vm2509, %v2995, 0.0
        %3237 = vadd.xlane.f32.xlu0 %v3236
        %v3238 = vpop.xlane.xlu0 %3237
        %v3239 = vsel %vm2509, %v2997, 0.0
        %3240 = vadd.xlane.f32.xlu0 %v3239
        %v3241 = vpop.xlane.xlu0 %3240
        %v3242 = vsel %vm2509, %v2999, 0.0
        %3243 = vadd.xlane.f32.xlu0 %v3242
        %v3244 = vpop.xlane.xlu0 %3243
        %v3245 = vsel %vm2509, %v3001, 0.0
        %3246 = vadd.xlane.f32.xlu0 %v3245
        %v3247 = vpop.xlane.xlu0 %3246
        %v3248 = vsel %vm2509, %v3003, 0.0
        %3249 = vadd.xlane.f32.xlu0 %v3248
        %v3250 = vpop.xlane.xlu0 %3249
        %v3251 = vsel %vm2509, %v3005, 0.0
        %3252 = vadd.xlane.f32.xlu0 %v3251
        %v3253 = vpop.xlane.xlu0 %3252
        %v3254 = vsel %vm2509, %v3007, 0.0
        %3255 = vadd.xlane.f32.xlu0 %v3254
        %v3256 = vpop.xlane.xlu0 %3255
        %v3257 = vsel %vm2509, %v3009, 0.0
        %3258 = vadd.xlane.f32.xlu0 %v3257
        %v3259 = vpop.xlane.xlu0 %3258
        %v3260 = vsel %vm2509, %v3011, 0.0
        %3261 = vadd.xlane.f32.xlu0 %v3260
        %v3262 = vpop.xlane.xlu0 %3261
        %v3263 = vsel %vm2509, %v3013, 0.0
        %3264 = vadd.xlane.f32.xlu0 %v3263
        %v3265 = vpop.xlane.xlu0 %3264
        %v3266 = vsel %vm2509, %v3015, 0.0
        %3267 = vadd.xlane.f32.xlu0 %v3266
        %v3268 = vpop.xlane.xlu0 %3267
        %v3269 = vsel %vm2509, %v3017, 0.0
        %3270 = vadd.xlane.f32.xlu0 %v3269
        %v3271 = vpop.xlane.xlu0 %3270
        %v3272 = vsel %vm2509, %v3019, 0.0
        %3273 = vadd.xlane.f32.xlu0 %v3272
        %v3274 = vpop.xlane.xlu0 %3273
        %v3275 = vsel %vm2509, %v3021, 0.0
        %3276 = vadd.xlane.f32.xlu0 %v3275
        %v3277 = vpop.xlane.xlu0 %3276
        %v3278 = vsel %vm2509, %v3023, 0.0
        %3279 = vadd.xlane.f32.xlu0 %v3278
        %v3280 = vpop.xlane.xlu0 %3279
        %v3281 = vsel %vm2509, %v3025, 0.0
        %3282 = vadd.xlane.f32.xlu0 %v3281
        %v3283 = vpop.xlane.xlu0 %3282
        %v3284 = vsel %vm2509, %v3027, 0.0
        %3285 = vadd.xlane.f32.xlu0 %v3284
        %v3286 = vpop.xlane.xlu0 %3285
        %v3287 = vsel %vm2509, %v3029, 0.0
        %3288 = vadd.xlane.f32.xlu0 %v3287
        %v3289 = vpop.xlane.xlu0 %3288
        %v3290 = vsel %vm2509, %v3031, 0.0
        %3291 = vadd.xlane.f32.xlu0 %v3290
        %v3292 = vpop.xlane.xlu0 %3291
        %v3293 = vsel %vm2509, %v3033, 0.0
        %3294 = vadd.xlane.f32.xlu0 %v3293
        %v3295 = vpop.xlane.xlu0 %3294
        %v3296 = vsel %vm2509, %v3035, 0.0
        %3297 = vadd.xlane.f32.xlu0 %v3296
        %v3298 = vpop.xlane.xlu0 %3297
        %v3299 = vsel %vm2509, %v3037, 0.0
        %3300 = vadd.xlane.f32.xlu0 %v3299
        %v3301 = vpop.xlane.xlu0 %3300
        %v3302 = vsel %vm2509, %v3039, 0.0
        %3303 = vadd.xlane.f32.xlu0 %v3302
        %v3304 = vpop.xlane.xlu0 %3303
        %v3305 = vsel %vm2509, %v3041, 0.0
        %3306 = vadd.xlane.f32.xlu0 %v3305
        %v3307 = vpop.xlane.xlu0 %3306
        %v3308 = vsel %vm2509, %v3043, 0.0
        %3309 = vadd.xlane.f32.xlu0 %v3308
        %v3310 = vpop.xlane.xlu0 %3309
        %v3311 = vsel %vm2509, %v3045, 0.0
        %3312 = vadd.xlane.f32.xlu0 %v3311
        %v3313 = vpop.xlane.xlu0 %3312
        %v3314 = vsel %vm2509, %v3047, 0.0
        %3315 = vadd.xlane.f32.xlu0 %v3314
        %v3316 = vpop.xlane.xlu0 %3315
        %v3317 = vsel %vm2509, %v3049, 0.0
        %3318 = vadd.xlane.f32.xlu0 %v3317
        %v3319 = vpop.xlane.xlu0 %3318
        %v3320 = vsel %vm2509, %v3051, 0.0
        %3321 = vadd.xlane.f32.xlu0 %v3320
        %v3322 = vpop.xlane.xlu0 %3321
        %v3323 = vsel %vm2509, %v3053, 0.0
        %3324 = vadd.xlane.f32.xlu0 %v3323
        %v3325 = vpop.xlane.xlu0 %3324
        %v3326 = vsel %vm2509, %v3055, 0.0
        %3327 = vadd.xlane.f32.xlu0 %v3326
        %v3328 = vpop.xlane.xlu0 %3327
        %v3329 = vsel %vm2509, %v3057, 0.0
        %3330 = vadd.xlane.f32.xlu0 %v3329
        %v3331 = vpop.xlane.xlu0 %3330
        %v3332 = vsel %vm2509, %v3059, 0.0
        %3333 = vadd.xlane.f32.xlu0 %v3332
        %v3334 = vpop.xlane.xlu0 %3333
        %v3335 = vsel %vm2509, %v3061, 0.0
        %3336 = vadd.xlane.f32.xlu0 %v3335
        %v3337 = vpop.xlane.xlu0 %3336
        %v3338 = vsel %vm2509, %v3063, 0.0
        %3339 = vadd.xlane.f32.xlu0 %v3338
        %v3340 = vpop.xlane.xlu0 %3339
        %v3341 = vsel %vm2509, %v3065, 0.0
        %3342 = vadd.xlane.f32.xlu0 %v3341
        %v3343 = vpop.xlane.xlu0 %3342
        %v3344 = vsel %vm2509, %v3067, 0.0
        %3345 = vadd.xlane.f32.xlu0 %v3344
        %v3346 = vpop.xlane.xlu0 %3345
        %v3347 = vsel %vm2509, %v3069, 0.0
        %3348 = vadd.xlane.f32.xlu0 %v3347
        %v3349 = vpop.xlane.xlu0 %3348
        %v3350 = vsel %vm2509, %v3071, 0.0
        %3351 = vadd.xlane.f32.xlu0 %v3350
        %v3352 = vpop.xlane.xlu0 %3351
        %v3353 = vsel %vm2509, %v3073, 0.0
        %3354 = vadd.xlane.f32.xlu0 %v3353
        %v3355 = vpop.xlane.xlu0 %3354
        %v3356 = vsel %vm2509, %v3075, 0.0
        %3357 = vadd.xlane.f32.xlu0 %v3356
        %v3358 = vpop.xlane.xlu0 %3357
        %v3359 = vsel %vm2509, %v3077, 0.0
        %3360 = vadd.xlane.f32.xlu0 %v3359
        %v3361 = vpop.xlane.xlu0 %3360
        %v3362 = vsel %vm2509, %v3079, 0.0
        %3363 = vadd.xlane.f32.xlu0 %v3362
        %v3364 = vpop.xlane.xlu0 %3363
        %v3365 = vsel %vm2509, %v3081, 0.0
        %3366 = vadd.xlane.f32.xlu0 %v3365
        %v3367 = vpop.xlane.xlu0 %3366
        %v3368 = vsel %vm2509, %v3083, 0.0
        %3369 = vadd.xlane.f32.xlu0 %v3368
        %v3370 = vpop.xlane.xlu0 %3369
        %v3371 = vsel %vm2509, %v3085, 0.0
        %3372 = vadd.xlane.f32.xlu0 %v3371
        %v3373 = vpop.xlane.xlu0 %3372
        %v3374 = vrcp.pop %v3088
        %v3375 = vrcp.pop %v3091
        %v3376 = vrcp.pop %v3094
        %v3377 = vrcp.pop %v3097
        %v3378 = vrcp.pop %v3100
        %v3379 = vrcp.pop %v3103
        %v3380 = vrcp.pop %v3106
        %v3381 = vrcp.pop %v3109
        %v3382 = vrcp.pop %v3112
        %v3383 = vrcp.pop %v3115
        %v3384 = vrcp.pop %v3118
        %v3385 = vrcp.pop %v3121
        %v3386 = vrcp.pop %v3124
        %v3387 = vrcp.pop %v3127
        %v3388 = vrcp.pop %v3130
        %v3389 = vrcp.pop %v3133
        %v3390 = vrcp.pop %v3136
        %v3391 = vrcp.pop %v3139
        %v3392 = vrcp.pop %v3142
        %v3393 = vrcp.pop %v3145
        %v3394 = vrcp.pop %v3148
        %v3395 = vrcp.pop %v3151
        %v3396 = vrcp.pop %v3154
        %v3397 = vrcp.pop %v3157
        %v3398 = vrcp.pop %v3160
        %v3399 = vrcp.pop %v3163
        %v3400 = vrcp.pop %v3166
        %v3401 = vrcp.pop %v3169
        %v3402 = vrcp.pop %v3172
        %v3403 = vrcp.pop %v3175
        %v3404 = vrcp.pop %v3178
        %v3405 = vrcp.pop %v3181
        %v3406 = vrcp.pop %v3184
        %v3407 = vrcp.pop %v3187
        %v3408 = vrcp.pop %v3190
        %v3409 = vrcp.pop %v3193
        %v3410 = vrcp.pop %v3196
        %v3411 = vrcp.pop %v3199
        %v3412 = vrcp.pop %v3202
        %v3413 = vrcp.pop %v3205
        %v3414 = vrcp.pop %v3208
        %v3415 = vrcp.pop %v3211
        %v3416 = vrcp.pop %v3214
        %v3417 = vrcp.pop %v3217
        %v3418 = vrcp.pop %v3220
        %v3419 = vrcp.pop %v3223
        %v3420 = vrcp.pop %v3226
        %v3421 = vrcp.pop %v3229
        %v3422 = vrcp.pop %v3232
        %v3423 = vrcp.pop %v3235
        %v3424 = vrcp.pop %v3238
        %v3425 = vrcp.pop %v3241
        %v3426 = vrcp.pop %v3244
        %v3427 = vrcp.pop %v3247
        %v3428 = vrcp.pop %v3250
        %v3429 = vrcp.pop %v3253
        %v3430 = vrcp.pop %v3256
        %v3431 = vrcp.pop %v3259
        %v3432 = vrcp.pop %v3262
        %v3433 = vrcp.pop %v3265
        %v3434 = vrcp.pop %v3268
        %v3435 = vrcp.pop %v3271
        %v3436 = vrcp.pop %v3274
        %v3437 = vrcp.pop %v3277
        %v3438 = vrcp.pop %v3280
        %v3439 = vrcp.pop %v3283
        %v3440 = vrcp.pop %v3286
        %v3441 = vrcp.pop %v3289
        %v3442 = vrcp.pop %v3292
        %v3443 = vrcp.pop %v3295
        %v3444 = vrcp.pop %v3298
        %v3445 = vrcp.pop %v3301
        %v3446 = vrcp.pop %v3304
        %v3447 = vrcp.pop %v3307
        %v3448 = vrcp.pop %v3310
        %v3449 = vrcp.pop %v3313
        %v3450 = vrcp.pop %v3316
        %v3451 = vrcp.pop %v3319
        %v3452 = vrcp.pop %v3322
        %v3453 = vrcp.pop %v3325
        %v3454 = vrcp.pop %v3328
        %v3455 = vrcp.pop %v3331
        %v3456 = vrcp.pop %v3334
        %v3457 = vrcp.pop %v3337
        %v3458 = vrcp.pop %v3340
        %v3459 = vrcp.pop %v3343
        %v3460 = vrcp.pop %v3346
        %v3461 = vrcp.pop %v3349
        %v3462 = vrcp.pop %v3352
        %v3463 = vrcp.pop %v3355
        %v3464 = vrcp.pop %v3358
        %v3465 = vrcp.pop %v3361
        %v3466 = vrcp.pop %v3364
        %v3467 = vrcp.pop %v3367
        %v3468 = vrcp.pop %v3370
        %v3469 = vrcp.pop %v3373
        %v3470 = vmul.f32 %v2895, %v3374
        %v3471 = vmul.f32 %v2897, %v3375
        %v3472 = vmul.f32 %v2899, %v3376
        %v3473 = vmul.f32 %v2901, %v3377
        %v3474 = vmul.f32 %v2903, %v3378
        %v3475 = vmul.f32 %v2905, %v3379
        %v3476 = vmul.f32 %v2907, %v3380
        %v3477 = vmul.f32 %v2909, %v3381
        %v3478 = vmul.f32 %v2911, %v3382
        %v3479 = vmul.f32 %v2913, %v3383
        %v3480 = vmul.f32 %v2915, %v3384
        %v3481 = vmul.f32 %v2917, %v3385
        %v3482 = vmul.f32 %v2919, %v3386
        %v3483 = vmul.f32 %v2921, %v3387
        %v3484 = vmul.f32 %v2923, %v3388
        %v3485 = vmul.f32 %v2925, %v3389
        %v3486 = vmul.f32 %v2927, %v3390
        %v3487 = vmul.f32 %v2929, %v3391
        %v3488 = vmul.f32 %v2931, %v3392
        %v3489 = vmul.f32 %v2933, %v3393
        %v3490 = vmul.f32 %v2935, %v3394
        %v3491 = vmul.f32 %v2937, %v3395
        %v3492 = vmul.f32 %v2939, %v3396
        %v3493 = vmul.f32 %v2941, %v3397
        %v3494 = vmul.f32 %v2943, %v3398
        %v3495 = vmul.f32 %v2945, %v3399
        %v3496 = vmul.f32 %v2947, %v3400
        %v3497 = vmul.f32 %v2949, %v3401
        %v3498 = vmul.f32 %v2951, %v3402
        %v3499 = vmul.f32 %v2953, %v3403
        %v3500 = vmul.f32 %v2955, %v3404
        %v3501 = vmul.f32 %v2957, %v3405
        %v3502 = vmul.f32 %v2959, %v3406
        %v3503 = vmul.f32 %v2961, %v3407
        %v3504 = vmul.f32 %v2963, %v3408
        %v3505 = vmul.f32 %v2965, %v3409
        %v3506 = vmul.f32 %v2967, %v3410
        %v3507 = vmul.f32 %v2969, %v3411
        %v3508 = vmul.f32 %v2971, %v3412
        %v3509 = vmul.f32 %v2973, %v3413
        %v3510 = vmul.f32 %v2975, %v3414
        %v3511 = vmul.f32 %v2977, %v3415
        %v3512 = vmul.f32 %v2979, %v3416
        %v3513 = vmul.f32 %v2981, %v3417
        %v3514 = vmul.f32 %v2983, %v3418
        %v3515 = vmul.f32 %v2985, %v3419
        %v3516 = vmul.f32 %v2987, %v3420
        %v3517 = vmul.f32 %v2989, %v3421
        %v3518 = vmul.f32 %v2991, %v3422
        %v3519 = vmul.f32 %v2993, %v3423
        %v3520 = vmul.f32 %v2995, %v3424
        %v3521 = vmul.f32 %v2997, %v3425
        %v3522 = vmul.f32 %v2999, %v3426
        %v3523 = vmul.f32 %v3001, %v3427
        %v3524 = vmul.f32 %v3003, %v3428
        %v3525 = vmul.f32 %v3005, %v3429
        %v3526 = vmul.f32 %v3007, %v3430
        %v3527 = vmul.f32 %v3009, %v3431
        %v3528 = vmul.f32 %v3011, %v3432
        %v3529 = vmul.f32 %v3013, %v3433
        %v3530 = vmul.f32 %v3015, %v3434
        %v3531 = vmul.f32 %v3017, %v3435
        %v3532 = vmul.f32 %v3019, %v3436
        %v3533 = vmul.f32 %v3021, %v3437
        %v3534 = vmul.f32 %v3023, %v3438
        %v3535 = vmul.f32 %v3025, %v3439
        %v3536 = vmul.f32 %v3027, %v3440
        %v3537 = vmul.f32 %v3029, %v3441
        %v3538 = vmul.f32 %v3031, %v3442
        %v3539 = vmul.f32 %v3033, %v3443
        %v3540 = vmul.f32 %v3035, %v3444
        %v3541 = vmul.f32 %v3037, %v3445
        %v3542 = vmul.f32 %v3039, %v3446
        %v3543 = vmul.f32 %v3041, %v3447
        %v3544 = vmul.f32 %v3043, %v3448
        %v3545 = vmul.f32 %v3045, %v3449
        %v3546 = vmul.f32 %v3047, %v3450
        %v3547 = vmul.f32 %v3049, %v3451
        %v3548 = vmul.f32 %v3051, %v3452
        %v3549 = vmul.f32 %v3053, %v3453
        %v3550 = vmul.f32 %v3055, %v3454
        %v3551 = vmul.f32 %v3057, %v3455
        %v3552 = vmul.f32 %v3059, %v3456
        %v3553 = vmul.f32 %v3061, %v3457
        %v3554 = vmul.f32 %v3063, %v3458
        %v3555 = vmul.f32 %v3065, %v3459
        %v3556 = vmul.f32 %v3067, %v3460
        %v3557 = vmul.f32 %v3069, %v3461
        %v3558 = vmul.f32 %v3071, %v3462
        %v3559 = vmul.f32 %v3073, %v3463
        %v3560 = vmul.f32 %v3075, %v3464
        %v3561 = vmul.f32 %v3077, %v3465
        %v3562 = vmul.f32 %v3079, %v3466
        %v3563 = vmul.f32 %v3081, %v3467
        %v3564 = vmul.f32 %v3083, %v3468
        %v3565 = vmul.f32 %v3085, %v3469
        %v3566 = vpack.c.bf16 %v3471, %v3470
        %v3567 = vpack.c.bf16 %v3473, %v3472
        %v3568 = vpack.c.bf16 %v3475, %v3474
        %v3569 = vpack.c.bf16 %v3477, %v3476
        %v3570 = vpack.c.bf16 %v3479, %v3478
        %v3571 = vpack.c.bf16 %v3481, %v3480
        %v3572 = vpack.c.bf16 %v3483, %v3482
        %v3573 = vpack.c.bf16 %v3485, %v3484
        %v3574 = vpack.c.bf16 %v3487, %v3486
        %v3575 = vpack.c.bf16 %v3489, %v3488
        %v3576 = vpack.c.bf16 %v3491, %v3490
        %v3577 = vpack.c.bf16 %v3493, %v3492
        %v3578 = vpack.c.bf16 %v3495, %v3494
        %v3579 = vpack.c.bf16 %v3497, %v3496
        %v3580 = vpack.c.bf16 %v3499, %v3498
        %v3581 = vpack.c.bf16 %v3501, %v3500
        %v3582 = vpack.c.bf16 %v3503, %v3502
        %v3583 = vpack.c.bf16 %v3505, %v3504
        %v3584 = vpack.c.bf16 %v3507, %v3506
        %v3585 = vpack.c.bf16 %v3509, %v3508
        %v3586 = vpack.c.bf16 %v3511, %v3510
        %v3587 = vpack.c.bf16 %v3513, %v3512
        %v3588 = vpack.c.bf16 %v3515, %v3514
        %v3589 = vpack.c.bf16 %v3517, %v3516
        %v3590 = vpack.c.bf16 %v3519, %v3518
        %v3591 = vpack.c.bf16 %v3521, %v3520
        %v3592 = vpack.c.bf16 %v3523, %v3522
        %v3593 = vpack.c.bf16 %v3525, %v3524
        %v3594 = vpack.c.bf16 %v3527, %v3526
        %v3595 = vpack.c.bf16 %v3529, %v3528
        %v3596 = vpack.c.bf16 %v3531, %v3530
        %v3597 = vpack.c.bf16 %v3533, %v3532
        %v3598 = vpack.c.bf16 %v3535, %v3534
        %v3599 = vpack.c.bf16 %v3537, %v3536
        %v3600 = vpack.c.bf16 %v3539, %v3538
        %v3601 = vpack.c.bf16 %v3541, %v3540
        %v3602 = vpack.c.bf16 %v3543, %v3542
        %v3603 = vpack.c.bf16 %v3545, %v3544
        %v3604 = vpack.c.bf16 %v3547, %v3546
        %v3605 = vpack.c.bf16 %v3549, %v3548
        %v3606 = vpack.c.bf16 %v3551, %v3550
        %v3607 = vpack.c.bf16 %v3553, %v3552
        %v3608 = vpack.c.bf16 %v3555, %v3554
        %v3609 = vpack.c.bf16 %v3557, %v3556
        %v3610 = vpack.c.bf16 %v3559, %v3558
        %v3611 = vpack.c.bf16 %v3561, %v3560
        %v3612 = vpack.c.bf16 %v3563, %v3562
        %v3613 = vpack.c.bf16 %v3565, %v3564
        %v3615 = vsel %vm2509, %v3566, 0
        %v3618 = vsel %vm2509, %v3567, 0
        %v3621 = vsel %vm2509, %v3568, 0
        %v3624 = vsel %vm2509, %v3569, 0
        %3626 = vmatprep.subr.bf16.mxu0 0
        %3627 = vmatpush1.bf16.msra.mxu0 0
        %3628 = vmatprep.subr.bf16.mxu0 0
        %3629 = vmatpush1.bf16.msra.mxu0 0
        %3630 = vmatprep.subr.bf16.mxu0 0
        %3631 = vmatpush1.bf16.msra.mxu0 0
        %3632 = vmatprep.subr.bf16.mxu0 0
        %3633 = vmatpush1.bf16.msra.mxu0 0
        %3634 = vmatprep.subr.bf16.mxu0 0
        %3635 = vmatpush1.bf16.msra.mxu0 %v1007
        %3636 = vmatprep.subr.bf16.mxu0 0
        %3637 = vmatpush1.bf16.msra.mxu0 %v1005
        %3638 = vmatprep.subr.bf16.mxu0 0
        %3639 = vmatpush1.bf16.msra.mxu0 %v1003
        %3640 = vmatprep.subr.bf16.mxu0 0
        %3641 = vmatpush1.bf16.msra.mxu0 %v1001
        %3642 = vmatprep.subr.bf16.mxu0 0
        %3643 = vmatpush2.bf16.msra.mxu0 0
        %3644 = vmatprep.subr.bf16.mxu0 0
        %3645 = vmatpush2.bf16.msra.mxu0 0
        %3646 = vmatprep.subr.bf16.mxu0 0
        %3647 = vmatpush2.bf16.msra.mxu0 0
        %3648 = vmatprep.subr.bf16.mxu0 0
        %3649 = vmatpush2.bf16.msra.mxu0 0
        %3650 = vmatprep.subr.bf16.mxu0 0
        %3651 = vmatpush2.bf16.msra.mxu0 0
        %3652 = vmatprep.subr.bf16.mxu0 0
        %3653 = vmatpush2.bf16.msra.mxu0 0
        %3654 = vmatprep.subr.bf16.mxu0 0
        %3655 = vmatpush2.bf16.msra.mxu0 0
        %3656 = vmatprep.subr.bf16.mxu0 0
        %3657 = vmatpush2.bf16.msra.mxu0 0
        %3658 = vmatprep.mubr.bf16.mxu0 0
        %3659 = vmatmul.mubr.bf16.gmra.mxu0 %v3615
        %v3660 = vpop.f32.mrf.mxu0
        %v3661 = vadd.f32 0.0, %v3660
        %v3662 = vpop.f32.mrf.mxu0
        %v3663 = vpop.f32.mrf.mxu0
        %v3664 = vadd.f32 0.0, %v3663
        %v3665 = vpop.f32.mrf.mxu0
        %3666 = vmatprep.mubr.bf16.mxu0 0
        %3667 = vmatmul.mubr.bf16.gmra.mxu0 %v3618
        %v3668 = vpop.f32.mrf.mxu0
        %v3669 = vadd.f32 0.0, %v3668
        %v3670 = vpop.f32.mrf.mxu0
        %v3671 = vpop.f32.mrf.mxu0
        %v3672 = vadd.f32 0.0, %v3671
        %v3673 = vpop.f32.mrf.mxu0
        %3674 = vmatprep.mubr.bf16.mxu0 0
        %3675 = vmatmul.mubr.bf16.gmra.mxu0 %v3621
        %v3676 = vpop.f32.mrf.mxu0
        %v3677 = vadd.f32 0.0, %v3676
        %v3678 = vpop.f32.mrf.mxu0
        %v3679 = vpop.f32.mrf.mxu0
        %v3680 = vadd.f32 0.0, %v3679
        %v3681 = vpop.f32.mrf.mxu0
        %3682 = vmatprep.mubr.bf16.mxu0 0
        %3683 = vmatmul.mubr.bf16.gmra.mxu0 %v3624
        %v3684 = vpop.f32.mrf.mxu0
        %v3685 = vadd.f32 0.0, %v3684
        %v3686 = vpop.f32.mrf.mxu0
        %v3687 = vpop.f32.mrf.mxu0
        %v3688 = vadd.f32 0.0, %v3687
        %v3689 = vpop.f32.mrf.mxu0
        %3690 = vdwg.mxu0
        %v3692 = vsel %vm2509, %v3570, 0
        %v3695 = vsel %vm2509, %v3571, 0
        %v3698 = vsel %vm2509, %v3572, 0
        %v3701 = vsel %vm2509, %v3573, 0
        %3703 = vmatprep.subr.bf16.mxu0 0
        %3704 = vmatpush1.bf16.msra.mxu0 0
        %3705 = vmatprep.subr.bf16.mxu0 0
        %3706 = vmatpush1.bf16.msra.mxu0 0
        %3707 = vmatprep.subr.bf16.mxu0 0
        %3708 = vmatpush1.bf16.msra.mxu0 0
        %3709 = vmatprep.subr.bf16.mxu0 0
        %3710 = vmatpush1.bf16.msra.mxu0 0
        %3711 = vmatprep.subr.bf16.mxu0 0
        %3712 = vmatpush1.bf16.msra.mxu0 %v1015
        %3713 = vmatprep.subr.bf16.mxu0 0
        %3714 = vmatpush1.bf16.msra.mxu0 %v1013
        %3715 = vmatprep.subr.bf16.mxu0 0
        %3716 = vmatpush1.bf16.msra.mxu0 %v1011
        %3717 = vmatprep.subr.bf16.mxu0 0
        %3718 = vmatpush1.bf16.msra.mxu0 %v1009
        %3719 = vmatprep.subr.bf16.mxu0 0
        %3720 = vmatpush2.bf16.msra.mxu0 0
        %3721 = vmatprep.subr.bf16.mxu0 0
        %3722 = vmatpush2.bf16.msra.mxu0 0
        %3723 = vmatprep.subr.bf16.mxu0 0
        %3724 = vmatpush2.bf16.msra.mxu0 0
        %3725 = vmatprep.subr.bf16.mxu0 0
        %3726 = vmatpush2.bf16.msra.mxu0 0
        %3727 = vmatprep.subr.bf16.mxu0 0
        %3728 = vmatpush2.bf16.msra.mxu0 0
        %3729 = vmatprep.subr.bf16.mxu0 0
        %3730 = vmatpush2.bf16.msra.mxu0 0
        %3731 = vmatprep.subr.bf16.mxu0 0
        %3732 = vmatpush2.bf16.msra.mxu0 0
        %3733 = vmatprep.subr.bf16.mxu0 0
        %3734 = vmatpush2.bf16.msra.mxu0 0
        %3735 = vmatprep.mubr.bf16.mxu0 0
        %3736 = vmatmul.mubr.bf16.gmra.mxu0 %v3692
        %v3737 = vpop.f32.mrf.mxu0
        %v3738 = vadd.f32 0.0, %v3737
        %v3739 = vpop.f32.mrf.mxu0
        %v3740 = vpop.f32.mrf.mxu0
        %v3741 = vadd.f32 0.0, %v3740
        %v3742 = vpop.f32.mrf.mxu0
        %3743 = vmatprep.mubr.bf16.mxu0 0
        %3744 = vmatmul.mubr.bf16.gmra.mxu0 %v3695
        %v3745 = vpop.f32.mrf.mxu0
        %v3746 = vadd.f32 0.0, %v3745
        %v3747 = vpop.f32.mrf.mxu0
        %v3748 = vpop.f32.mrf.mxu0
        %v3749 = vadd.f32 0.0, %v3748
        %v3750 = vpop.f32.mrf.mxu0
        %3751 = vmatprep.mubr.bf16.mxu0 0
        %3752 = vmatmul.mubr.bf16.gmra.mxu0 %v3698
        %v3753 = vpop.f32.mrf.mxu0
        %v3754 = vadd.f32 0.0, %v3753
        %v3755 = vpop.f32.mrf.mxu0
        %v3756 = vpop.f32.mrf.mxu0
        %v3757 = vadd.f32 0.0, %v3756
        %v3758 = vpop.f32.mrf.mxu0
        %3759 = vmatprep.mubr.bf16.mxu0 0
        %3760 = vmatmul.mubr.bf16.gmra.mxu0 %v3701
        %v3761 = vpop.f32.mrf.mxu0
        %v3762 = vadd.f32 0.0, %v3761
        %v3763 = vpop.f32.mrf.mxu0
        %v3764 = vpop.f32.mrf.mxu0
        %v3765 = vadd.f32 0.0, %v3764
        %v3766 = vpop.f32.mrf.mxu0
        %3767 = vdwg.mxu0
        %v3769 = vsel %vm2509, %v3574, 0
        %v3772 = vsel %vm2509, %v3575, 0
        %v3775 = vsel %vm2509, %v3576, 0
        %v3778 = vsel %vm2509, %v3577, 0
        %3780 = vmatprep.subr.bf16.mxu0 0
        %3781 = vmatpush1.bf16.msra.mxu0 0
        %3782 = vmatprep.subr.bf16.mxu0 0
        %3783 = vmatpush1.bf16.msra.mxu0 0
        %3784 = vmatprep.subr.bf16.mxu0 0
        %3785 = vmatpush1.bf16.msra.mxu0 0
        %3786 = vmatprep.subr.bf16.mxu0 0
        %3787 = vmatpush1.bf16.msra.mxu0 0
        %3788 = vmatprep.subr.bf16.mxu0 0
        %3789 = vmatpush1.bf16.msra.mxu0 %v1023
        %3790 = vmatprep.subr.bf16.mxu0 0
        %3791 = vmatpush1.bf16.msra.mxu0 %v1021
        %3792 = vmatprep.subr.bf16.mxu0 0
        %3793 = vmatpush1.bf16.msra.mxu0 %v1019
        %3794 = vmatprep.subr.bf16.mxu0 0
        %3795 = vmatpush1.bf16.msra.mxu0 %v1017
        %3796 = vmatprep.subr.bf16.mxu0 0
        %3797 = vmatpush2.bf16.msra.mxu0 0
        %3798 = vmatprep.subr.bf16.mxu0 0
        %3799 = vmatpush2.bf16.msra.mxu0 0
        %3800 = vmatprep.subr.bf16.mxu0 0
        %3801 = vmatpush2.bf16.msra.mxu0 0
        %3802 = vmatprep.subr.bf16.mxu0 0
        %3803 = vmatpush2.bf16.msra.mxu0 0
        %3804 = vmatprep.subr.bf16.mxu0 0
        %3805 = vmatpush2.bf16.msra.mxu0 0
        %3806 = vmatprep.subr.bf16.mxu0 0
        %3807 = vmatpush2.bf16.msra.mxu0 0
        %3808 = vmatprep.subr.bf16.mxu0 0
        %3809 = vmatpush2.bf16.msra.mxu0 0
        %3810 = vmatprep.subr.bf16.mxu0 0
        %3811 = vmatpush2.bf16.msra.mxu0 0
        %3812 = vmatprep.mubr.bf16.mxu0 0
        %3813 = vmatmul.mubr.bf16.gmra.mxu0 %v3769
        %v3814 = vpop.f32.mrf.mxu0
        %v3815 = vadd.f32 0.0, %v3814
        %v3816 = vpop.f32.mrf.mxu0
        %v3817 = vpop.f32.mrf.mxu0
        %v3818 = vadd.f32 0.0, %v3817
        %v3819 = vpop.f32.mrf.mxu0
        %3820 = vmatprep.mubr.bf16.mxu0 0
        %3821 = vmatmul.mubr.bf16.gmra.mxu0 %v3772
        %v3822 = vpop.f32.mrf.mxu0
        %v3823 = vadd.f32 0.0, %v3822
        %v3824 = vpop.f32.mrf.mxu0
        %v3825 = vpop.f32.mrf.mxu0
        %v3826 = vadd.f32 0.0, %v3825
        %v3827 = vpop.f32.mrf.mxu0
        %3828 = vmatprep.mubr.bf16.mxu0 0
        %3829 = vmatmul.mubr.bf16.gmra.mxu0 %v3775
        %v3830 = vpop.f32.mrf.mxu0
        %v3831 = vadd.f32 0.0, %v3830
        %v3832 = vpop.f32.mrf.mxu0
        %v3833 = vpop.f32.mrf.mxu0
        %v3834 = vadd.f32 0.0, %v3833
        %v3835 = vpop.f32.mrf.mxu0
        %3836 = vmatprep.mubr.bf16.mxu0 0
        %3837 = vmatmul.mubr.bf16.gmra.mxu0 %v3778
        %v3838 = vpop.f32.mrf.mxu0
        %v3839 = vadd.f32 0.0, %v3838
        %v3840 = vpop.f32.mrf.mxu0
        %v3841 = vpop.f32.mrf.mxu0
        %v3842 = vadd.f32 0.0, %v3841
        %v3843 = vpop.f32.mrf.mxu0
        %3844 = vdwg.mxu0
        %v3846 = vsel %vm2509, %v3578, 0
        %v3849 = vsel %vm2509, %v3579, 0
        %v3852 = vsel %vm2509, %v3580, 0
        %v3855 = vsel %vm2509, %v3581, 0
        %3857 = vmatprep.subr.bf16.mxu0 0
        %3858 = vmatpush1.bf16.msra.mxu0 0
        %3859 = vmatprep.subr.bf16.mxu0 0
        %3860 = vmatpush1.bf16.msra.mxu0 0
        %3861 = vmatprep.subr.bf16.mxu0 0
        %3862 = vmatpush1.bf16.msra.mxu0 0
        %3863 = vmatprep.subr.bf16.mxu0 0
        %3864 = vmatpush1.bf16.msra.mxu0 0
        %3865 = vmatprep.subr.bf16.mxu0 0
        %3866 = vmatpush1.bf16.msra.mxu0 %v1211
        %3867 = vmatprep.subr.bf16.mxu0 0
        %3868 = vmatpush1.bf16.msra.mxu0 %v1209
        %3869 = vmatprep.subr.bf16.mxu0 0
        %3870 = vmatpush1.bf16.msra.mxu0 %v1207
        %3871 = vmatprep.subr.bf16.mxu0 0
        %3872 = vmatpush1.bf16.msra.mxu0 %v1205
        %3873 = vmatprep.subr.bf16.mxu0 0
        %3874 = vmatpush2.bf16.msra.mxu0 0
        %3875 = vmatprep.subr.bf16.mxu0 0
        %3876 = vmatpush2.bf16.msra.mxu0 0
        %3877 = vmatprep.subr.bf16.mxu0 0
        %3878 = vmatpush2.bf16.msra.mxu0 0
        %3879 = vmatprep.subr.bf16.mxu0 0
        %3880 = vmatpush2.bf16.msra.mxu0 0
        %3881 = vmatprep.subr.bf16.mxu0 0
        %3882 = vmatpush2.bf16.msra.mxu0 0
        %3883 = vmatprep.subr.bf16.mxu0 0
        %3884 = vmatpush2.bf16.msra.mxu0 0
        %3885 = vmatprep.subr.bf16.mxu0 0
        %3886 = vmatpush2.bf16.msra.mxu0 0
        %3887 = vmatprep.subr.bf16.mxu0 0
        %3888 = vmatpush2.bf16.msra.mxu0 0
        %3889 = vmatprep.mubr.bf16.mxu0 0
        %3890 = vmatmul.mubr.bf16.gmra.mxu0 %v3846
        %v3891 = vpop.f32.mrf.mxu0
        %v3892 = vadd.f32 0.0, %v3891
        %v3893 = vpop.f32.mrf.mxu0
        %v3894 = vpop.f32.mrf.mxu0
        %v3895 = vadd.f32 0.0, %v3894
        %v3896 = vpop.f32.mrf.mxu0
        %3897 = vmatprep.mubr.bf16.mxu0 0
        %3898 = vmatmul.mubr.bf16.gmra.mxu0 %v3849
        %v3899 = vpop.f32.mrf.mxu0
        %v3900 = vadd.f32 0.0, %v3899
        %v3901 = vpop.f32.mrf.mxu0
        %v3902 = vpop.f32.mrf.mxu0
        %v3903 = vadd.f32 0.0, %v3902
        %v3904 = vpop.f32.mrf.mxu0
        %3905 = vmatprep.mubr.bf16.mxu0 0
        %3906 = vmatmul.mubr.bf16.gmra.mxu0 %v3852
        %v3907 = vpop.f32.mrf.mxu0
        %v3908 = vadd.f32 0.0, %v3907
        %v3909 = vpop.f32.mrf.mxu0
        %v3910 = vpop.f32.mrf.mxu0
        %v3911 = vadd.f32 0.0, %v3910
        %v3912 = vpop.f32.mrf.mxu0
        %3913 = vmatprep.mubr.bf16.mxu0 0
        %3914 = vmatmul.mubr.bf16.gmra.mxu0 %v3855
        %v3915 = vpop.f32.mrf.mxu0
        %v3916 = vadd.f32 0.0, %v3915
        %v3917 = vpop.f32.mrf.mxu0
        %v3918 = vpop.f32.mrf.mxu0
        %v3919 = vadd.f32 0.0, %v3918
        %v3920 = vpop.f32.mrf.mxu0
        %3921 = vdwg.mxu0
        %v3923 = vsel %vm2509, %v3582, 0
        %v3926 = vsel %vm2509, %v3583, 0
        %v3929 = vsel %vm2509, %v3584, 0
        %v3932 = vsel %vm2509, %v3585, 0
        %3934 = vmatprep.subr.bf16.mxu0 0
        %3935 = vmatpush1.bf16.msra.mxu0 0
        %3936 = vmatprep.subr.bf16.mxu0 0
        %3937 = vmatpush1.bf16.msra.mxu0 0
        %3938 = vmatprep.subr.bf16.mxu0 0
        %3939 = vmatpush1.bf16.msra.mxu0 0
        %3940 = vmatprep.subr.bf16.mxu0 0
        %3941 = vmatpush1.bf16.msra.mxu0 0
        %3942 = vmatprep.subr.bf16.mxu0 0
        %3943 = vmatpush1.bf16.msra.mxu0 %v1219
        %3944 = vmatprep.subr.bf16.mxu0 0
        %3945 = vmatpush1.bf16.msra.mxu0 %v1217
        %3946 = vmatprep.subr.bf16.mxu0 0
        %3947 = vmatpush1.bf16.msra.mxu0 %v1215
        %3948 = vmatprep.subr.bf16.mxu0 0
        %3949 = vmatpush1.bf16.msra.mxu0 %v1213
        %3950 = vmatprep.subr.bf16.mxu0 0
        %3951 = vmatpush2.bf16.msra.mxu0 0
        %3952 = vmatprep.subr.bf16.mxu0 0
        %3953 = vmatpush2.bf16.msra.mxu0 0
        %3954 = vmatprep.subr.bf16.mxu0 0
        %3955 = vmatpush2.bf16.msra.mxu0 0
        %3956 = vmatprep.subr.bf16.mxu0 0
        %3957 = vmatpush2.bf16.msra.mxu0 0
        %3958 = vmatprep.subr.bf16.mxu0 0
        %3959 = vmatpush2.bf16.msra.mxu0 0
        %3960 = vmatprep.subr.bf16.mxu0 0
        %3961 = vmatpush2.bf16.msra.mxu0 0
        %3962 = vmatprep.subr.bf16.mxu0 0
        %3963 = vmatpush2.bf16.msra.mxu0 0
        %3964 = vmatprep.subr.bf16.mxu0 0
        %3965 = vmatpush2.bf16.msra.mxu0 0
        %3966 = vmatprep.mubr.bf16.mxu0 0
        %3967 = vmatmul.mubr.bf16.gmra.mxu0 %v3923
        %v3968 = vpop.f32.mrf.mxu0
        %v3969 = vadd.f32 0.0, %v3968
        %v3970 = vpop.f32.mrf.mxu0
        %v3971 = vpop.f32.mrf.mxu0
        %v3972 = vadd.f32 0.0, %v3971
        %v3973 = vpop.f32.mrf.mxu0
        %3974 = vmatprep.mubr.bf16.mxu0 0
        %3975 = vmatmul.mubr.bf16.gmra.mxu0 %v3926
        %v3976 = vpop.f32.mrf.mxu0
        %v3977 = vadd.f32 0.0, %v3976
        %v3978 = vpop.f32.mrf.mxu0
        %v3979 = vpop.f32.mrf.mxu0
        %v3980 = vadd.f32 0.0, %v3979
        %v3981 = vpop.f32.mrf.mxu0
        %3982 = vmatprep.mubr.bf16.mxu0 0
        %3983 = vmatmul.mubr.bf16.gmra.mxu0 %v3929
        %v3984 = vpop.f32.mrf.mxu0
        %v3985 = vadd.f32 0.0, %v3984
        %v3986 = vpop.f32.mrf.mxu0
        %v3987 = vpop.f32.mrf.mxu0
        %v3988 = vadd.f32 0.0, %v3987
        %v3989 = vpop.f32.mrf.mxu0
        %3990 = vmatprep.mubr.bf16.mxu0 0
        %3991 = vmatmul.mubr.bf16.gmra.mxu0 %v3932
        %v3992 = vpop.f32.mrf.mxu0
        %v3993 = vadd.f32 0.0, %v3992
        %v3994 = vpop.f32.mrf.mxu0
        %v3995 = vpop.f32.mrf.mxu0
        %v3996 = vadd.f32 0.0, %v3995
        %v3997 = vpop.f32.mrf.mxu0
        %3998 = vdwg.mxu0
        %v4000 = vsel %vm2509, %v3586, 0
        %v4003 = vsel %vm2509, %v3587, 0
        %v4006 = vsel %vm2509, %v3588, 0
        %v4009 = vsel %vm2509, %v3589, 0
        %4011 = vmatprep.subr.bf16.mxu0 0
        %4012 = vmatpush1.bf16.msra.mxu0 0
        %4013 = vmatprep.subr.bf16.mxu0 0
        %4014 = vmatpush1.bf16.msra.mxu0 0
        %4015 = vmatprep.subr.bf16.mxu0 0
        %4016 = vmatpush1.bf16.msra.mxu0 0
        %4017 = vmatprep.subr.bf16.mxu0 0
        %4018 = vmatpush1.bf16.msra.mxu0 0
        %4019 = vmatprep.subr.bf16.mxu0 0
        %4020 = vmatpush1.bf16.msra.mxu0 %v1227
        %4021 = vmatprep.subr.bf16.mxu0 0
        %4022 = vmatpush1.bf16.msra.mxu0 %v1225
        %4023 = vmatprep.subr.bf16.mxu0 0
        %4024 = vmatpush1.bf16.msra.mxu0 %v1223
        %4025 = vmatprep.subr.bf16.mxu0 0
        %4026 = vmatpush1.bf16.msra.mxu0 %v1221
        %4027 = vmatprep.subr.bf16.mxu0 0
        %4028 = vmatpush2.bf16.msra.mxu0 0
        %4029 = vmatprep.subr.bf16.mxu0 0
        %4030 = vmatpush2.bf16.msra.mxu0 0
        %4031 = vmatprep.subr.bf16.mxu0 0
        %4032 = vmatpush2.bf16.msra.mxu0 0
        %4033 = vmatprep.subr.bf16.mxu0 0
        %4034 = vmatpush2.bf16.msra.mxu0 0
        %4035 = vmatprep.subr.bf16.mxu0 0
        %4036 = vmatpush2.bf16.msra.mxu0 0
        %4037 = vmatprep.subr.bf16.mxu0 0
        %4038 = vmatpush2.bf16.msra.mxu0 0
        %4039 = vmatprep.subr.bf16.mxu0 0
        %4040 = vmatpush2.bf16.msra.mxu0 0
        %4041 = vmatprep.subr.bf16.mxu0 0
        %4042 = vmatpush2.bf16.msra.mxu0 0
        %4043 = vmatprep.mubr.bf16.mxu0 0
        %4044 = vmatmul.mubr.bf16.gmra.mxu0 %v4000
        %v4045 = vpop.f32.mrf.mxu0
        %v4046 = vadd.f32 0.0, %v4045
        %v4047 = vpop.f32.mrf.mxu0
        %v4048 = vpop.f32.mrf.mxu0
        %v4049 = vadd.f32 0.0, %v4048
        %v4050 = vpop.f32.mrf.mxu0
        %4051 = vmatprep.mubr.bf16.mxu0 0
        %4052 = vmatmul.mubr.bf16.gmra.mxu0 %v4003
        %v4053 = vpop.f32.mrf.mxu0
        %v4054 = vadd.f32 0.0, %v4053
        %v4055 = vpop.f32.mrf.mxu0
        %v4056 = vpop.f32.mrf.mxu0
        %v4057 = vadd.f32 0.0, %v4056
        %v4058 = vpop.f32.mrf.mxu0
        %4059 = vmatprep.mubr.bf16.mxu0 0
        %4060 = vmatmul.mubr.bf16.gmra.mxu0 %v4006
        %v4061 = vpop.f32.mrf.mxu0
        %v4062 = vadd.f32 0.0, %v4061
        %v4063 = vpop.f32.mrf.mxu0
        %v4064 = vpop.f32.mrf.mxu0
        %v4065 = vadd.f32 0.0, %v4064
        %v4066 = vpop.f32.mrf.mxu0
        %4067 = vmatprep.mubr.bf16.mxu0 0
        %4068 = vmatmul.mubr.bf16.gmra.mxu0 %v4009
        %v4069 = vpop.f32.mrf.mxu0
        %v4070 = vadd.f32 0.0, %v4069
        %v4071 = vpop.f32.mrf.mxu0
        %v4072 = vpop.f32.mrf.mxu0
        %v4073 = vadd.f32 0.0, %v4072
        %v4074 = vpop.f32.mrf.mxu0
        %4075 = vdwg.mxu0
        %v4077 = vsel %vm2509, %v3590, 0
        %v4080 = vsel %vm2509, %v3591, 0
        %v4083 = vsel %vm2509, %v3592, 0
        %v4086 = vsel %vm2509, %v3593, 0
        %4088 = vmatprep.subr.bf16.mxu0 0
        %4089 = vmatpush1.bf16.msra.mxu0 0
        %4090 = vmatprep.subr.bf16.mxu0 0
        %4091 = vmatpush1.bf16.msra.mxu0 0
        %4092 = vmatprep.subr.bf16.mxu0 0
        %4093 = vmatpush1.bf16.msra.mxu0 0
        %4094 = vmatprep.subr.bf16.mxu0 0
        %4095 = vmatpush1.bf16.msra.mxu0 0
        %4096 = vmatprep.subr.bf16.mxu0 0
        %4097 = vmatpush1.bf16.msra.mxu0 %v1247
        %4098 = vmatprep.subr.bf16.mxu0 0
        %4099 = vmatpush1.bf16.msra.mxu0 %v1245
        %4100 = vmatprep.subr.bf16.mxu0 0
        %4101 = vmatpush1.bf16.msra.mxu0 %v1243
        %4102 = vmatprep.subr.bf16.mxu0 0
        %4103 = vmatpush1.bf16.msra.mxu0 %v1241
        %4104 = vmatprep.subr.bf16.mxu0 0
        %4105 = vmatpush2.bf16.msra.mxu0 0
        %4106 = vmatprep.subr.bf16.mxu0 0
        %4107 = vmatpush2.bf16.msra.mxu0 0
        %4108 = vmatprep.subr.bf16.mxu0 0
        %4109 = vmatpush2.bf16.msra.mxu0 0
        %4110 = vmatprep.subr.bf16.mxu0 0
        %4111 = vmatpush2.bf16.msra.mxu0 0
        %4112 = vmatprep.subr.bf16.mxu0 0
        %4113 = vmatpush2.bf16.msra.mxu0 0
        %4114 = vmatprep.subr.bf16.mxu0 0
        %4115 = vmatpush2.bf16.msra.mxu0 0
        %4116 = vmatprep.subr.bf16.mxu0 0
        %4117 = vmatpush2.bf16.msra.mxu0 0
        %4118 = vmatprep.subr.bf16.mxu0 0
        %4119 = vmatpush2.bf16.msra.mxu0 0
        %4120 = vmatprep.mubr.bf16.mxu0 0
        %4121 = vmatmul.mubr.bf16.gmra.mxu0 %v4077
        %v4122 = vpop.f32.mrf.mxu0
        %v4123 = vadd.f32 0.0, %v4122
        %v4124 = vpop.f32.mrf.mxu0
        %v4125 = vpop.f32.mrf.mxu0
        %v4126 = vadd.f32 0.0, %v4125
        %v4127 = vpop.f32.mrf.mxu0
        %4128 = vmatprep.mubr.bf16.mxu0 0
        %4129 = vmatmul.mubr.bf16.gmra.mxu0 %v4080
        %v4130 = vpop.f32.mrf.mxu0
        %v4131 = vadd.f32 0.0, %v4130
        %v4132 = vpop.f32.mrf.mxu0
        %v4133 = vpop.f32.mrf.mxu0
        %v4134 = vadd.f32 0.0, %v4133
        %v4135 = vpop.f32.mrf.mxu0
        %4136 = vmatprep.mubr.bf16.mxu0 0
        %4137 = vmatmul.mubr.bf16.gmra.mxu0 %v4083
        %v4138 = vpop.f32.mrf.mxu0
        %v4139 = vadd.f32 0.0, %v4138
        %v4140 = vpop.f32.mrf.mxu0
        %v4141 = vpop.f32.mrf.mxu0
        %v4142 = vadd.f32 0.0, %v4141
        %v4143 = vpop.f32.mrf.mxu0
        %4144 = vmatprep.mubr.bf16.mxu0 0
        %4145 = vmatmul.mubr.bf16.gmra.mxu0 %v4086
        %v4146 = vpop.f32.mrf.mxu0
        %v4147 = vadd.f32 0.0, %v4146
        %v4148 = vpop.f32.mrf.mxu0
        %v4149 = vpop.f32.mrf.mxu0
        %v4150 = vadd.f32 0.0, %v4149
        %v4151 = vpop.f32.mrf.mxu0
        %4152 = vdwg.mxu0
        %v4154 = vsel %vm2509, %v3594, 0
        %v4157 = vsel %vm2509, %v3595, 0
        %v4160 = vsel %vm2509, %v3596, 0
        %v4163 = vsel %vm2509, %v3597, 0
        %4165 = vmatprep.subr.bf16.mxu0 0
        %4166 = vmatpush1.bf16.msra.mxu0 0
        %4167 = vmatprep.subr.bf16.mxu0 0
        %4168 = vmatpush1.bf16.msra.mxu0 0
        %4169 = vmatprep.subr.bf16.mxu0 0
        %4170 = vmatpush1.bf16.msra.mxu0 0
        %4171 = vmatprep.subr.bf16.mxu0 0
        %4172 = vmatpush1.bf16.msra.mxu0 0
        %4173 = vmatprep.subr.bf16.mxu0 0
        %4174 = vmatpush1.bf16.msra.mxu0 %v1255
        %4175 = vmatprep.subr.bf16.mxu0 0
        %4176 = vmatpush1.bf16.msra.mxu0 %v1253
        %4177 = vmatprep.subr.bf16.mxu0 0
        %4178 = vmatpush1.bf16.msra.mxu0 %v1251
        %4179 = vmatprep.subr.bf16.mxu0 0
        %4180 = vmatpush1.bf16.msra.mxu0 %v1249
        %4181 = vmatprep.subr.bf16.mxu0 0
        %4182 = vmatpush2.bf16.msra.mxu0 0
        %4183 = vmatprep.subr.bf16.mxu0 0
        %4184 = vmatpush2.bf16.msra.mxu0 0
        %4185 = vmatprep.subr.bf16.mxu0 0
        %4186 = vmatpush2.bf16.msra.mxu0 0
        %4187 = vmatprep.subr.bf16.mxu0 0
        %4188 = vmatpush2.bf16.msra.mxu0 0
        %4189 = vmatprep.subr.bf16.mxu0 0
        %4190 = vmatpush2.bf16.msra.mxu0 0
        %4191 = vmatprep.subr.bf16.mxu0 0
        %4192 = vmatpush2.bf16.msra.mxu0 0
        %4193 = vmatprep.subr.bf16.mxu0 0
        %4194 = vmatpush2.bf16.msra.mxu0 0
        %4195 = vmatprep.subr.bf16.mxu0 0
        %4196 = vmatpush2.bf16.msra.mxu0 0
        %4197 = vmatprep.mubr.bf16.mxu0 0
        %4198 = vmatmul.mubr.bf16.gmra.mxu0 %v4154
        %v4199 = vpop.f32.mrf.mxu0
        %v4200 = vadd.f32 0.0, %v4199
        %v4201 = vpop.f32.mrf.mxu0
        %v4202 = vpop.f32.mrf.mxu0
        %v4203 = vadd.f32 0.0, %v4202
        %v4204 = vpop.f32.mrf.mxu0
        %4205 = vmatprep.mubr.bf16.mxu0 0
        %4206 = vmatmul.mubr.bf16.gmra.mxu0 %v4157
        %v4207 = vpop.f32.mrf.mxu0
        %v4208 = vadd.f32 0.0, %v4207
        %v4209 = vpop.f32.mrf.mxu0
        %v4210 = vpop.f32.mrf.mxu0
        %v4211 = vadd.f32 0.0, %v4210
        %v4212 = vpop.f32.mrf.mxu0
        %4213 = vmatprep.mubr.bf16.mxu0 0
        %4214 = vmatmul.mubr.bf16.gmra.mxu0 %v4160
        %v4215 = vpop.f32.mrf.mxu0
        %v4216 = vadd.f32 0.0, %v4215
        %v4217 = vpop.f32.mrf.mxu0
        %v4218 = vpop.f32.mrf.mxu0
        %v4219 = vadd.f32 0.0, %v4218
        %v4220 = vpop.f32.mrf.mxu0
        %4221 = vmatprep.mubr.bf16.mxu0 0
        %4222 = vmatmul.mubr.bf16.gmra.mxu0 %v4163
        %v4223 = vpop.f32.mrf.mxu0
        %v4224 = vadd.f32 0.0, %v4223
        %v4225 = vpop.f32.mrf.mxu0
        %v4226 = vpop.f32.mrf.mxu0
        %v4227 = vadd.f32 0.0, %v4226
        %v4228 = vpop.f32.mrf.mxu0
        %4229 = vdwg.mxu0
        %v4231 = vsel %vm2509, %v3598, 0
        %v4234 = vsel %vm2509, %v3599, 0
        %v4237 = vsel %vm2509, %v3600, 0
        %v4240 = vsel %vm2509, %v3601, 0
        %4242 = vmatprep.subr.bf16.mxu0 0
        %4243 = vmatpush1.bf16.msra.mxu0 0
        %4244 = vmatprep.subr.bf16.mxu0 0
        %4245 = vmatpush1.bf16.msra.mxu0 0
        %4246 = vmatprep.subr.bf16.mxu0 0
        %4247 = vmatpush1.bf16.msra.mxu0 0
        %4248 = vmatprep.subr.bf16.mxu0 0
        %4249 = vmatpush1.bf16.msra.mxu0 0
        %4250 = vmatprep.subr.bf16.mxu0 0
        %4251 = vmatpush1.bf16.msra.mxu0 %v1263
        %4252 = vmatprep.subr.bf16.mxu0 0
        %4253 = vmatpush1.bf16.msra.mxu0 %v1261
        %4254 = vmatprep.subr.bf16.mxu0 0
        %4255 = vmatpush1.bf16.msra.mxu0 %v1259
        %4256 = vmatprep.subr.bf16.mxu0 0
        %4257 = vmatpush1.bf16.msra.mxu0 %v1257
        %4258 = vmatprep.subr.bf16.mxu0 0
        %4259 = vmatpush2.bf16.msra.mxu0 0
        %4260 = vmatprep.subr.bf16.mxu0 0
        %4261 = vmatpush2.bf16.msra.mxu0 0
        %4262 = vmatprep.subr.bf16.mxu0 0
        %4263 = vmatpush2.bf16.msra.mxu0 0
        %4264 = vmatprep.subr.bf16.mxu0 0
        %4265 = vmatpush2.bf16.msra.mxu0 0
        %4266 = vmatprep.subr.bf16.mxu0 0
        %4267 = vmatpush2.bf16.msra.mxu0 0
        %4268 = vmatprep.subr.bf16.mxu0 0
        %4269 = vmatpush2.bf16.msra.mxu0 0
        %4270 = vmatprep.subr.bf16.mxu0 0
        %4271 = vmatpush2.bf16.msra.mxu0 0
        %4272 = vmatprep.subr.bf16.mxu0 0
        %4273 = vmatpush2.bf16.msra.mxu0 0
        %4274 = vmatprep.mubr.bf16.mxu0 0
        %4275 = vmatmul.mubr.bf16.gmra.mxu0 %v4231
        %v4276 = vpop.f32.mrf.mxu0
        %v4277 = vadd.f32 0.0, %v4276
        %v4278 = vpop.f32.mrf.mxu0
        %v4279 = vpop.f32.mrf.mxu0
        %v4280 = vadd.f32 0.0, %v4279
        %v4281 = vpop.f32.mrf.mxu0
        %4282 = vmatprep.mubr.bf16.mxu0 0
        %4283 = vmatmul.mubr.bf16.gmra.mxu0 %v4234
        %v4284 = vpop.f32.mrf.mxu0
        %v4285 = vadd.f32 0.0, %v4284
        %v4286 = vpop.f32.mrf.mxu0
        %v4287 = vpop.f32.mrf.mxu0
        %v4288 = vadd.f32 0.0, %v4287
        %v4289 = vpop.f32.mrf.mxu0
        %4290 = vmatprep.mubr.bf16.mxu0 0
        %4291 = vmatmul.mubr.bf16.gmra.mxu0 %v4237
        %v4292 = vpop.f32.mrf.mxu0
        %v4293 = vadd.f32 0.0, %v4292
        %v4294 = vpop.f32.mrf.mxu0
        %v4295 = vpop.f32.mrf.mxu0
        %v4296 = vadd.f32 0.0, %v4295
        %v4297 = vpop.f32.mrf.mxu0
        %4298 = vmatprep.mubr.bf16.mxu0 0
        %4299 = vmatmul.mubr.bf16.gmra.mxu0 %v4240
        %v4300 = vpop.f32.mrf.mxu0
        %v4301 = vadd.f32 0.0, %v4300
        %v4302 = vpop.f32.mrf.mxu0
        %v4303 = vpop.f32.mrf.mxu0
        %v4304 = vadd.f32 0.0, %v4303
        %v4305 = vpop.f32.mrf.mxu0
        %4306 = vdwg.mxu0
        %v4308 = vsel %vm2509, %v3602, 0
        %v4311 = vsel %vm2509, %v3603, 0
        %v4314 = vsel %vm2509, %v3604, 0
        %v4317 = vsel %vm2509, %v3605, 0
        %4319 = vmatprep.subr.bf16.mxu0 0
        %4320 = vmatpush1.bf16.msra.mxu0 0
        %4321 = vmatprep.subr.bf16.mxu0 0
        %4322 = vmatpush1.bf16.msra.mxu0 0
        %4323 = vmatprep.subr.bf16.mxu0 0
        %4324 = vmatpush1.bf16.msra.mxu0 0
        %4325 = vmatprep.subr.bf16.mxu0 0
        %4326 = vmatpush1.bf16.msra.mxu0 0
        %4327 = vmatprep.subr.bf16.mxu0 0
        %4328 = vmatpush1.bf16.msra.mxu0 %v1283
        %4329 = vmatprep.subr.bf16.mxu0 0
        %4330 = vmatpush1.bf16.msra.mxu0 %v1281
        %4331 = vmatprep.subr.bf16.mxu0 0
        %4332 = vmatpush1.bf16.msra.mxu0 %v1279
        %4333 = vmatprep.subr.bf16.mxu0 0
        %4334 = vmatpush1.bf16.msra.mxu0 %v1277
        %4335 = vmatprep.subr.bf16.mxu0 0
        %4336 = vmatpush2.bf16.msra.mxu0 0
        %4337 = vmatprep.subr.bf16.mxu0 0
        %4338 = vmatpush2.bf16.msra.mxu0 0
        %4339 = vmatprep.subr.bf16.mxu0 0
        %4340 = vmatpush2.bf16.msra.mxu0 0
        %4341 = vmatprep.subr.bf16.mxu0 0
        %4342 = vmatpush2.bf16.msra.mxu0 0
        %4343 = vmatprep.subr.bf16.mxu0 0
        %4344 = vmatpush2.bf16.msra.mxu0 0
        %4345 = vmatprep.subr.bf16.mxu0 0
        %4346 = vmatpush2.bf16.msra.mxu0 0
        %4347 = vmatprep.subr.bf16.mxu0 0
        %4348 = vmatpush2.bf16.msra.mxu0 0
        %4349 = vmatprep.subr.bf16.mxu0 0
        %4350 = vmatpush2.bf16.msra.mxu0 0
        %4351 = vmatprep.mubr.bf16.mxu0 0
        %4352 = vmatmul.mubr.bf16.gmra.mxu0 %v4308
        %v4353 = vpop.f32.mrf.mxu0
        %v4354 = vadd.f32 0.0, %v4353
        %v4355 = vpop.f32.mrf.mxu0
        %v4356 = vpop.f32.mrf.mxu0
        %v4357 = vadd.f32 0.0, %v4356
        %v4358 = vpop.f32.mrf.mxu0
        %4359 = vmatprep.mubr.bf16.mxu0 0
        %4360 = vmatmul.mubr.bf16.gmra.mxu0 %v4311
        %v4361 = vpop.f32.mrf.mxu0
        %v4362 = vadd.f32 0.0, %v4361
        %v4363 = vpop.f32.mrf.mxu0
        %v4364 = vpop.f32.mrf.mxu0
        %v4365 = vadd.f32 0.0, %v4364
        %v4366 = vpop.f32.mrf.mxu0
        %4367 = vmatprep.mubr.bf16.mxu0 0
        %4368 = vmatmul.mubr.bf16.gmra.mxu0 %v4314
        %v4369 = vpop.f32.mrf.mxu0
        %v4370 = vadd.f32 0.0, %v4369
        %v4371 = vpop.f32.mrf.mxu0
        %v4372 = vpop.f32.mrf.mxu0
        %v4373 = vadd.f32 0.0, %v4372
        %v4374 = vpop.f32.mrf.mxu0
        %4375 = vmatprep.mubr.bf16.mxu0 0
        %4376 = vmatmul.mubr.bf16.gmra.mxu0 %v4317
        %v4377 = vpop.f32.mrf.mxu0
        %v4378 = vadd.f32 0.0, %v4377
        %v4379 = vpop.f32.mrf.mxu0
        %v4380 = vpop.f32.mrf.mxu0
        %v4381 = vadd.f32 0.0, %v4380
        %v4382 = vpop.f32.mrf.mxu0
        %4383 = vdwg.mxu0
        %v4385 = vsel %vm2509, %v3606, 0
        %v4388 = vsel %vm2509, %v3607, 0
        %v4391 = vsel %vm2509, %v3608, 0
        %v4394 = vsel %vm2509, %v3609, 0
        %4396 = vmatprep.subr.bf16.mxu0 0
        %4397 = vmatpush1.bf16.msra.mxu0 0
        %4398 = vmatprep.subr.bf16.mxu0 0
        %4399 = vmatpush1.bf16.msra.mxu0 0
        %4400 = vmatprep.subr.bf16.mxu0 0
        %4401 = vmatpush1.bf16.msra.mxu0 0
        %4402 = vmatprep.subr.bf16.mxu0 0
        %4403 = vmatpush1.bf16.msra.mxu0 0
        %4404 = vmatprep.subr.bf16.mxu0 0
        %4405 = vmatpush1.bf16.msra.mxu0 %v1291
        %4406 = vmatprep.subr.bf16.mxu0 0
        %4407 = vmatpush1.bf16.msra.mxu0 %v1289
        %4408 = vmatprep.subr.bf16.mxu0 0
        %4409 = vmatpush1.bf16.msra.mxu0 %v1287
        %4410 = vmatprep.subr.bf16.mxu0 0
        %4411 = vmatpush1.bf16.msra.mxu0 %v1285
        %4412 = vmatprep.subr.bf16.mxu0 0
        %4413 = vmatpush2.bf16.msra.mxu0 0
        %4414 = vmatprep.subr.bf16.mxu0 0
        %4415 = vmatpush2.bf16.msra.mxu0 0
        %4416 = vmatprep.subr.bf16.mxu0 0
        %4417 = vmatpush2.bf16.msra.mxu0 0
        %4418 = vmatprep.subr.bf16.mxu0 0
        %4419 = vmatpush2.bf16.msra.mxu0 0
        %4420 = vmatprep.subr.bf16.mxu0 0
        %4421 = vmatpush2.bf16.msra.mxu0 0
        %4422 = vmatprep.subr.bf16.mxu0 0
        %4423 = vmatpush2.bf16.msra.mxu0 0
        %4424 = vmatprep.subr.bf16.mxu0 0
        %4425 = vmatpush2.bf16.msra.mxu0 0
        %4426 = vmatprep.subr.bf16.mxu0 0
        %4427 = vmatpush2.bf16.msra.mxu0 0
        %4428 = vmatprep.mubr.bf16.mxu0 0
        %4429 = vmatmul.mubr.bf16.gmra.mxu0 %v4385
        %v4430 = vpop.f32.mrf.mxu0
        %v4431 = vadd.f32 0.0, %v4430
        %v4432 = vpop.f32.mrf.mxu0
        %v4433 = vpop.f32.mrf.mxu0
        %v4434 = vadd.f32 0.0, %v4433
        %v4435 = vpop.f32.mrf.mxu0
        %4436 = vmatprep.mubr.bf16.mxu0 0
        %4437 = vmatmul.mubr.bf16.gmra.mxu0 %v4388
        %v4438 = vpop.f32.mrf.mxu0
        %v4439 = vadd.f32 0.0, %v4438
        %v4440 = vpop.f32.mrf.mxu0
        %v4441 = vpop.f32.mrf.mxu0
        %v4442 = vadd.f32 0.0, %v4441
        %v4443 = vpop.f32.mrf.mxu0
        %4444 = vmatprep.mubr.bf16.mxu0 0
        %4445 = vmatmul.mubr.bf16.gmra.mxu0 %v4391
        %v4446 = vpop.f32.mrf.mxu0
        %v4447 = vadd.f32 0.0, %v4446
        %v4448 = vpop.f32.mrf.mxu0
        %v4449 = vpop.f32.mrf.mxu0
        %v4450 = vadd.f32 0.0, %v4449
        %v4451 = vpop.f32.mrf.mxu0
        %4452 = vmatprep.mubr.bf16.mxu0 0
        %4453 = vmatmul.mubr.bf16.gmra.mxu0 %v4394
        %v4454 = vpop.f32.mrf.mxu0
        %v4455 = vadd.f32 0.0, %v4454
        %v4456 = vpop.f32.mrf.mxu0
        %v4457 = vpop.f32.mrf.mxu0
        %v4458 = vadd.f32 0.0, %v4457
        %v4459 = vpop.f32.mrf.mxu0
        %4460 = vdwg.mxu0
        %v4462 = vsel %vm2509, %v3610, 0
        %v4465 = vsel %vm2509, %v3611, 0
        %v4468 = vsel %vm2509, %v3612, 0
        %v4471 = vsel %vm2509, %v3613, 0
        %4473 = vmatprep.subr.bf16.mxu0 0
        %4474 = vmatpush1.bf16.msra.mxu0 0
        %4475 = vmatprep.subr.bf16.mxu0 0
        %4476 = vmatpush1.bf16.msra.mxu0 0
        %4477 = vmatprep.subr.bf16.mxu0 0
        %4478 = vmatpush1.bf16.msra.mxu0 0
        %4479 = vmatprep.subr.bf16.mxu0 0
        %4480 = vmatpush1.bf16.msra.mxu0 0
        %4481 = vmatprep.subr.bf16.mxu0 0
        %4482 = vmatpush1.bf16.msra.mxu0 %v1299
        %4483 = vmatprep.subr.bf16.mxu0 0
        %4484 = vmatpush1.bf16.msra.mxu0 %v1297
        %4485 = vmatprep.subr.bf16.mxu0 0
        %4486 = vmatpush1.bf16.msra.mxu0 %v1295
        %4487 = vmatprep.subr.bf16.mxu0 0
        %4488 = vmatpush1.bf16.msra.mxu0 %v1293
        %4489 = vmatprep.subr.bf16.mxu0 0
        %4490 = vmatpush2.bf16.msra.mxu0 0
        %4491 = vmatprep.subr.bf16.mxu0 0
        %4492 = vmatpush2.bf16.msra.mxu0 0
        %4493 = vmatprep.subr.bf16.mxu0 0
        %4494 = vmatpush2.bf16.msra.mxu0 0
        %4495 = vmatprep.subr.bf16.mxu0 0
        %4496 = vmatpush2.bf16.msra.mxu0 0
        %4497 = vmatprep.subr.bf16.mxu0 0
        %4498 = vmatpush2.bf16.msra.mxu0 0
        %4499 = vmatprep.subr.bf16.mxu0 0
        %4500 = vmatpush2.bf16.msra.mxu0 0
        %4501 = vmatprep.subr.bf16.mxu0 0
        %4502 = vmatpush2.bf16.msra.mxu0 0
        %4503 = vmatprep.subr.bf16.mxu0 0
        %4504 = vmatpush2.bf16.msra.mxu0 0
        %4505 = vmatprep.mubr.bf16.mxu0 0
        %4506 = vmatmul.mubr.bf16.gmra.mxu0 %v4462
        %v4507 = vpop.f32.mrf.mxu0
        %v4508 = vadd.f32 0.0, %v4507
        %v4509 = vpop.f32.mrf.mxu0
        %v4510 = vpop.f32.mrf.mxu0
        %v4511 = vadd.f32 0.0, %v4510
        %v4512 = vpop.f32.mrf.mxu0
        %4513 = vmatprep.mubr.bf16.mxu0 0
        %4514 = vmatmul.mubr.bf16.gmra.mxu0 %v4465
        %v4515 = vpop.f32.mrf.mxu0
        %v4516 = vadd.f32 0.0, %v4515
        %v4517 = vpop.f32.mrf.mxu0
        %v4518 = vpop.f32.mrf.mxu0
        %v4519 = vadd.f32 0.0, %v4518
        %v4520 = vpop.f32.mrf.mxu0
        %4521 = vmatprep.mubr.bf16.mxu0 0
        %4522 = vmatmul.mubr.bf16.gmra.mxu0 %v4468
        %v4523 = vpop.f32.mrf.mxu0
        %v4524 = vadd.f32 0.0, %v4523
        %v4525 = vpop.f32.mrf.mxu0
        %v4526 = vpop.f32.mrf.mxu0
        %v4527 = vadd.f32 0.0, %v4526
        %v4528 = vpop.f32.mrf.mxu0
        %4529 = vmatprep.mubr.bf16.mxu0 0
        %4530 = vmatmul.mubr.bf16.gmra.mxu0 %v4471
        %v4531 = vpop.f32.mrf.mxu0
        %v4532 = vadd.f32 0.0, %v4531
        %v4533 = vpop.f32.mrf.mxu0
        %v4534 = vpop.f32.mrf.mxu0
        %v4535 = vadd.f32 0.0, %v4534
        %v4536 = vpop.f32.mrf.mxu0
        %4537 = vdwg.mxu0
        %v4538 = vld [vmem:[%s7] sm:$0x1]
        %v4539 = vpack.c.bf16 %v3664, %v3661
        %v4540 = vpack.c.bf16 %v3672, %v3669
        %v4541 = vpack.c.bf16 %v3680, %v3677
        %v4542 = vpack.c.bf16 %v3688, %v3685
        %v4543 = vpack.c.bf16 %v3741, %v3738
        %v4544 = vpack.c.bf16 %v3749, %v3746
        %v4545 = vpack.c.bf16 %v3757, %v3754
        %v4546 = vpack.c.bf16 %v3765, %v3762
        %v4547 = vpack.c.bf16 %v3818, %v3815
        %v4548 = vpack.c.bf16 %v3826, %v3823
        %v4549 = vpack.c.bf16 %v3834, %v3831
        %v4550 = vpack.c.bf16 %v3842, %v3839
        %v4551 = vld [vmem:[#allocation10] sm:$0xf]
        %v4552 = vld [vmem:[#allocation10 + $0x4] sm:$0xf]
        %v4553 = vld [vmem:[#allocation10 + $0x8] sm:$0xf]
        %v4554 = vld [vmem:[#allocation10 + $0xc] sm:$0xf]
        %v4559 = vunpack.c.l.b16 %v4551
        %v4560 = vunpack.c.l.b16 %v4552
        %v4561 = vunpack.c.l.b16 %v4553
        %v4562 = vunpack.c.l.b16 %v4554
        %v4563 = vpack.c.b16 %v4560, %v4559
        %v4564 = vpack.c.b16 %v4562, %v4561
        %v4568 = vsel %vm1312, %v4539, 0
        %v4571 = vsel %vm1312, %v4540, 0
        %v4574 = vsel %vm1312, %v4541, 0
        %v4577 = vsel %vm1312, %v4542, 0
        %v4580 = vsel %vm1312, %v4543, 0
        %v4583 = vsel %vm1312, %v4544, 0
        %v4586 = vsel %vm1312, %v4545, 0
        %v4589 = vsel %vm1312, %v4546, 0
        %v4592 = vsel %vm1312, %v4547, 0
        %v4595 = vsel %vm1312, %v4548, 0
        %v4598 = vsel %vm1312, %v4549, 0
        %v4601 = vsel %vm1312, %v4550, 0
        %4603 = vmatprep.subr.bf16.mxu0 0
        %4604 = vmatpush1.bf16.msra.mxu0 0
        %4605 = vmatprep.subr.bf16.mxu0 0
        %4606 = vmatpush1.bf16.msra.mxu0 0
        %4607 = vmatprep.subr.bf16.mxu0 0
        %4608 = vmatpush1.bf16.msra.mxu0 0
        %4609 = vmatprep.subr.bf16.mxu0 0
        %4610 = vmatpush1.bf16.msra.mxu0 0
        %4611 = vmatprep.subr.bf16.mxu0 0
        %4612 = vmatpush1.bf16.msra.mxu0 0
        %4613 = vmatprep.subr.bf16.mxu0 0
        %4614 = vmatpush1.bf16.msra.mxu0 0
        %4615 = vmatprep.subr.bf16.mxu0 0
        %4616 = vmatpush1.bf16.msra.mxu0 %v4564
        %4617 = vmatprep.subr.bf16.mxu0 0
        %4618 = vmatpush1.bf16.msra.mxu0 %v4563
        %4619 = vmatprep.subr.bf16.mxu0 0
        %4620 = vmatpush2.bf16.msra.mxu0 0
        %4621 = vmatprep.subr.bf16.mxu0 0
        %4622 = vmatpush2.bf16.msra.mxu0 0
        %4623 = vmatprep.subr.bf16.mxu0 0
        %4624 = vmatpush2.bf16.msra.mxu0 0
        %4625 = vmatprep.subr.bf16.mxu0 0
        %4626 = vmatpush2.bf16.msra.mxu0 0
        %4627 = vmatprep.subr.bf16.mxu0 0
        %4628 = vmatpush2.bf16.msra.mxu0 0
        %4629 = vmatprep.subr.bf16.mxu0 0
        %4630 = vmatpush2.bf16.msra.mxu0 0
        %4631 = vmatprep.subr.bf16.mxu0 0
        %4632 = vmatpush2.bf16.msra.mxu0 0
        %4633 = vmatprep.subr.bf16.mxu0 0
        %4634 = vmatpush2.bf16.msra.mxu0 0
        %4635 = vmatprep.mubr.bf16.mxu0 0
        %4636 = vmatmul.mubr.bf16.gmra.mxu0 %v4568
        %v4637 = vpop.f32.mrf.mxu0
        %v4638 = vadd.f32 0.0, %v4637
        %v4639 = vpop.f32.mrf.mxu0
        %v4640 = vpop.f32.mrf.mxu0
        %v4641 = vadd.f32 0.0, %v4640
        %v4642 = vpop.f32.mrf.mxu0
        %4643 = vmatprep.mubr.bf16.mxu0 0
        %4644 = vmatmul.mubr.bf16.gmra.mxu0 %v4571
        %v4645 = vpop.f32.mrf.mxu0
        %v4646 = vadd.f32 0.0, %v4645
        %v4647 = vpop.f32.mrf.mxu0
        %v4648 = vpop.f32.mrf.mxu0
        %v4649 = vadd.f32 0.0, %v4648
        %v4650 = vpop.f32.mrf.mxu0
        %4651 = vmatprep.mubr.bf16.mxu0 0
        %4652 = vmatmul.mubr.bf16.gmra.mxu0 %v4574
        %v4653 = vpop.f32.mrf.mxu0
        %v4654 = vadd.f32 0.0, %v4653
        %v4655 = vpop.f32.mrf.mxu0
        %v4656 = vpop.f32.mrf.mxu0
        %v4657 = vadd.f32 0.0, %v4656
        %v4658 = vpop.f32.mrf.mxu0
        %4659 = vmatprep.mubr.bf16.mxu0 0
        %4660 = vmatmul.mubr.bf16.gmra.mxu0 %v4577
        %v4661 = vpop.f32.mrf.mxu0
        %v4662 = vadd.f32 0.0, %v4661
        %v4663 = vpop.f32.mrf.mxu0
        %v4664 = vpop.f32.mrf.mxu0
        %v4665 = vadd.f32 0.0, %v4664
        %v4666 = vpop.f32.mrf.mxu0
        %4667 = vmatprep.mubr.bf16.mxu0 0
        %4668 = vmatmul.mubr.bf16.gmra.mxu0 %v4580
        %v4669 = vpop.f32.mrf.mxu0
        %v4670 = vadd.f32 0.0, %v4669
        %v4671 = vpop.f32.mrf.mxu0
        %v4672 = vpop.f32.mrf.mxu0
        %v4673 = vadd.f32 0.0, %v4672
        %v4674 = vpop.f32.mrf.mxu0
        %4675 = vmatprep.mubr.bf16.mxu0 0
        %4676 = vmatmul.mubr.bf16.gmra.mxu0 %v4583
        %v4677 = vpop.f32.mrf.mxu0
        %v4678 = vadd.f32 0.0, %v4677
        %v4679 = vpop.f32.mrf.mxu0
        %v4680 = vpop.f32.mrf.mxu0
        %v4681 = vadd.f32 0.0, %v4680
        %v4682 = vpop.f32.mrf.mxu0
        %4683 = vmatprep.mubr.bf16.mxu0 0
        %4684 = vmatmul.mubr.bf16.gmra.mxu0 %v4586
        %v4685 = vpop.f32.mrf.mxu0
        %v4686 = vadd.f32 0.0, %v4685
        %v4687 = vpop.f32.mrf.mxu0
        %v4688 = vpop.f32.mrf.mxu0
        %v4689 = vadd.f32 0.0, %v4688
        %v4690 = vpop.f32.mrf.mxu0
        %4691 = vmatprep.mubr.bf16.mxu0 0
        %4692 = vmatmul.mubr.bf16.gmra.mxu0 %v4589
        %v4693 = vpop.f32.mrf.mxu0
        %v4694 = vadd.f32 0.0, %v4693
        %v4695 = vpop.f32.mrf.mxu0
        %v4696 = vpop.f32.mrf.mxu0
        %v4697 = vadd.f32 0.0, %v4696
        %v4698 = vpop.f32.mrf.mxu0
        %4699 = vmatprep.mubr.bf16.mxu0 0
        %4700 = vmatmul.mubr.bf16.gmra.mxu0 %v4592
        %v4701 = vpop.f32.mrf.mxu0
        %v4702 = vadd.f32 0.0, %v4701
        %v4703 = vpop.f32.mrf.mxu0
        %v4704 = vpop.f32.mrf.mxu0
        %v4705 = vadd.f32 0.0, %v4704
        %v4706 = vpop.f32.mrf.mxu0
        %4707 = vmatprep.mubr.bf16.mxu0 0
        %4708 = vmatmul.mubr.bf16.gmra.mxu0 %v4595
        %v4709 = vpop.f32.mrf.mxu0
        %v4710 = vadd.f32 0.0, %v4709
        %v4711 = vpop.f32.mrf.mxu0
        %v4712 = vpop.f32.mrf.mxu0
        %v4713 = vadd.f32 0.0, %v4712
        %v4714 = vpop.f32.mrf.mxu0
        %4715 = vmatprep.mubr.bf16.mxu0 0
        %4716 = vmatmul.mubr.bf16.gmra.mxu0 %v4598
        %v4717 = vpop.f32.mrf.mxu0
        %v4718 = vadd.f32 0.0, %v4717
        %v4719 = vpop.f32.mrf.mxu0
        %v4720 = vpop.f32.mrf.mxu0
        %v4721 = vadd.f32 0.0, %v4720
        %v4722 = vpop.f32.mrf.mxu0
        %4723 = vmatprep.mubr.bf16.mxu0 0
        %4724 = vmatmul.mubr.bf16.gmra.mxu0 %v4601
        %v4725 = vpop.f32.mrf.mxu0
        %v4726 = vadd.f32 0.0, %v4725
        %v4727 = vpop.f32.mrf.mxu0
        %v4728 = vpop.f32.mrf.mxu0
        %v4729 = vadd.f32 0.0, %v4728
        %v4730 = vpop.f32.mrf.mxu0
        %4731 = vdwg.mxu0
        %v4733 = vlaneseq
        %v4734 = vshrl.u32 %v4733, 7
        %v4735 = vsub.s32 0, %v4734
        %v4736 = vrot.slane %v4538, %v4735
        %v4738 = vadd.f32 %v4736, %v4638
        %v4739 = vadd.f32 %v4736, %v4641
        %v4740 = vadd.f32 %v4736, %v4646
        %v4741 = vadd.f32 %v4736, %v4649
        %v4742 = vadd.f32 %v4736, %v4654
        %v4743 = vadd.f32 %v4736, %v4657
        %v4744 = vadd.f32 %v4736, %v4662
        %v4745 = vadd.f32 %v4736, %v4665
        %v4746 = vadd.f32 %v4736, %v4670
        %v4747 = vadd.f32 %v4736, %v4673
        %v4748 = vadd.f32 %v4736, %v4678
        %v4749 = vadd.f32 %v4736, %v4681
        %v4750 = vadd.f32 %v4736, %v4686
        %v4751 = vadd.f32 %v4736, %v4689
        %v4752 = vadd.f32 %v4736, %v4694
        %v4753 = vadd.f32 %v4736, %v4697
        %v4754 = vadd.f32 %v4736, %v4702
        %v4755 = vadd.f32 %v4736, %v4705
        %v4756 = vadd.f32 %v4736, %v4710
        %v4757 = vadd.f32 %v4736, %v4713
        %v4758 = vadd.f32 %v4736, %v4718
        %v4759 = vadd.f32 %v4736, %v4721
        %v4760 = vadd.f32 %v4736, %v4726
        %v4761 = vadd.f32 %v4736, %v4729
        %v4762 = vpack.c.bf16 %v3895, %v3892
        %v4763 = vpack.c.bf16 %v3903, %v3900
        %v4764 = vpack.c.bf16 %v3911, %v3908
        %v4765 = vpack.c.bf16 %v3919, %v3916
        %v4766 = vpack.c.bf16 %v3972, %v3969
        %v4767 = vpack.c.bf16 %v3980, %v3977
        %v4768 = vpack.c.bf16 %v3988, %v3985
        %v4769 = vpack.c.bf16 %v3996, %v3993
        %v4770 = vpack.c.bf16 %v4049, %v4046
        %v4771 = vpack.c.bf16 %v4057, %v4054
        %v4772 = vpack.c.bf16 %v4065, %v4062
        %v4773 = vpack.c.bf16 %v4073, %v4070
        %s4774 = scalar_lea.vmem [#allocation10], 16
        %v4775 = vld [vmem:[%s4774] sm:$0xf]
        %v4776 = vld [vmem:[%s4774 + $0x4] sm:$0xf]
        %v4777 = vld [vmem:[%s4774 + $0x8] sm:$0xf]
        %v4778 = vld [vmem:[%s4774 + $0xc] sm:$0xf]
        %v4783 = vunpack.c.l.b16 %v4775
        %v4784 = vunpack.c.l.b16 %v4776
        %v4785 = vunpack.c.l.b16 %v4777
        %v4786 = vunpack.c.l.b16 %v4778
        %v4787 = vpack.c.b16 %v4784, %v4783
        %v4788 = vpack.c.b16 %v4786, %v4785
        %v4792 = vsel %vm1312, %v4762, 0
        %v4795 = vsel %vm1312, %v4763, 0
        %v4798 = vsel %vm1312, %v4764, 0
        %v4801 = vsel %vm1312, %v4765, 0
        %v4804 = vsel %vm1312, %v4766, 0
        %v4807 = vsel %vm1312, %v4767, 0
        %v4810 = vsel %vm1312, %v4768, 0
        %v4813 = vsel %vm1312, %v4769, 0
        %v4816 = vsel %vm1312, %v4770, 0
        %v4819 = vsel %vm1312, %v4771, 0
        %v4822 = vsel %vm1312, %v4772, 0
        %v4825 = vsel %vm1312, %v4773, 0
        %4827 = vmatprep.subr.bf16.mxu0 0
        %4828 = vmatpush1.bf16.msra.mxu0 0
        %4829 = vmatprep.subr.bf16.mxu0 0
        %4830 = vmatpush1.bf16.msra.mxu0 0
        %4831 = vmatprep.subr.bf16.mxu0 0
        %4832 = vmatpush1.bf16.msra.mxu0 0
        %4833 = vmatprep.subr.bf16.mxu0 0
        %4834 = vmatpush1.bf16.msra.mxu0 0
        %4835 = vmatprep.subr.bf16.mxu0 0
        %4836 = vmatpush1.bf16.msra.mxu0 0
        %4837 = vmatprep.subr.bf16.mxu0 0
        %4838 = vmatpush1.bf16.msra.mxu0 0
        %4839 = vmatprep.subr.bf16.mxu0 0
        %4840 = vmatpush1.bf16.msra.mxu0 %v4788
        %4841 = vmatprep.subr.bf16.mxu0 0
        %4842 = vmatpush1.bf16.msra.mxu0 %v4787
        %4843 = vmatprep.subr.bf16.mxu0 0
        %4844 = vmatpush2.bf16.msra.mxu0 0
        %4845 = vmatprep.subr.bf16.mxu0 0
        %4846 = vmatpush2.bf16.msra.mxu0 0
        %4847 = vmatprep.subr.bf16.mxu0 0
        %4848 = vmatpush2.bf16.msra.mxu0 0
        %4849 = vmatprep.subr.bf16.mxu0 0
        %4850 = vmatpush2.bf16.msra.mxu0 0
        %4851 = vmatprep.subr.bf16.mxu0 0
        %4852 = vmatpush2.bf16.msra.mxu0 0
        %4853 = vmatprep.subr.bf16.mxu0 0
        %4854 = vmatpush2.bf16.msra.mxu0 0
        %4855 = vmatprep.subr.bf16.mxu0 0
        %4856 = vmatpush2.bf16.msra.mxu0 0
        %4857 = vmatprep.subr.bf16.mxu0 0
        %4858 = vmatpush2.bf16.msra.mxu0 0
        %4859 = vmatprep.mubr.bf16.mxu0 0
        %4860 = vmatmul.mubr.bf16.gmra.mxu0 %v4792
        %v4861 = vpop.f32.mrf.mxu0
        %v4862 = vadd.f32 0.0, %v4861
        %v4863 = vpop.f32.mrf.mxu0
        %v4864 = vpop.f32.mrf.mxu0
        %v4865 = vadd.f32 0.0, %v4864
        %v4866 = vpop.f32.mrf.mxu0
        %4867 = vmatprep.mubr.bf16.mxu0 0
        %4868 = vmatmul.mubr.bf16.gmra.mxu0 %v4795
        %v4869 = vpop.f32.mrf.mxu0
        %v4870 = vadd.f32 0.0, %v4869
        %v4871 = vpop.f32.mrf.mxu0
        %v4872 = vpop.f32.mrf.mxu0
        %v4873 = vadd.f32 0.0, %v4872
        %v4874 = vpop.f32.mrf.mxu0
        %4875 = vmatprep.mubr.bf16.mxu0 0
        %4876 = vmatmul.mubr.bf16.gmra.mxu0 %v4798
        %v4877 = vpop.f32.mrf.mxu0
        %v4878 = vadd.f32 0.0, %v4877
        %v4879 = vpop.f32.mrf.mxu0
        %v4880 = vpop.f32.mrf.mxu0
        %v4881 = vadd.f32 0.0, %v4880
        %v4882 = vpop.f32.mrf.mxu0
        %4883 = vmatprep.mubr.bf16.mxu0 0
        %4884 = vmatmul.mubr.bf16.gmra.mxu0 %v4801
        %v4885 = vpop.f32.mrf.mxu0
        %v4886 = vadd.f32 0.0, %v4885
        %v4887 = vpop.f32.mrf.mxu0
        %v4888 = vpop.f32.mrf.mxu0
        %v4889 = vadd.f32 0.0, %v4888
        %v4890 = vpop.f32.mrf.mxu0
        %4891 = vmatprep.mubr.bf16.mxu0 0
        %4892 = vmatmul.mubr.bf16.gmra.mxu0 %v4804
        %v4893 = vpop.f32.mrf.mxu0
        %v4894 = vadd.f32 0.0, %v4893
        %v4895 = vpop.f32.mrf.mxu0
        %v4896 = vpop.f32.mrf.mxu0
        %v4897 = vadd.f32 0.0, %v4896
        %v4898 = vpop.f32.mrf.mxu0
        %4899 = vmatprep.mubr.bf16.mxu0 0
        %4900 = vmatmul.mubr.bf16.gmra.mxu0 %v4807
        %v4901 = vpop.f32.mrf.mxu0
        %v4902 = vadd.f32 0.0, %v4901
        %v4903 = vpop.f32.mrf.mxu0
        %v4904 = vpop.f32.mrf.mxu0
        %v4905 = vadd.f32 0.0, %v4904
        %v4906 = vpop.f32.mrf.mxu0
        %4907 = vmatprep.mubr.bf16.mxu0 0
        %4908 = vmatmul.mubr.bf16.gmra.mxu0 %v4810
        %v4909 = vpop.f32.mrf.mxu0
        %v4910 = vadd.f32 0.0, %v4909
        %v4911 = vpop.f32.mrf.mxu0
        %v4912 = vpop.f32.mrf.mxu0
        %v4913 = vadd.f32 0.0, %v4912
        %v4914 = vpop.f32.mrf.mxu0
        %4915 = vmatprep.mubr.bf16.mxu0 0
        %4916 = vmatmul.mubr.bf16.gmra.mxu0 %v4813
        %v4917 = vpop.f32.mrf.mxu0
        %v4918 = vadd.f32 0.0, %v4917
        %v4919 = vpop.f32.mrf.mxu0
        %v4920 = vpop.f32.mrf.mxu0
        %v4921 = vadd.f32 0.0, %v4920
        %v4922 = vpop.f32.mrf.mxu0
        %4923 = vmatprep.mubr.bf16.mxu0 0
        %4924 = vmatmul.mubr.bf16.gmra.mxu0 %v4816
        %v4925 = vpop.f32.mrf.mxu0
        %v4926 = vadd.f32 0.0, %v4925
        %v4927 = vpop.f32.mrf.mxu0
        %v4928 = vpop.f32.mrf.mxu0
        %v4929 = vadd.f32 0.0, %v4928
        %v4930 = vpop.f32.mrf.mxu0
        %4931 = vmatprep.mubr.bf16.mxu0 0
        %4932 = vmatmul.mubr.bf16.gmra.mxu0 %v4819
        %v4933 = vpop.f32.mrf.mxu0
        %v4934 = vadd.f32 0.0, %v4933
        %v4935 = vpop.f32.mrf.mxu0
        %v4936 = vpop.f32.mrf.mxu0
        %v4937 = vadd.f32 0.0, %v4936
        %v4938 = vpop.f32.mrf.mxu0
        %4939 = vmatprep.mubr.bf16.mxu0 0
        %4940 = vmatmul.mubr.bf16.gmra.mxu0 %v4822
        %v4941 = vpop.f32.mrf.mxu0
        %v4942 = vadd.f32 0.0, %v4941
        %v4943 = vpop.f32.mrf.mxu0
        %v4944 = vpop.f32.mrf.mxu0
        %v4945 = vadd.f32 0.0, %v4944
        %v4946 = vpop.f32.mrf.mxu0
        %4947 = vmatprep.mubr.bf16.mxu0 0
        %4948 = vmatmul.mubr.bf16.gmra.mxu0 %v4825
        %v4949 = vpop.f32.mrf.mxu0
        %v4950 = vadd.f32 0.0, %v4949
        %v4951 = vpop.f32.mrf.mxu0
        %v4952 = vpop.f32.mrf.mxu0
        %v4953 = vadd.f32 0.0, %v4952
        %v4954 = vpop.f32.mrf.mxu0
        %4955 = vdwg.mxu0
        %v4956 = vadd.f32 %v4738, %v4862
        %v4957 = vadd.f32 %v4739, %v4865
        %v4958 = vadd.f32 %v4740, %v4870
        %v4959 = vadd.f32 %v4741, %v4873
        %v4960 = vadd.f32 %v4742, %v4878
        %v4961 = vadd.f32 %v4743, %v4881
        %v4962 = vadd.f32 %v4744, %v4886
        %v4963 = vadd.f32 %v4745, %v4889
        %v4964 = vadd.f32 %v4746, %v4894
        %v4965 = vadd.f32 %v4747, %v4897
        %v4966 = vadd.f32 %v4748, %v4902
        %v4967 = vadd.f32 %v4749, %v4905
        %v4968 = vadd.f32 %v4750, %v4910
        %v4969 = vadd.f32 %v4751, %v4913
        %v4970 = vadd.f32 %v4752, %v4918
        %v4971 = vadd.f32 %v4753, %v4921
        %v4972 = vadd.f32 %v4754, %v4926
        %v4973 = vadd.f32 %v4755, %v4929
        %v4974 = vadd.f32 %v4756, %v4934
        %v4975 = vadd.f32 %v4757, %v4937
        %v4976 = vadd.f32 %v4758, %v4942
        %v4977 = vadd.f32 %v4759, %v4945
        %v4978 = vadd.f32 %v4760, %v4950
        %v4979 = vadd.f32 %v4761, %v4953
        %v4980 = vpack.c.bf16 %v4126, %v4123
        %v4981 = vpack.c.bf16 %v4134, %v4131
        %v4982 = vpack.c.bf16 %v4142, %v4139
        %v4983 = vpack.c.bf16 %v4150, %v4147
        %v4984 = vpack.c.bf16 %v4203, %v4200
        %v4985 = vpack.c.bf16 %v4211, %v4208
        %v4986 = vpack.c.bf16 %v4219, %v4216
        %v4987 = vpack.c.bf16 %v4227, %v4224
        %v4988 = vpack.c.bf16 %v4280, %v4277
        %v4989 = vpack.c.bf16 %v4288, %v4285
        %v4990 = vpack.c.bf16 %v4296, %v4293
        %v4991 = vpack.c.bf16 %v4304, %v4301
        %s4992 = scalar_lea.vmem [#allocation10], 32
        %v4993 = vld [vmem:[%s4992] sm:$0xf]
        %v4994 = vld [vmem:[%s4992 + $0x4] sm:$0xf]
        %v4995 = vld [vmem:[%s4992 + $0x8] sm:$0xf]
        %v4996 = vld [vmem:[%s4992 + $0xc] sm:$0xf]
        %v5001 = vunpack.c.l.b16 %v4993
        %v5002 = vunpack.c.l.b16 %v4994
        %v5003 = vunpack.c.l.b16 %v4995
        %v5004 = vunpack.c.l.b16 %v4996
        %v5005 = vpack.c.b16 %v5002, %v5001
        %v5006 = vpack.c.b16 %v5004, %v5003
        %v5010 = vsel %vm1312, %v4980, 0
        %v5013 = vsel %vm1312, %v4981, 0
        %v5016 = vsel %vm1312, %v4982, 0
        %v5019 = vsel %vm1312, %v4983, 0
        %v5022 = vsel %vm1312, %v4984, 0
        %v5025 = vsel %vm1312, %v4985, 0
        %v5028 = vsel %vm1312, %v4986, 0
        %v5031 = vsel %vm1312, %v4987, 0
        %v5034 = vsel %vm1312, %v4988, 0
        %v5037 = vsel %vm1312, %v4989, 0
        %v5040 = vsel %vm1312, %v4990, 0
        %v5043 = vsel %vm1312, %v4991, 0
        %5045 = vmatprep.subr.bf16.mxu0 0
        %5046 = vmatpush1.bf16.msra.mxu0 0
        %5047 = vmatprep.subr.bf16.mxu0 0
        %5048 = vmatpush1.bf16.msra.mxu0 0
        %5049 = vmatprep.subr.bf16.mxu0 0
        %5050 = vmatpush1.bf16.msra.mxu0 0
        %5051 = vmatprep.subr.bf16.mxu0 0
        %5052 = vmatpush1.bf16.msra.mxu0 0
        %5053 = vmatprep.subr.bf16.mxu0 0
        %5054 = vmatpush1.bf16.msra.mxu0 0
        %5055 = vmatprep.subr.bf16.mxu0 0
        %5056 = vmatpush1.bf16.msra.mxu0 0
        %5057 = vmatprep.subr.bf16.mxu0 0
        %5058 = vmatpush1.bf16.msra.mxu0 %v5006
        %5059 = vmatprep.subr.bf16.mxu0 0
        %5060 = vmatpush1.bf16.msra.mxu0 %v5005
        %5061 = vmatprep.subr.bf16.mxu0 0
        %5062 = vmatpush2.bf16.msra.mxu0 0
        %5063 = vmatprep.subr.bf16.mxu0 0
        %5064 = vmatpush2.bf16.msra.mxu0 0
        %5065 = vmatprep.subr.bf16.mxu0 0
        %5066 = vmatpush2.bf16.msra.mxu0 0
        %5067 = vmatprep.subr.bf16.mxu0 0
        %5068 = vmatpush2.bf16.msra.mxu0 0
        %5069 = vmatprep.subr.bf16.mxu0 0
        %5070 = vmatpush2.bf16.msra.mxu0 0
        %5071 = vmatprep.subr.bf16.mxu0 0
        %5072 = vmatpush2.bf16.msra.mxu0 0
        %5073 = vmatprep.subr.bf16.mxu0 0
        %5074 = vmatpush2.bf16.msra.mxu0 0
        %5075 = vmatprep.subr.bf16.mxu0 0
        %5076 = vmatpush2.bf16.msra.mxu0 0
        %5077 = vmatprep.mubr.bf16.mxu0 0
        %5078 = vmatmul.mubr.bf16.gmra.mxu0 %v5010
        %v5079 = vpop.f32.mrf.mxu0
        %v5080 = vadd.f32 0.0, %v5079
        %v5081 = vpop.f32.mrf.mxu0
        %v5082 = vpop.f32.mrf.mxu0
        %v5083 = vadd.f32 0.0, %v5082
        %v5084 = vpop.f32.mrf.mxu0
        %5085 = vmatprep.mubr.bf16.mxu0 0
        %5086 = vmatmul.mubr.bf16.gmra.mxu0 %v5013
        %v5087 = vpop.f32.mrf.mxu0
        %v5088 = vadd.f32 0.0, %v5087
        %v5089 = vpop.f32.mrf.mxu0
        %v5090 = vpop.f32.mrf.mxu0
        %v5091 = vadd.f32 0.0, %v5090
        %v5092 = vpop.f32.mrf.mxu0
        %5093 = vmatprep.mubr.bf16.mxu0 0
        %5094 = vmatmul.mubr.bf16.gmra.mxu0 %v5016
        %v5095 = vpop.f32.mrf.mxu0
        %v5096 = vadd.f32 0.0, %v5095
        %v5097 = vpop.f32.mrf.mxu0
        %v5098 = vpop.f32.mrf.mxu0
        %v5099 = vadd.f32 0.0, %v5098
        %v5100 = vpop.f32.mrf.mxu0
        %5101 = vmatprep.mubr.bf16.mxu0 0
        %5102 = vmatmul.mubr.bf16.gmra.mxu0 %v5019
        %v5103 = vpop.f32.mrf.mxu0
        %v5104 = vadd.f32 0.0, %v5103
        %v5105 = vpop.f32.mrf.mxu0
        %v5106 = vpop.f32.mrf.mxu0
        %v5107 = vadd.f32 0.0, %v5106
        %v5108 = vpop.f32.mrf.mxu0
        %5109 = vmatprep.mubr.bf16.mxu0 0
        %5110 = vmatmul.mubr.bf16.gmra.mxu0 %v5022
        %v5111 = vpop.f32.mrf.mxu0
        %v5112 = vadd.f32 0.0, %v5111
        %v5113 = vpop.f32.mrf.mxu0
        %v5114 = vpop.f32.mrf.mxu0
        %v5115 = vadd.f32 0.0, %v5114
        %v5116 = vpop.f32.mrf.mxu0
        %5117 = vmatprep.mubr.bf16.mxu0 0
        %5118 = vmatmul.mubr.bf16.gmra.mxu0 %v5025
        %v5119 = vpop.f32.mrf.mxu0
        %v5120 = vadd.f32 0.0, %v5119
        %v5121 = vpop.f32.mrf.mxu0
        %v5122 = vpop.f32.mrf.mxu0
        %v5123 = vadd.f32 0.0, %v5122
        %v5124 = vpop.f32.mrf.mxu0
        %5125 = vmatprep.mubr.bf16.mxu0 0
        %5126 = vmatmul.mubr.bf16.gmra.mxu0 %v5028
        %v5127 = vpop.f32.mrf.mxu0
        %v5128 = vadd.f32 0.0, %v5127
        %v5129 = vpop.f32.mrf.mxu0
        %v5130 = vpop.f32.mrf.mxu0
        %v5131 = vadd.f32 0.0, %v5130
        %v5132 = vpop.f32.mrf.mxu0
        %5133 = vmatprep.mubr.bf16.mxu0 0
        %5134 = vmatmul.mubr.bf16.gmra.mxu0 %v5031
        %v5135 = vpop.f32.mrf.mxu0
        %v5136 = vadd.f32 0.0, %v5135
        %v5137 = vpop.f32.mrf.mxu0
        %v5138 = vpop.f32.mrf.mxu0
        %v5139 = vadd.f32 0.0, %v5138
        %v5140 = vpop.f32.mrf.mxu0
        %5141 = vmatprep.mubr.bf16.mxu0 0
        %5142 = vmatmul.mubr.bf16.gmra.mxu0 %v5034
        %v5143 = vpop.f32.mrf.mxu0
        %v5144 = vadd.f32 0.0, %v5143
        %v5145 = vpop.f32.mrf.mxu0
        %v5146 = vpop.f32.mrf.mxu0
        %v5147 = vadd.f32 0.0, %v5146
        %v5148 = vpop.f32.mrf.mxu0
        %5149 = vmatprep.mubr.bf16.mxu0 0
        %5150 = vmatmul.mubr.bf16.gmra.mxu0 %v5037
        %v5151 = vpop.f32.mrf.mxu0
        %v5152 = vadd.f32 0.0, %v5151
        %v5153 = vpop.f32.mrf.mxu0
        %v5154 = vpop.f32.mrf.mxu0
        %v5155 = vadd.f32 0.0, %v5154
        %v5156 = vpop.f32.mrf.mxu0
        %5157 = vmatprep.mubr.bf16.mxu0 0
        %5158 = vmatmul.mubr.bf16.gmra.mxu0 %v5040
        %v5159 = vpop.f32.mrf.mxu0
        %v5160 = vadd.f32 0.0, %v5159
        %v5161 = vpop.f32.mrf.mxu0
        %v5162 = vpop.f32.mrf.mxu0
        %v5163 = vadd.f32 0.0, %v5162
        %v5164 = vpop.f32.mrf.mxu0
        %5165 = vmatprep.mubr.bf16.mxu0 0
        %5166 = vmatmul.mubr.bf16.gmra.mxu0 %v5043
        %v5167 = vpop.f32.mrf.mxu0
        %v5168 = vadd.f32 0.0, %v5167
        %v5169 = vpop.f32.mrf.mxu0
        %v5170 = vpop.f32.mrf.mxu0
        %v5171 = vadd.f32 0.0, %v5170
        %v5172 = vpop.f32.mrf.mxu0
        %5173 = vdwg.mxu0
        %v5174 = vadd.f32 %v4956, %v5080
        %v5175 = vadd.f32 %v4957, %v5083
        %v5176 = vadd.f32 %v4958, %v5088
        %v5177 = vadd.f32 %v4959, %v5091
        %v5178 = vadd.f32 %v4960, %v5096
        %v5179 = vadd.f32 %v4961, %v5099
        %v5180 = vadd.f32 %v4962, %v5104
        %v5181 = vadd.f32 %v4963, %v5107
        %v5182 = vadd.f32 %v4964, %v5112
        %v5183 = vadd.f32 %v4965, %v5115
        %v5184 = vadd.f32 %v4966, %v5120
        %v5185 = vadd.f32 %v4967, %v5123
        %v5186 = vadd.f32 %v4968, %v5128
        %v5187 = vadd.f32 %v4969, %v5131
        %v5188 = vadd.f32 %v4970, %v5136
        %v5189 = vadd.f32 %v4971, %v5139
        %v5190 = vadd.f32 %v4972, %v5144
        %v5191 = vadd.f32 %v4973, %v5147
        %v5192 = vadd.f32 %v4974, %v5152
        %v5193 = vadd.f32 %v4975, %v5155
        %v5194 = vadd.f32 %v4976, %v5160
        %v5195 = vadd.f32 %v4977, %v5163
        %v5196 = vadd.f32 %v4978, %v5168
        %v5197 = vadd.f32 %v4979, %v5171
        %v5198 = vpack.c.bf16 %v4357, %v4354
        %v5199 = vpack.c.bf16 %v4365, %v4362
        %v5200 = vpack.c.bf16 %v4373, %v4370
        %v5201 = vpack.c.bf16 %v4381, %v4378
        %v5202 = vpack.c.bf16 %v4434, %v4431
        %v5203 = vpack.c.bf16 %v4442, %v4439
        %v5204 = vpack.c.bf16 %v4450, %v4447
        %v5205 = vpack.c.bf16 %v4458, %v4455
        %v5206 = vpack.c.bf16 %v4511, %v4508
        %v5207 = vpack.c.bf16 %v4519, %v4516
        %v5208 = vpack.c.bf16 %v4527, %v4524
        %v5209 = vpack.c.bf16 %v4535, %v4532
        %s5210 = scalar_lea.vmem [#allocation10], 48
        %v5211 = vld [vmem:[%s5210] sm:$0xf]
        %v5212 = vld [vmem:[%s5210 + $0x4] sm:$0xf]
        %v5213 = vld [vmem:[%s5210 + $0x8] sm:$0xf]
        %v5214 = vld [vmem:[%s5210 + $0xc] sm:$0xf]
        %v5219 = vunpack.c.l.b16 %v5211
        %v5220 = vunpack.c.l.b16 %v5212
        %v5221 = vunpack.c.l.b16 %v5213
        %v5222 = vunpack.c.l.b16 %v5214
        %v5223 = vpack.c.b16 %v5220, %v5219
        %v5224 = vpack.c.b16 %v5222, %v5221
        %v5228 = vsel %vm1312, %v5198, 0
        %v5231 = vsel %vm1312, %v5199, 0
        %v5234 = vsel %vm1312, %v5200, 0
        %v5237 = vsel %vm1312, %v5201, 0
        %v5240 = vsel %vm1312, %v5202, 0
        %v5243 = vsel %vm1312, %v5203, 0
        %v5246 = vsel %vm1312, %v5204, 0
        %v5249 = vsel %vm1312, %v5205, 0
        %v5252 = vsel %vm1312, %v5206, 0
        %v5255 = vsel %vm1312, %v5207, 0
        %v5258 = vsel %vm1312, %v5208, 0
        %v5261 = vsel %vm1312, %v5209, 0
        %5263 = vmatprep.subr.bf16.mxu0 0
        %5264 = vmatpush1.bf16.msra.mxu0 0
        %5265 = vmatprep.subr.bf16.mxu0 0
        %5266 = vmatpush1.bf16.msra.mxu0 0
        %5267 = vmatprep.subr.bf16.mxu0 0
        %5268 = vmatpush1.bf16.msra.mxu0 0
        %5269 = vmatprep.subr.bf16.mxu0 0
        %5270 = vmatpush1.bf16.msra.mxu0 0
        %5271 = vmatprep.subr.bf16.mxu0 0
        %5272 = vmatpush1.bf16.msra.mxu0 0
        %5273 = vmatprep.subr.bf16.mxu0 0
        %5274 = vmatpush1.bf16.msra.mxu0 0
        %5275 = vmatprep.subr.bf16.mxu0 0
        %5276 = vmatpush1.bf16.msra.mxu0 %v5224
        %5277 = vmatprep.subr.bf16.mxu0 0
        %5278 = vmatpush1.bf16.msra.mxu0 %v5223
        %5279 = vmatprep.subr.bf16.mxu0 0
        %5280 = vmatpush2.bf16.msra.mxu0 0
        %5281 = vmatprep.subr.bf16.mxu0 0
        %5282 = vmatpush2.bf16.msra.mxu0 0
        %5283 = vmatprep.subr.bf16.mxu0 0
        %5284 = vmatpush2.bf16.msra.mxu0 0
        %5285 = vmatprep.subr.bf16.mxu0 0
        %5286 = vmatpush2.bf16.msra.mxu0 0
        %5287 = vmatprep.subr.bf16.mxu0 0
        %5288 = vmatpush2.bf16.msra.mxu0 0
        %5289 = vmatprep.subr.bf16.mxu0 0
        %5290 = vmatpush2.bf16.msra.mxu0 0
        %5291 = vmatprep.subr.bf16.mxu0 0
        %5292 = vmatpush2.bf16.msra.mxu0 0
        %5293 = vmatprep.subr.bf16.mxu0 0
        %5294 = vmatpush2.bf16.msra.mxu0 0
        %5295 = vmatprep.mubr.bf16.mxu0 0
        %5296 = vmatmul.mubr.bf16.gmra.mxu0 %v5228
        %v5297 = vpop.f32.mrf.mxu0
        %v5298 = vadd.f32 0.0, %v5297
        %v5299 = vpop.f32.mrf.mxu0
        %v5300 = vpop.f32.mrf.mxu0
        %v5301 = vadd.f32 0.0, %v5300
        %v5302 = vpop.f32.mrf.mxu0
        %5303 = vmatprep.mubr.bf16.mxu0 0
        %5304 = vmatmul.mubr.bf16.gmra.mxu0 %v5231
        %v5305 = vpop.f32.mrf.mxu0
        %v5306 = vadd.f32 0.0, %v5305
        %v5307 = vpop.f32.mrf.mxu0
        %v5308 = vpop.f32.mrf.mxu0
        %v5309 = vadd.f32 0.0, %v5308
        %v5310 = vpop.f32.mrf.mxu0
        %5311 = vmatprep.mubr.bf16.mxu0 0
        %5312 = vmatmul.mubr.bf16.gmra.mxu0 %v5234
        %v5313 = vpop.f32.mrf.mxu0
        %v5314 = vadd.f32 0.0, %v5313
        %v5315 = vpop.f32.mrf.mxu0
        %v5316 = vpop.f32.mrf.mxu0
        %v5317 = vadd.f32 0.0, %v5316
        %v5318 = vpop.f32.mrf.mxu0
        %5319 = vmatprep.mubr.bf16.mxu0 0
        %5320 = vmatmul.mubr.bf16.gmra.mxu0 %v5237
        %v5321 = vpop.f32.mrf.mxu0
        %v5322 = vadd.f32 0.0, %v5321
        %v5323 = vpop.f32.mrf.mxu0
        %v5324 = vpop.f32.mrf.mxu0
        %v5325 = vadd.f32 0.0, %v5324
        %v5326 = vpop.f32.mrf.mxu0
        %5327 = vmatprep.mubr.bf16.mxu0 0
        %5328 = vmatmul.mubr.bf16.gmra.mxu0 %v5240
        %v5329 = vpop.f32.mrf.mxu0
        %v5330 = vadd.f32 0.0, %v5329
        %v5331 = vpop.f32.mrf.mxu0
        %v5332 = vpop.f32.mrf.mxu0
        %v5333 = vadd.f32 0.0, %v5332
        %v5334 = vpop.f32.mrf.mxu0
        %5335 = vmatprep.mubr.bf16.mxu0 0
        %5336 = vmatmul.mubr.bf16.gmra.mxu0 %v5243
        %v5337 = vpop.f32.mrf.mxu0
        %v5338 = vadd.f32 0.0, %v5337
        %v5339 = vpop.f32.mrf.mxu0
        %v5340 = vpop.f32.mrf.mxu0
        %v5341 = vadd.f32 0.0, %v5340
        %v5342 = vpop.f32.mrf.mxu0
        %5343 = vmatprep.mubr.bf16.mxu0 0
        %5344 = vmatmul.mubr.bf16.gmra.mxu0 %v5246
        %v5345 = vpop.f32.mrf.mxu0
        %v5346 = vadd.f32 0.0, %v5345
        %v5347 = vpop.f32.mrf.mxu0
        %v5348 = vpop.f32.mrf.mxu0
        %v5349 = vadd.f32 0.0, %v5348
        %v5350 = vpop.f32.mrf.mxu0
        %5351 = vmatprep.mubr.bf16.mxu0 0
        %5352 = vmatmul.mubr.bf16.gmra.mxu0 %v5249
        %v5353 = vpop.f32.mrf.mxu0
        %v5354 = vadd.f32 0.0, %v5353
        %v5355 = vpop.f32.mrf.mxu0
        %v5356 = vpop.f32.mrf.mxu0
        %v5357 = vadd.f32 0.0, %v5356
        %v5358 = vpop.f32.mrf.mxu0
        %5359 = vmatprep.mubr.bf16.mxu0 0
        %5360 = vmatmul.mubr.bf16.gmra.mxu0 %v5252
        %v5361 = vpop.f32.mrf.mxu0
        %v5362 = vadd.f32 0.0, %v5361
        %v5363 = vpop.f32.mrf.mxu0
        %v5364 = vpop.f32.mrf.mxu0
        %v5365 = vadd.f32 0.0, %v5364
        %v5366 = vpop.f32.mrf.mxu0
        %5367 = vmatprep.mubr.bf16.mxu0 0
        %5368 = vmatmul.mubr.bf16.gmra.mxu0 %v5255
        %v5369 = vpop.f32.mrf.mxu0
        %v5370 = vadd.f32 0.0, %v5369
        %v5371 = vpop.f32.mrf.mxu0
        %v5372 = vpop.f32.mrf.mxu0
        %v5373 = vadd.f32 0.0, %v5372
        %v5374 = vpop.f32.mrf.mxu0
        %5375 = vmatprep.mubr.bf16.mxu0 0
        %5376 = vmatmul.mubr.bf16.gmra.mxu0 %v5258
        %v5377 = vpop.f32.mrf.mxu0
        %v5378 = vadd.f32 0.0, %v5377
        %v5379 = vpop.f32.mrf.mxu0
        %v5380 = vpop.f32.mrf.mxu0
        %v5381 = vadd.f32 0.0, %v5380
        %v5382 = vpop.f32.mrf.mxu0
        %5383 = vmatprep.mubr.bf16.mxu0 0
        %5384 = vmatmul.mubr.bf16.gmra.mxu0 %v5261
        %v5385 = vpop.f32.mrf.mxu0
        %v5386 = vadd.f32 0.0, %v5385
        %v5387 = vpop.f32.mrf.mxu0
        %v5388 = vpop.f32.mrf.mxu0
        %v5389 = vadd.f32 0.0, %v5388
        %v5390 = vpop.f32.mrf.mxu0
        %5391 = vdwg.mxu0
        %v5392 = vadd.f32 %v5174, %v5298
        %v5393 = vadd.f32 %v5175, %v5301
        %v5394 = vadd.f32 %v5176, %v5306
        %v5395 = vadd.f32 %v5177, %v5309
        %v5396 = vadd.f32 %v5178, %v5314
        %v5397 = vadd.f32 %v5179, %v5317
        %v5398 = vadd.f32 %v5180, %v5322
        %v5399 = vadd.f32 %v5181, %v5325
        %v5400 = vadd.f32 %v5182, %v5330
        %v5401 = vadd.f32 %v5183, %v5333
        %v5402 = vadd.f32 %v5184, %v5338
        %v5403 = vadd.f32 %v5185, %v5341
        %v5404 = vadd.f32 %v5186, %v5346
        %v5405 = vadd.f32 %v5187, %v5349
        %v5406 = vadd.f32 %v5188, %v5354
        %v5407 = vadd.f32 %v5189, %v5357
        %v5408 = vadd.f32 %v5190, %v5362
        %v5409 = vadd.f32 %v5191, %v5365
        %v5410 = vadd.f32 %v5192, %v5370
        %v5411 = vadd.f32 %v5193, %v5373
        %v5412 = vadd.f32 %v5194, %v5378
        %v5413 = vadd.f32 %v5195, %v5381
        %v5414 = vadd.f32 %v5196, %v5386
        %v5415 = vadd.f32 %v5197, %v5389
        %5416 = vst [vmem:[%s450] sm:$0xff] %v5392
        %5417 = vst [vmem:[%s450 + $0x8] sm:$0xff] %v5393
        %5418 = vst [vmem:[%s450 + $0x10] sm:$0xff] %v5394
        %5419 = vst [vmem:[%s450 + $0x18] sm:$0xff] %v5395
        %5420 = vst [vmem:[%s450 + $0x20] sm:$0xff] %v5396
        %5421 = vst [vmem:[%s450 + $0x28] sm:$0xff] %v5397
        %5422 = vst [vmem:[%s450 + $0x30] sm:$0xff] %v5398
        %5423 = vst [vmem:[%s450 + $0x38] sm:$0xff] %v5399
        %5424 = vst [vmem:[%s450 + $0x40] sm:$0xff] %v5400
        %5425 = vst [vmem:[%s450 + $0x48] sm:$0xff] %v5401
        %5426 = vst [vmem:[%s450 + $0x50] sm:$0xff] %v5402
        %5427 = vst [vmem:[%s450 + $0x58] sm:$0xff] %v5403
        %5428 = vst [vmem:[%s450 + $0x60] sm:$0xff] %v5404
        %5429 = vst [vmem:[%s450 + $0x68] sm:$0xff] %v5405
        %5430 = vst [vmem:[%s450 + $0x70] sm:$0xff] %v5406
        %5431 = vst [vmem:[%s450 + $0x78] sm:$0xff] %v5407
        %5432 = vst [vmem:[%s450 + $0x80] sm:$0xff] %v5408
        %5433 = vst [vmem:[%s450 + $0x88] sm:$0xff] %v5409
        %5434 = vst [vmem:[%s450 + $0x90] sm:$0xff] %v5410
        %5435 = vst [vmem:[%s450 + $0x98] sm:$0xff] %v5411
        %5436 = vst [vmem:[%s450 + $0xa0] sm:$0xff] %v5412
        %5437 = vst [vmem:[%s450 + $0xa8] sm:$0xff] %v5413
        %5438 = vst [vmem:[%s450 + $0xb0] sm:$0xff] %v5414
        %5439 = vst [vmem:[%s450 + $0xb8] sm:$0xff] %v5415
        %s5440 = sand.u32 %s238, 1
        %s5441 = scalar_lea.sflag [#allocation4], %s5440
        %s5442 = sand.u32 %s238, 1
        %s5443 = smul.addr %s5442, 192
        %s5444 = scalar_lea.vmem [#allocation13], %s5443
        // Predicated region
        $region81: #{tpu_custom_call.1} parent=55 // pred_check
          %p5445 = pneg %p248
        $region82: #{tpu_custom_call.1} parent=55 // pred_check_branch
          %5447 = sbr.rel (%p5445) target = $region84
        $region83: #{tpu_custom_call.1} parent=55 // pred_region
          %s5448 = smul.u32 3, %s31
          %s5450 = ssub.s32 3072, 3072
          %5451 = vsyncadd %s5441, %s5450
          %s5452 = smul.addr %s5448, 8
          %s5453 = smul.addr %s5452, 128
          %s5454 = scalar_lea.hbm %s9, %s5453
          %s5455 = sshll.u32 %s5444, 4
          %s5456 = int_to_ptr.vmem [resolvable:$true] %s5455
          %5461 = dma.vmem_to_hbm [thread:$0]  %s5456, 3072, %s5454, %s5441, 128, 128, 8
        $region84: #{tpu_custom_call.1} parent=55 // pred_fallthru
          _
      $region56: #{tpu_custom_call.1} parent=5 // pred_fallthru
        _
      %p5462 = scmp.le.s32.totalorder 2, %s26
      // Predicated region
      $region85: #{tpu_custom_call.1} parent=5 // pred_check
        %p5463 = pneg %p5462
      $region86: #{tpu_custom_call.1} parent=5 // pred_check_branch
        %5465 = sbr.rel (%p5463) target = $region88
      $region87: #{tpu_custom_call.1} parent=5 // pred_region
        %s5466 = ssub.s32 %s26, 2
        // Predicated region
        $region89: #{tpu_custom_call.1} parent=87 // pred_check
          %p5467 = pneg %p254
        $region90: #{tpu_custom_call.1} parent=87 // pred_check_branch
          %5469 = sbr.rel (%p5467) target = $region92
        $region91: #{tpu_custom_call.1} parent=87 // pred_region
          %s5470 = sand.u32 %s239, 1
          %s5471 = scalar_lea.sflag [#allocation4], %s5470
          %s5472 = sand.u32 %s239, 1
          %s5473 = smul.addr %s5472, 192
          %s5474 = scalar_lea.vmem [#allocation13], %s5473
          %5475 = dma.done %s5471, 3072
        $region92: #{tpu_custom_call.1} parent=87 // pred_fallthru
          _
      $region88: #{tpu_custom_call.1} parent=5 // pred_fallthru
        _
    $region6: #{tpu_custom_call.1} parent=1 // loop_footer
      %s30 = sadd.s32 1, %s26
    $region7: #{tpu_custom_call.1} parent=1 // loop_footer_branch
      %25 = sbr.rel target = $region3
    $region8: #{tpu_custom_call.1} parent=1 // loop_exit
      _
    %5476 = vsyncpa [#allocation3], 1
    %s5477 = scalar_lea.sflag [#allocation3], 1
    %5478 = vsyncpa %s5477, 1
    %5479 = vsyncpa [#allocation6], 1
    %s5480 = scalar_lea.sflag [#allocation6], 1
    %5481 = vsyncpa %s5480, 1
    %5482 = vsyncpa [#allocation9], 1
    %5483 = vsyncpa [#allocation12], 1
    %5484 = vsyncpa [#allocation4], 1
    %s5485 = scalar_lea.sflag [#allocation4], 1
    %5486 = vsyncpa %s5485, 1

</llo_original>
